<compile_context>
chip_gen: v7x
topology: tpu7x:2x2x1
jax: 0.10.0
libtpu: 0.0.40
codegen_flags: <defaults>
</compile_context>

<pallas_src>
import functools
import math

import jax
import jax.numpy as jnp
from jax.experimental import pallas as pl
from jax.experimental.pallas import tpu as pltpu

# ----------------------- config (small synthetic RoBERTa) ------------------
VOCAB = 100
HIDDEN = 32
NUM_HEADS = 4
HEAD_DIM = HIDDEN // NUM_HEADS
INTERMEDIATE = 4 * HIDDEN
NUM_LAYERS = 2
MAX_POS = 40
PAD_IDX = 1          # RoBERTa padding_idx
LN_EPS = 1e-5
BATCH = 2
SEQ = 8
# Large-but-safe additive mask (avoids -inf/NaN corner cases; identical
# post-softmax behaviour for any realistic input).
MASK_NEG = -1e30

# Toggles (deliberate deviations from the PyTorch reference, per review):
APPROX_SOFTMAX_RECIP = True   # EUP vrcp, ~1e-3 rel err vs exact division
USE_TANH_GELU = False         # keep exact-erf GELU for HF-RoBERTa parity


# ----------------------------- in-kernel helpers ----------------------------
def _ln(x, g, b, eps=LN_EPS):
  # Fused-stat LayerNorm: var = E[x^2] - E[x]^2 (one cross-lane pass fewer).
  m = jnp.mean(x, axis=-1, keepdims=True)
  m2 = jnp.mean(x * x, axis=-1, keepdims=True)
  var = m2 - m * m
  return (x - m) * jax.lax.rsqrt(var + eps) * g + b


def _gelu(x):
  if USE_TANH_GELU:
    return 0.5 * x * (1.0 + jnp.tanh(0.7978845608028654
                                     * (x + 0.044715 * x * x * x)))
  # exact (erf) GELU, as HF RoBERTa's "gelu"
  return 0.5 * x * (1.0 + jax.lax.erf(x * 0.7071067811865476))


def _softmax_rows(s):
  m = jnp.max(s, axis=-1, keepdims=True)
  p = jnp.exp(s - m)
  denom = jnp.sum(p, axis=-1, keepdims=True)
  if APPROX_SOFTMAX_RECIP:
    return p * pl.reciprocal(denom, approx=True)
  return p / denom


# ----------------------------- fused forward kernel -------------------------
def _fused_forward_kernel(
    x_ref,       # (M, H)        embeddings slab, M = B*S
    bias_ref,    # (M, M)        additive attention bias (cross-batch + pad)
    wqkv_ref,    # (L*NH*3, H, D) per-head q/k/v projection weights
    bqkv_ref,    # (L*NH*3, 1, D) per-head q/k/v projection biases
    woh_ref,     # (L*NH, D, H)   per-head rows of the attention output proj
    wi_ref,      # (L, H, I)      FFN in
    wo2_ref,     # (L, I, H)      FFN out
    vec_ref,     # (L, 8, 128)    packed per-layer vectors
    gvec_ref,    # (8, 128)       packed global vectors
    out_ref,     # (M, 1)         regression logits
    *, num_layers, num_heads, head_dim, hidden, inter):
  H = hidden
  NH = num_heads
  scale = 1.0 / math.sqrt(head_dim)

  gvec = gvec_ref[...]                    # (8, 128)
  emb_g = gvec[0:1, 0:H]
  emb_b = gvec[1:2, 0:H]
  reg_w = gvec[2:3, 0:H]                  # (1, H)
  reg_b = gvec[3:4, 0:1]                  # (1, 1)

  x = x_ref[...]                          # (M, H) lane-dense activations
  bias = bias_ref[...]                    # (M, M)
  x = _ln(x, emb_g, emb_b)                # embeddings LayerNorm

  for li in range(num_layers):
    vec = vec_ref[li]                     # (8, 128); offset-0 lane slices only
    bo = vec[0:1, 0:H]
    ln1g = vec[1:2, 0:H]
    ln1b = vec[2:3, 0:H]
    bi = vec[3:4, 0:inter]
    bo2 = vec[4:5, 0:H]
    ln2g = vec[5:6, 0:H]
    ln2b = vec[6:7, 0:H]

    # ---- multi-head self-attention, per-head weight blocks ----------------
    # No activation lane-slicing, no head concat: each head's context is
    # accumulated directly through its (D, H) slice of the output projection.
    attn = jnp.zeros(x.shape, jnp.float32)
    for h in range(NH):
      base = (li * NH + h) * 3
      q = jnp.dot(x, wqkv_ref[base + 0],
                  preferred_element_type=jnp.float32) + bqkv_ref[base + 0]
      k = jnp.dot(x, wqkv_ref[base + 1],
                  preferred_element_type=jnp.float32) + bqkv_ref[base + 1]
      v = jnp.dot(x, wqkv_ref[base + 2],
                  preferred_element_type=jnp.float32) + bqkv_ref[base + 2]
      s = jax.lax.dot_general(q, k, (((1,), (1,)), ((), ())),
                              preferred_element_type=jnp.float32)
      p = _softmax_rows(s * scale + bias)                       # (M, M)
      ctx = jnp.dot(p, v, preferred_element_type=jnp.float32)   # (M, D)
      attn = attn + jnp.dot(ctx, woh_ref[li * NH + h],
                            preferred_element_type=jnp.float32)  # (M, H)

    x = _ln(attn + bo + x, ln1g, ln1b)    # post-LN residual

    # ---- FFN + post-LN residual -------------------------------------------
    inter_act = _gelu(
        jnp.dot(x, wi_ref[li], preferred_element_type=jnp.float32) + bi)
    ffn = jnp.dot(inter_act, wo2_ref[li],
                  preferred_element_type=jnp.float32) + bo2
    x = _ln(ffn + x, ln2g, ln2b)

  # ---- f32 regression head: VPU multiply + lane reduction (no M=1 matmul) --
  logits = jnp.sum(x * reg_w, axis=-1, keepdims=True) + reg_b   # (M, 1)
  out_ref[...] = logits.astype(out_ref.dtype)


# ----------------------------- parameter init ------------------------------
def init_params(key):
  def nrm(k, shape):
    return 0.02 * jax.random.normal(k, shape, dtype=jnp.float32)

  keys = jax.random.split(key, 8 + NUM_LAYERS)
  p = {
      "word_emb": nrm(keys[0], (VOCAB, HIDDEN)),
      "pos_emb": nrm(keys[1], (MAX_POS, HIDDEN)),
      "type_emb": nrm(keys[2], (1, HIDDEN)),
      "emb_ln_g": jnp.ones((HIDDEN,), jnp.float32),
      "emb_ln_b": jnp.zeros((HIDDEN,), jnp.float32),
      "reg_w": nrm(keys[3], (HIDDEN, 1)),
      "reg_b": jnp.zeros((1,), jnp.float32),
      "layers": [],
  }
  for li in range(NUM_LAYERS):
    lk = jax.random.split(keys[8 + li], 6)
    p["layers"].append({
        "wq": nrm(lk[0], (HIDDEN, HIDDEN)), "bq": jnp.zeros((HIDDEN,), jnp.float32),
        "wk": nrm(lk[1], (HIDDEN, HIDDEN)), "bk": jnp.zeros((HIDDEN,), jnp.float32),
        "wv": nrm(lk[2], (HIDDEN, HIDDEN)), "bv": jnp.zeros((HIDDEN,), jnp.float32),
        "wo": nrm(lk[3], (HIDDEN, HIDDEN)), "bo": jnp.zeros((HIDDEN,), jnp.float32),
        "ln1_g": jnp.ones((HIDDEN,), jnp.float32), "ln1_b": jnp.zeros((HIDDEN,), jnp.float32),
        "wi": nrm(lk[4], (HIDDEN, INTERMEDIATE)), "bi": jnp.zeros((INTERMEDIATE,), jnp.float32),
        "wo2": nrm(lk[5], (INTERMEDIATE, HIDDEN)), "bo2": jnp.zeros((HIDDEN,), jnp.float32),
        "ln2_g": jnp.ones((HIDDEN,), jnp.float32), "ln2_b": jnp.zeros((HIDDEN,), jnp.float32),
    })
  return p


# ----------------------------- forward pass --------------------------------
def roberta_regression_forward(params, input_ids, attention_mask):
  B, S = input_ids.shape
  M = B * S
  L, H, I, NH, D = NUM_LAYERS, HIDDEN, INTERMEDIATE, NUM_HEADS, HEAD_DIM

  # RoBERTa position ids: cumsum over non-pad tokens, offset by padding_idx.
  not_pad = (input_ids != PAD_IDX).astype(jnp.int32)
  position_ids = jnp.cumsum(not_pad, axis=1) * not_pad + PAD_IDX

  # Embedding gathers stay in plain JAX (no clean Pallas gather at this scale).
  emb = (params["word_emb"][input_ids]
         + params["pos_emb"][position_ids]
         + params["type_emb"][0][None, None, :]).astype(jnp.float32)   # (B,S,H)
  emb = emb.reshape(M, H)

  # Combined additive attention bias over the flattened (B*S) token axis:
  # cross-batch attention and padded keys both get MASK_NEG.
  batch_ids = jnp.repeat(jnp.arange(B), S)                      # (M,)
  same_batch = batch_ids[:, None] == batch_ids[None, :]          # (M, M)
  key_valid = (attention_mask.reshape(M) > 0)[None, :]           # (1, M)
  attn_bias = jnp.where(same_batch & key_valid, 0.0, MASK_NEG
                        ).astype(jnp.float32)                    # (M, M)

  # ---- host-side weight packing (per-head blocks; no in-kernel slicing) ----
  def split_heads_in(w):    # (H, H) -> (NH, H, D): columns of head h
    return w.reshape(H, NH, D).transpose(1, 0, 2)

  wqkv_l, bqkv_l, woh_l = [], [], []
  for lp in params["layers"]:
    wqkv_l.append(jnp.stack([split_heads_in(lp["wq"]),
                             split_heads_in(lp["wk"]),
                             split_heads_in(lp["wv"])], axis=1))  # (NH,3,H,D)
    bqkv_l.append(jnp.stack([lp["bq"].reshape(NH, 1, D),
                             lp["bk"].reshape(NH, 1, D),
                             lp["bv"].reshape(NH, 1, D)], axis=1))  # (NH,3,1,D)
    woh_l.append(lp["wo"].reshape(NH, D, H))                       # (NH,D,H)
  wqkv = jnp.stack(wqkv_l).reshape(L * NH * 3, H, D)
  bqkv = jnp.stack(bqkv_l).reshape(L * NH * 3, 1, D)
  woh = jnp.stack(woh_l).reshape(L * NH, D, H)
  wi = jnp.stack([lp["wi"] for lp in params["layers"]])            # (L,H,I)
  wo2 = jnp.stack([lp["wo2"] for lp in params["layers"]])          # (L,I,H)

  # ---- pack all tiny per-layer vectors into one lane-dense slab ------------
  def pad_row(v, width=128):
    v = v.reshape(-1)
    return jnp.pad(v, (0, width - v.shape[0])).reshape(1, width)

  vec_rows = []
  for lp in params["layers"]:
    vec_rows.append(jnp.concatenate([
        pad_row(lp["bo"]), pad_row(lp["ln1_g"]), pad_row(lp["ln1_b"]),
        pad_row(lp["bi"]), pad_row(lp["bo2"]), pad_row(lp["ln2_g"]),
        pad_row(lp["ln2_b"]), jnp.zeros((1, 128), jnp.float32)], axis=0))
  vecs = jnp.stack(vec_rows)                                       # (L,8,128)

  gvec = jnp.concatenate([
      pad_row(params["emb_ln_g"]), pad_row(params["emb_ln_b"]),
      pad_row(params["reg_w"]), pad_row(params["reg_b"]),
      jnp.zeros((4, 128), jnp.float32)], axis=0)                   # (8,128)

  kernel = functools.partial(
      _fused_forward_kernel, num_layers=L, num_heads=NH, head_dim=D,
      hidden=H, inter=I)

  # Single grid step over the whole (B*S, H) slab; everything VMEM-resident.
  # (With one step, single- vs double-buffering of the constant weight blocks
  # is moot; at real sizes use pipeline_mode=pl.Buffered(1) for them.)
  logits_col = pl.pallas_call(
      kernel,
      out_shape=jax.ShapeDtypeStruct((M, 1), jnp.float32),
      grid=(1,),
      in_specs=[
          pl.BlockSpec((M, H), lambda i: (0, 0)),                    # emb slab
          pl.BlockSpec((M, M), lambda i: (0, 0)),                    # attn bias
          pl.BlockSpec((L * NH * 3, H, D), lambda i: (0, 0, 0)),     # qkv W
          pl.BlockSpec((L * NH * 3, 1, D), lambda i: (0, 0, 0)),     # qkv b
          pl.BlockSpec((L * NH, D, H), lambda i: (0, 0, 0)),         # out-proj W
          pl.BlockSpec((L, H, I), lambda i: (0, 0, 0)),              # FFN in W
          pl.BlockSpec((L, I, H), lambda i: (0, 0, 0)),              # FFN out W
          pl.BlockSpec((L, 8, 128), lambda i: (0, 0, 0)),            # per-layer vecs
          pl.BlockSpec((8, 128), lambda i: (0, 0)),                  # global vecs
      ],
      out_specs=pl.BlockSpec((M, 1), lambda i: (0, 0)),
      compiler_params=pltpu.CompilerParams(
          dimension_semantics=("arbitrary",)),
  )(emb, attn_bias, wqkv, bqkv, woh, wi, wo2, vecs, gvec)

  # (B*S, 1) -> (B, S, 1) to match the PyTorch module output.
  return logits_col.reshape(B, S, 1)


# --------------------------------- main -------------------------------------
if __name__ == "__main__":
  key = jax.random.PRNGKey(0)
  pkey, ikey = jax.random.split(key)
  params = init_params(pkey)

  input_ids = jax.random.randint(ikey, (BATCH, SEQ), 3, VOCAB, dtype=jnp.int32)
  # Pad the tail of the second sequence to exercise the attention mask.
  input_ids = input_ids.at[1, -2:].set(PAD_IDX)
  attention_mask = (input_ids != PAD_IDX).astype(jnp.int32)

  fwd = jax.jit(roberta_regression_forward)
  logits = fwd(params, input_ids, attention_mask)
  jax.block_until_ready(logits)

  assert logits.shape == (BATCH, SEQ, 1) and logits.dtype == jnp.float32
  assert bool(jnp.all(jnp.isfinite(logits)))
  print("KERNEL_OK")
</pallas_src>

<mosaic_0001>
module attributes {stable_mosaic.version = 11 : i64} {
  func.func @_fused_forward_kernel(%arg0: i32, %arg1: memref<16x32xf32, #tpu.memory_space<vmem>>, %arg2: memref<16x16xf32, #tpu.memory_space<vmem>>, %arg3: memref<24x32x8xf32, #tpu.memory_space<vmem>>, %arg4: memref<24x1x8xf32, #tpu.memory_space<vmem>>, %arg5: memref<8x8x32xf32, #tpu.memory_space<vmem>>, %arg6: memref<2x32x128xf32, #tpu.memory_space<vmem>>, %arg7: memref<2x128x32xf32, #tpu.memory_space<vmem>>, %arg8: memref<2x8x128xf32, #tpu.memory_space<vmem>>, %arg9: memref<8x128xf32, #tpu.memory_space<vmem>>, %arg10: memref<16x1xf32, #tpu.memory_space<vmem>>) attributes {dimension_semantics = [#tpu.dimension_semantics<arbitrary>], iteration_bounds = array<i64: 1>, scalar_prefetch = 0 : i64, scratch_operands = 0 : i64, tpu.core_type = #tpu.core_type<tc>, window_params = [{pipeline_mode = #tpu.pipeline_mode<synchronous>, transform_indices = @transform_0, window_bounds = array<i64: 16, 32>}, {pipeline_mode = #tpu.pipeline_mode<synchronous>, transform_indices = @transform_1, window_bounds = array<i64: 16, 16>}, {pipeline_mode = #tpu.pipeline_mode<synchronous>, transform_indices = @transform_2, window_bounds = array<i64: 24, 32, 8>}, {pipeline_mode = #tpu.pipeline_mode<synchronous>, transform_indices = @transform_3, window_bounds = array<i64: 24, 1, 8>}, {pipeline_mode = #tpu.pipeline_mode<synchronous>, transform_indices = @transform_4, window_bounds = array<i64: 8, 8, 32>}, {pipeline_mode = #tpu.pipeline_mode<synchronous>, transform_indices = @transform_5, window_bounds = array<i64: 2, 32, 128>}, {pipeline_mode = #tpu.pipeline_mode<synchronous>, transform_indices = @transform_6, window_bounds = array<i64: 2, 128, 32>}, {pipeline_mode = #tpu.pipeline_mode<synchronous>, transform_indices = @transform_7, window_bounds = array<i64: 2, 8, 128>}, {pipeline_mode = #tpu.pipeline_mode<synchronous>, transform_indices = @transform_8, window_bounds = array<i64: 8, 128>}, {pipeline_mode = #tpu.pipeline_mode<synchronous>, transform_indices = @transform_9, window_bounds = array<i64: 16, 1>}]} {
    %c0 = arith.constant 0 : index
    %c0_0 = arith.constant 0 : index
    %0 = vector.load %arg9[%c0, %c0_0] : memref<8x128xf32, #tpu.memory_space<vmem>>, vector<8x128xf32>
    %1 = vector.extract_strided_slice %0 {offsets = [0, 0], sizes = [1, 32], strides = [1, 1]} : vector<8x128xf32> to vector<1x32xf32>
    %2 = vector.extract_strided_slice %0 {offsets = [1, 0], sizes = [1, 32], strides = [1, 1]} : vector<8x128xf32> to vector<1x32xf32>
    %3 = vector.extract_strided_slice %0 {offsets = [2, 0], sizes = [1, 32], strides = [1, 1]} : vector<8x128xf32> to vector<1x32xf32>
    %4 = vector.extract_strided_slice %0 {offsets = [3, 0], sizes = [1, 1], strides = [1, 1]} : vector<8x128xf32> to vector<1x1xf32>
    %c0_1 = arith.constant 0 : index
    %c0_2 = arith.constant 0 : index
    %5 = vector.load %arg1[%c0_1, %c0_2] : memref<16x32xf32, #tpu.memory_space<vmem>>, vector<16x32xf32>
    %c0_3 = arith.constant 0 : index
    %c0_4 = arith.constant 0 : index
    %6 = vector.load %arg2[%c0_3, %c0_4] : memref<16x16xf32, #tpu.memory_space<vmem>>, vector<16x16xf32>
    %cst = arith.constant dense<0.000000e+00> : vector<16xf32>
    %7 = vector.multi_reduction <add>, %5, %cst [1] : vector<16x32xf32> to vector<16xf32>
    %8 = vector.shape_cast %7 : vector<16xf32> to vector<16x1xf32>
    %cst_5 = arith.constant 3.200000e+01 : f32
    %9 = vector.broadcast %cst_5 : f32 to vector<16x1xf32>
    %10 = arith.divf %8, %9 : vector<16x1xf32>
    %11 = arith.mulf %5, %5 : vector<16x32xf32>
    %cst_6 = arith.constant dense<0.000000e+00> : vector<16xf32>
    %12 = vector.multi_reduction <add>, %11, %cst_6 [1] : vector<16x32xf32> to vector<16xf32>
    %13 = vector.shape_cast %12 : vector<16xf32> to vector<16x1xf32>
    %cst_7 = arith.constant 3.200000e+01 : f32
    %14 = vector.broadcast %cst_7 : f32 to vector<16x1xf32>
    %15 = arith.divf %13, %14 : vector<16x1xf32>
    %16 = arith.mulf %10, %10 : vector<16x1xf32>
    %17 = arith.subf %15, %16 : vector<16x1xf32>
    %18 = vector.broadcast %10 : vector<16x1xf32> to vector<16x32xf32>
    %19 = arith.subf %5, %18 : vector<16x32xf32>
    %cst_8 = arith.constant 9.99999974E-6 : f32
    %20 = vector.broadcast %cst_8 : f32 to vector<16x1xf32>
    %21 = arith.addf %17, %20 : vector<16x1xf32>
    %22 = math.rsqrt %21 : vector<16x1xf32>
    %23 = vector.broadcast %22 : vector<16x1xf32> to vector<16x32xf32>
    %24 = arith.mulf %19, %23 : vector<16x32xf32>
    %25 = vector.broadcast %1 : vector<1x32xf32> to vector<16x32xf32>
    %26 = arith.mulf %24, %25 : vector<16x32xf32>
    %27 = vector.broadcast %2 : vector<1x32xf32> to vector<16x32xf32>
    %28 = arith.addf %26, %27 : vector<16x32xf32>
    %c0_9 = arith.constant 0 : index
    %c0_10 = arith.constant 0 : index
    %c0_11 = arith.constant 0 : index
    %29 = vector.load %arg8[%c0_9, %c0_10, %c0_11] : memref<2x8x128xf32, #tpu.memory_space<vmem>>, vector<1x8x128xf32>
    %30 = vector.shape_cast %29 : vector<1x8x128xf32> to vector<8x128xf32>
    %31 = vector.extract_strided_slice %30 {offsets = [0, 0], sizes = [1, 32], strides = [1, 1]} : vector<8x128xf32> to vector<1x32xf32>
    %32 = vector.extract_strided_slice %30 {offsets = [1, 0], sizes = [1, 32], strides = [1, 1]} : vector<8x128xf32> to vector<1x32xf32>
    %33 = vector.extract_strided_slice %30 {offsets = [2, 0], sizes = [1, 32], strides = [1, 1]} : vector<8x128xf32> to vector<1x32xf32>
    %34 = vector.extract_strided_slice %30 {offsets = [3, 0], sizes = [1, 128], strides = [1, 1]} : vector<8x128xf32> to vector<1x128xf32>
    %35 = vector.extract_strided_slice %30 {offsets = [4, 0], sizes = [1, 32], strides = [1, 1]} : vector<8x128xf32> to vector<1x32xf32>
    %36 = vector.extract_strided_slice %30 {offsets = [5, 0], sizes = [1, 32], strides = [1, 1]} : vector<8x128xf32> to vector<1x32xf32>
    %37 = vector.extract_strided_slice %30 {offsets = [6, 0], sizes = [1, 32], strides = [1, 1]} : vector<8x128xf32> to vector<1x32xf32>
    %cst_12 = arith.constant 0.000000e+00 : f32
    %38 = vector.broadcast %cst_12 : f32 to vector<16x32xf32>
    %c0_13 = arith.constant 0 : index
    %c0_14 = arith.constant 0 : index
    %c0_15 = arith.constant 0 : index
    %39 = vector.load %arg3[%c0_13, %c0_14, %c0_15] : memref<24x32x8xf32, #tpu.memory_space<vmem>>, vector<1x32x8xf32>
    %40 = vector.shape_cast %39 : vector<1x32x8xf32> to vector<32x8xf32>
    %cst_16 = arith.constant dense<0.000000e+00> : vector<16x8xf32>
    %41 = tpu.matmul %28, %40, %cst_16 {dimension_numbers = #tpu.dot_dimension_numbers<[1], [0], [0], [1], [0, 0, 1, 1], [], []>} : vector<16x32xf32>, vector<32x8xf32>, vector<16x8xf32> -> vector<16x8xf32>
    %c0_17 = arith.constant 0 : index
    %c0_18 = arith.constant 0 : index
    %c0_19 = arith.constant 0 : index
    %42 = vector.load %arg4[%c0_17, %c0_18, %c0_19] : memref<24x1x8xf32, #tpu.memory_space<vmem>>, vector<1x1x8xf32>
    %43 = vector.shape_cast %42 : vector<1x1x8xf32> to vector<1x8xf32>
    %44 = vector.broadcast %43 : vector<1x8xf32> to vector<16x8xf32>
    %45 = arith.addf %41, %44 : vector<16x8xf32>
    %c1 = arith.constant 1 : index
    %c0_20 = arith.constant 0 : index
    %c0_21 = arith.constant 0 : index
    %46 = vector.load %arg3[%c1, %c0_20, %c0_21] : memref<24x32x8xf32, #tpu.memory_space<vmem>>, vector<1x32x8xf32>
    %47 = vector.shape_cast %46 : vector<1x32x8xf32> to vector<32x8xf32>
    %cst_22 = arith.constant dense<0.000000e+00> : vector<16x8xf32>
    %48 = tpu.matmul %28, %47, %cst_22 {dimension_numbers = #tpu.dot_dimension_numbers<[1], [0], [0], [1], [0, 0, 1, 1], [], []>} : vector<16x32xf32>, vector<32x8xf32>, vector<16x8xf32> -> vector<16x8xf32>
    %c1_23 = arith.constant 1 : index
    %c0_24 = arith.constant 0 : index
    %c0_25 = arith.constant 0 : index
    %49 = vector.load %arg4[%c1_23, %c0_24, %c0_25] : memref<24x1x8xf32, #tpu.memory_space<vmem>>, vector<1x1x8xf32>
    %50 = vector.shape_cast %49 : vector<1x1x8xf32> to vector<1x8xf32>
    %51 = vector.broadcast %50 : vector<1x8xf32> to vector<16x8xf32>
    %52 = arith.addf %48, %51 : vector<16x8xf32>
    %c2 = arith.constant 2 : index
    %c0_26 = arith.constant 0 : index
    %c0_27 = arith.constant 0 : index
    %53 = vector.load %arg3[%c2, %c0_26, %c0_27] : memref<24x32x8xf32, #tpu.memory_space<vmem>>, vector<1x32x8xf32>
    %54 = vector.shape_cast %53 : vector<1x32x8xf32> to vector<32x8xf32>
    %cst_28 = arith.constant dense<0.000000e+00> : vector<16x8xf32>
    %55 = tpu.matmul %28, %54, %cst_28 {dimension_numbers = #tpu.dot_dimension_numbers<[1], [0], [0], [1], [0, 0, 1, 1], [], []>} : vector<16x32xf32>, vector<32x8xf32>, vector<16x8xf32> -> vector<16x8xf32>
    %c2_29 = arith.constant 2 : index
    %c0_30 = arith.constant 0 : index
    %c0_31 = arith.constant 0 : index
    %56 = vector.load %arg4[%c2_29, %c0_30, %c0_31] : memref<24x1x8xf32, #tpu.memory_space<vmem>>, vector<1x1x8xf32>
    %57 = vector.shape_cast %56 : vector<1x1x8xf32> to vector<1x8xf32>
    %58 = vector.broadcast %57 : vector<1x8xf32> to vector<16x8xf32>
    %59 = arith.addf %55, %58 : vector<16x8xf32>
    %cst_32 = arith.constant dense<0.000000e+00> : vector<16x16xf32>
    %60 = tpu.matmul %45, %52, %cst_32 {dimension_numbers = #tpu.dot_dimension_numbers<[1], [1], [0], [0], [0, 0, 1, 0], [], []>} : vector<16x8xf32>, vector<16x8xf32>, vector<16x16xf32> -> vector<16x16xf32>
    %cst_33 = arith.constant 0.353553385 : f32
    %61 = vector.broadcast %cst_33 : f32 to vector<16x16xf32>
    %62 = arith.mulf %60, %61 : vector<16x16xf32>
    %63 = arith.addf %62, %6 : vector<16x16xf32>
    %cst_34 = arith.constant dense<0xFF800000> : vector<16xf32>
    %64 = vector.multi_reduction <maximumf>, %63, %cst_34 [1] : vector<16x16xf32> to vector<16xf32>
    %65 = vector.shape_cast %64 : vector<16xf32> to vector<16x1xf32>
    %66 = vector.broadcast %65 : vector<16x1xf32> to vector<16x16xf32>
    %67 = arith.subf %63, %66 : vector<16x16xf32>
    %68 = math.exp %67 : vector<16x16xf32>
    %cst_35 = arith.constant dense<0.000000e+00> : vector<16xf32>
    %69 = vector.multi_reduction <add>, %68, %cst_35 [1] : vector<16x16xf32> to vector<16xf32>
    %70 = vector.shape_cast %69 : vector<16xf32> to vector<16x1xf32>
    %71 = tpu.reciprocal %70 {approx = true} : vector<16x1xf32> -> vector<16x1xf32>
    %72 = vector.broadcast %71 : vector<16x1xf32> to vector<16x16xf32>
    %73 = arith.mulf %68, %72 : vector<16x16xf32>
    %cst_36 = arith.constant dense<0.000000e+00> : vector<16x8xf32>
    %74 = tpu.matmul %73, %59, %cst_36 {dimension_numbers = #tpu.dot_dimension_numbers<[1], [0], [0], [1], [0, 0, 1, 1], [], []>} : vector<16x16xf32>, vector<16x8xf32>, vector<16x8xf32> -> vector<16x8xf32>
    %c0_37 = arith.constant 0 : index
    %c0_38 = arith.constant 0 : index
    %c0_39 = arith.constant 0 : index
    %75 = vector.load %arg5[%c0_37, %c0_38, %c0_39] : memref<8x8x32xf32, #tpu.memory_space<vmem>>, vector<1x8x32xf32>
    %76 = vector.shape_cast %75 : vector<1x8x32xf32> to vector<8x32xf32>
    %cst_40 = arith.constant dense<0.000000e+00> : vector<16x32xf32>
    %77 = tpu.matmul %74, %76, %cst_40 {dimension_numbers = #tpu.dot_dimension_numbers<[1], [0], [0], [1], [0, 0, 1, 1], [], []>} : vector<16x8xf32>, vector<8x32xf32>, vector<16x32xf32> -> vector<16x32xf32>
    %78 = arith.addf %38, %77 : vector<16x32xf32>
    %c3 = arith.constant 3 : index
    %c0_41 = arith.constant 0 : index
    %c0_42 = arith.constant 0 : index
    %79 = vector.load %arg3[%c3, %c0_41, %c0_42] : memref<24x32x8xf32, #tpu.memory_space<vmem>>, vector<1x32x8xf32>
    %80 = vector.shape_cast %79 : vector<1x32x8xf32> to vector<32x8xf32>
    %cst_43 = arith.constant dense<0.000000e+00> : vector<16x8xf32>
    %81 = tpu.matmul %28, %80, %cst_43 {dimension_numbers = #tpu.dot_dimension_numbers<[1], [0], [0], [1], [0, 0, 1, 1], [], []>} : vector<16x32xf32>, vector<32x8xf32>, vector<16x8xf32> -> vector<16x8xf32>
    %c3_44 = arith.constant 3 : index
    %c0_45 = arith.constant 0 : index
    %c0_46 = arith.constant 0 : index
    %82 = vector.load %arg4[%c3_44, %c0_45, %c0_46] : memref<24x1x8xf32, #tpu.memory_space<vmem>>, vector<1x1x8xf32>
    %83 = vector.shape_cast %82 : vector<1x1x8xf32> to vector<1x8xf32>
    %84 = vector.broadcast %83 : vector<1x8xf32> to vector<16x8xf32>
    %85 = arith.addf %81, %84 : vector<16x8xf32>
    %c4 = arith.constant 4 : index
    %c0_47 = arith.constant 0 : index
    %c0_48 = arith.constant 0 : index
    %86 = vector.load %arg3[%c4, %c0_47, %c0_48] : memref<24x32x8xf32, #tpu.memory_space<vmem>>, vector<1x32x8xf32>
    %87 = vector.shape_cast %86 : vector<1x32x8xf32> to vector<32x8xf32>
    %cst_49 = arith.constant dense<0.000000e+00> : vector<16x8xf32>
    %88 = tpu.matmul %28, %87, %cst_49 {dimension_numbers = #tpu.dot_dimension_numbers<[1], [0], [0], [1], [0, 0, 1, 1], [], []>} : vector<16x32xf32>, vector<32x8xf32>, vector<16x8xf32> -> vector<16x8xf32>
    %c4_50 = arith.constant 4 : index
    %c0_51 = arith.constant 0 : index
    %c0_52 = arith.constant 0 : index
    %89 = vector.load %arg4[%c4_50, %c0_51, %c0_52] : memref<24x1x8xf32, #tpu.memory_space<vmem>>, vector<1x1x8xf32>
    %90 = vector.shape_cast %89 : vector<1x1x8xf32> to vector<1x8xf32>
    %91 = vector.broadcast %90 : vector<1x8xf32> to vector<16x8xf32>
    %92 = arith.addf %88, %91 : vector<16x8xf32>
    %c5 = arith.constant 5 : index
    %c0_53 = arith.constant 0 : index
    %c0_54 = arith.constant 0 : index
    %93 = vector.load %arg3[%c5, %c0_53, %c0_54] : memref<24x32x8xf32, #tpu.memory_space<vmem>>, vector<1x32x8xf32>
    %94 = vector.shape_cast %93 : vector<1x32x8xf32> to vector<32x8xf32>
    %cst_55 = arith.constant dense<0.000000e+00> : vector<16x8xf32>
    %95 = tpu.matmul %28, %94, %cst_55 {dimension_numbers = #tpu.dot_dimension_numbers<[1], [0], [0], [1], [0, 0, 1, 1], [], []>} : vector<16x32xf32>, vector<32x8xf32>, vector<16x8xf32> -> vector<16x8xf32>
    %c5_56 = arith.constant 5 : index
    %c0_57 = arith.constant 0 : index
    %c0_58 = arith.constant 0 : index
    %96 = vector.load %arg4[%c5_56, %c0_57, %c0_58] : memref<24x1x8xf32, #tpu.memory_space<vmem>>, vector<1x1x8xf32>
    %97 = vector.shape_cast %96 : vector<1x1x8xf32> to vector<1x8xf32>
    %98 = vector.broadcast %97 : vector<1x8xf32> to vector<16x8xf32>
    %99 = arith.addf %95, %98 : vector<16x8xf32>
    %cst_59 = arith.constant dense<0.000000e+00> : vector<16x16xf32>
    %100 = tpu.matmul %85, %92, %cst_59 {dimension_numbers = #tpu.dot_dimension_numbers<[1], [1], [0], [0], [0, 0, 1, 0], [], []>} : vector<16x8xf32>, vector<16x8xf32>, vector<16x16xf32> -> vector<16x16xf32>
    %cst_60 = arith.constant 0.353553385 : f32
    %101 = vector.broadcast %cst_60 : f32 to vector<16x16xf32>
    %102 = arith.mulf %100, %101 : vector<16x16xf32>
    %103 = arith.addf %102, %6 : vector<16x16xf32>
    %cst_61 = arith.constant dense<0xFF800000> : vector<16xf32>
    %104 = vector.multi_reduction <maximumf>, %103, %cst_61 [1] : vector<16x16xf32> to vector<16xf32>
    %105 = vector.shape_cast %104 : vector<16xf32> to vector<16x1xf32>
    %106 = vector.broadcast %105 : vector<16x1xf32> to vector<16x16xf32>
    %107 = arith.subf %103, %106 : vector<16x16xf32>
    %108 = math.exp %107 : vector<16x16xf32>
    %cst_62 = arith.constant dense<0.000000e+00> : vector<16xf32>
    %109 = vector.multi_reduction <add>, %108, %cst_62 [1] : vector<16x16xf32> to vector<16xf32>
    %110 = vector.shape_cast %109 : vector<16xf32> to vector<16x1xf32>
    %111 = tpu.reciprocal %110 {approx = true} : vector<16x1xf32> -> vector<16x1xf32>
    %112 = vector.broadcast %111 : vector<16x1xf32> to vector<16x16xf32>
    %113 = arith.mulf %108, %112 : vector<16x16xf32>
    %cst_63 = arith.constant dense<0.000000e+00> : vector<16x8xf32>
    %114 = tpu.matmul %113, %99, %cst_63 {dimension_numbers = #tpu.dot_dimension_numbers<[1], [0], [0], [1], [0, 0, 1, 1], [], []>} : vector<16x16xf32>, vector<16x8xf32>, vector<16x8xf32> -> vector<16x8xf32>
    %c1_64 = arith.constant 1 : index
    %c0_65 = arith.constant 0 : index
    %c0_66 = arith.constant 0 : index
    %115 = vector.load %arg5[%c1_64, %c0_65, %c0_66] : memref<8x8x32xf32, #tpu.memory_space<vmem>>, vector<1x8x32xf32>
    %116 = vector.shape_cast %115 : vector<1x8x32xf32> to vector<8x32xf32>
    %cst_67 = arith.constant dense<0.000000e+00> : vector<16x32xf32>
    %117 = tpu.matmul %114, %116, %cst_67 {dimension_numbers = #tpu.dot_dimension_numbers<[1], [0], [0], [1], [0, 0, 1, 1], [], []>} : vector<16x8xf32>, vector<8x32xf32>, vector<16x32xf32> -> vector<16x32xf32>
    %118 = arith.addf %78, %117 : vector<16x32xf32>
    %c6 = arith.constant 6 : index
    %c0_68 = arith.constant 0 : index
    %c0_69 = arith.constant 0 : index
    %119 = vector.load %arg3[%c6, %c0_68, %c0_69] : memref<24x32x8xf32, #tpu.memory_space<vmem>>, vector<1x32x8xf32>
    %120 = vector.shape_cast %119 : vector<1x32x8xf32> to vector<32x8xf32>
    %cst_70 = arith.constant dense<0.000000e+00> : vector<16x8xf32>
    %121 = tpu.matmul %28, %120, %cst_70 {dimension_numbers = #tpu.dot_dimension_numbers<[1], [0], [0], [1], [0, 0, 1, 1], [], []>} : vector<16x32xf32>, vector<32x8xf32>, vector<16x8xf32> -> vector<16x8xf32>
    %c6_71 = arith.constant 6 : index
    %c0_72 = arith.constant 0 : index
    %c0_73 = arith.constant 0 : index
    %122 = vector.load %arg4[%c6_71, %c0_72, %c0_73] : memref<24x1x8xf32, #tpu.memory_space<vmem>>, vector<1x1x8xf32>
    %123 = vector.shape_cast %122 : vector<1x1x8xf32> to vector<1x8xf32>
    %124 = vector.broadcast %123 : vector<1x8xf32> to vector<16x8xf32>
    %125 = arith.addf %121, %124 : vector<16x8xf32>
    %c7 = arith.constant 7 : index
    %c0_74 = arith.constant 0 : index
    %c0_75 = arith.constant 0 : index
    %126 = vector.load %arg3[%c7, %c0_74, %c0_75] : memref<24x32x8xf32, #tpu.memory_space<vmem>>, vector<1x32x8xf32>
    %127 = vector.shape_cast %126 : vector<1x32x8xf32> to vector<32x8xf32>
    %cst_76 = arith.constant dense<0.000000e+00> : vector<16x8xf32>
    %128 = tpu.matmul %28, %127, %cst_76 {dimension_numbers = #tpu.dot_dimension_numbers<[1], [0], [0], [1], [0, 0, 1, 1], [], []>} : vector<16x32xf32>, vector<32x8xf32>, vector<16x8xf32> -> vector<16x8xf32>
    %c7_77 = arith.constant 7 : index
    %c0_78 = arith.constant 0 : index
    %c0_79 = arith.constant 0 : index
    %129 = vector.load %arg4[%c7_77, %c0_78, %c0_79] : memref<24x1x8xf32, #tpu.memory_space<vmem>>, vector<1x1x8xf32>
    %130 = vector.shape_cast %129 : vector<1x1x8xf32> to vector<1x8xf32>
    %131 = vector.broadcast %130 : vector<1x8xf32> to vector<16x8xf32>
    %132 = arith.addf %128, %131 : vector<16x8xf32>
    %c8 = arith.constant 8 : index
    %c0_80 = arith.constant 0 : index
    %c0_81 = arith.constant 0 : index
    %133 = vector.load %arg3[%c8, %c0_80, %c0_81] : memref<24x32x8xf32, #tpu.memory_space<vmem>>, vector<1x32x8xf32>
    %134 = vector.shape_cast %133 : vector<1x32x8xf32> to vector<32x8xf32>
    %cst_82 = arith.constant dense<0.000000e+00> : vector<16x8xf32>
    %135 = tpu.matmul %28, %134, %cst_82 {dimension_numbers = #tpu.dot_dimension_numbers<[1], [0], [0], [1], [0, 0, 1, 1], [], []>} : vector<16x32xf32>, vector<32x8xf32>, vector<16x8xf32> -> vector<16x8xf32>
    %c8_83 = arith.constant 8 : index
    %c0_84 = arith.constant 0 : index
    %c0_85 = arith.constant 0 : index
    %136 = vector.load %arg4[%c8_83, %c0_84, %c0_85] : memref<24x1x8xf32, #tpu.memory_space<vmem>>, vector<1x1x8xf32>
    %137 = vector.shape_cast %136 : vector<1x1x8xf32> to vector<1x8xf32>
    %138 = vector.broadcast %137 : vector<1x8xf32> to vector<16x8xf32>
    %139 = arith.addf %135, %138 : vector<16x8xf32>
    %cst_86 = arith.constant dense<0.000000e+00> : vector<16x16xf32>
    %140 = tpu.matmul %125, %132, %cst_86 {dimension_numbers = #tpu.dot_dimension_numbers<[1], [1], [0], [0], [0, 0, 1, 0], [], []>} : vector<16x8xf32>, vector<16x8xf32>, vector<16x16xf32> -> vector<16x16xf32>
    %cst_87 = arith.constant 0.353553385 : f32
    %141 = vector.broadcast %cst_87 : f32 to vector<16x16xf32>
    %142 = arith.mulf %140, %141 : vector<16x16xf32>
    %143 = arith.addf %142, %6 : vector<16x16xf32>
    %cst_88 = arith.constant dense<0xFF800000> : vector<16xf32>
    %144 = vector.multi_reduction <maximumf>, %143, %cst_88 [1] : vector<16x16xf32> to vector<16xf32>
    %145 = vector.shape_cast %144 : vector<16xf32> to vector<16x1xf32>
    %146 = vector.broadcast %145 : vector<16x1xf32> to vector<16x16xf32>
    %147 = arith.subf %143, %146 : vector<16x16xf32>
    %148 = math.exp %147 : vector<16x16xf32>
    %cst_89 = arith.constant dense<0.000000e+00> : vector<16xf32>
    %149 = vector.multi_reduction <add>, %148, %cst_89 [1] : vector<16x16xf32> to vector<16xf32>
    %150 = vector.shape_cast %149 : vector<16xf32> to vector<16x1xf32>
    %151 = tpu.reciprocal %150 {approx = true} : vector<16x1xf32> -> vector<16x1xf32>
    %152 = vector.broadcast %151 : vector<16x1xf32> to vector<16x16xf32>
    %153 = arith.mulf %148, %152 : vector<16x16xf32>
    %cst_90 = arith.constant dense<0.000000e+00> : vector<16x8xf32>
    %154 = tpu.matmul %153, %139, %cst_90 {dimension_numbers = #tpu.dot_dimension_numbers<[1], [0], [0], [1], [0, 0, 1, 1], [], []>} : vector<16x16xf32>, vector<16x8xf32>, vector<16x8xf32> -> vector<16x8xf32>
    %c2_91 = arith.constant 2 : index
    %c0_92 = arith.constant 0 : index
    %c0_93 = arith.constant 0 : index
    %155 = vector.load %arg5[%c2_91, %c0_92, %c0_93] : memref<8x8x32xf32, #tpu.memory_space<vmem>>, vector<1x8x32xf32>
    %156 = vector.shape_cast %155 : vector<1x8x32xf32> to vector<8x32xf32>
    %cst_94 = arith.constant dense<0.000000e+00> : vector<16x32xf32>
    %157 = tpu.matmul %154, %156, %cst_94 {dimension_numbers = #tpu.dot_dimension_numbers<[1], [0], [0], [1], [0, 0, 1, 1], [], []>} : vector<16x8xf32>, vector<8x32xf32>, vector<16x32xf32> -> vector<16x32xf32>
    %158 = arith.addf %118, %157 : vector<16x32xf32>
    %c9 = arith.constant 9 : index
    %c0_95 = arith.constant 0 : index
    %c0_96 = arith.constant 0 : index
    %159 = vector.load %arg3[%c9, %c0_95, %c0_96] : memref<24x32x8xf32, #tpu.memory_space<vmem>>, vector<1x32x8xf32>
    %160 = vector.shape_cast %159 : vector<1x32x8xf32> to vector<32x8xf32>
    %cst_97 = arith.constant dense<0.000000e+00> : vector<16x8xf32>
    %161 = tpu.matmul %28, %160, %cst_97 {dimension_numbers = #tpu.dot_dimension_numbers<[1], [0], [0], [1], [0, 0, 1, 1], [], []>} : vector<16x32xf32>, vector<32x8xf32>, vector<16x8xf32> -> vector<16x8xf32>
    %c9_98 = arith.constant 9 : index
    %c0_99 = arith.constant 0 : index
    %c0_100 = arith.constant 0 : index
    %162 = vector.load %arg4[%c9_98, %c0_99, %c0_100] : memref<24x1x8xf32, #tpu.memory_space<vmem>>, vector<1x1x8xf32>
    %163 = vector.shape_cast %162 : vector<1x1x8xf32> to vector<1x8xf32>
    %164 = vector.broadcast %163 : vector<1x8xf32> to vector<16x8xf32>
    %165 = arith.addf %161, %164 : vector<16x8xf32>
    %c10 = arith.constant 10 : index
    %c0_101 = arith.constant 0 : index
    %c0_102 = arith.constant 0 : index
    %166 = vector.load %arg3[%c10, %c0_101, %c0_102] : memref<24x32x8xf32, #tpu.memory_space<vmem>>, vector<1x32x8xf32>
    %167 = vector.shape_cast %166 : vector<1x32x8xf32> to vector<32x8xf32>
    %cst_103 = arith.constant dense<0.000000e+00> : vector<16x8xf32>
    %168 = tpu.matmul %28, %167, %cst_103 {dimension_numbers = #tpu.dot_dimension_numbers<[1], [0], [0], [1], [0, 0, 1, 1], [], []>} : vector<16x32xf32>, vector<32x8xf32>, vector<16x8xf32> -> vector<16x8xf32>
    %c10_104 = arith.constant 10 : index
    %c0_105 = arith.constant 0 : index
    %c0_106 = arith.constant 0 : index
    %169 = vector.load %arg4[%c10_104, %c0_105, %c0_106] : memref<24x1x8xf32, #tpu.memory_space<vmem>>, vector<1x1x8xf32>
    %170 = vector.shape_cast %169 : vector<1x1x8xf32> to vector<1x8xf32>
    %171 = vector.broadcast %170 : vector<1x8xf32> to vector<16x8xf32>
    %172 = arith.addf %168, %171 : vector<16x8xf32>
    %c11 = arith.constant 11 : index
    %c0_107 = arith.constant 0 : index
    %c0_108 = arith.constant 0 : index
    %173 = vector.load %arg3[%c11, %c0_107, %c0_108] : memref<24x32x8xf32, #tpu.memory_space<vmem>>, vector<1x32x8xf32>
    %174 = vector.shape_cast %173 : vector<1x32x8xf32> to vector<32x8xf32>
    %cst_109 = arith.constant dense<0.000000e+00> : vector<16x8xf32>
    %175 = tpu.matmul %28, %174, %cst_109 {dimension_numbers = #tpu.dot_dimension_numbers<[1], [0], [0], [1], [0, 0, 1, 1], [], []>} : vector<16x32xf32>, vector<32x8xf32>, vector<16x8xf32> -> vector<16x8xf32>
    %c11_110 = arith.constant 11 : index
    %c0_111 = arith.constant 0 : index
    %c0_112 = arith.constant 0 : index
    %176 = vector.load %arg4[%c11_110, %c0_111, %c0_112] : memref<24x1x8xf32, #tpu.memory_space<vmem>>, vector<1x1x8xf32>
    %177 = vector.shape_cast %176 : vector<1x1x8xf32> to vector<1x8xf32>
    %178 = vector.broadcast %177 : vector<1x8xf32> to vector<16x8xf32>
    %179 = arith.addf %175, %178 : vector<16x8xf32>
    %cst_113 = arith.constant dense<0.000000e+00> : vector<16x16xf32>
    %180 = tpu.matmul %165, %172, %cst_113 {dimension_numbers = #tpu.dot_dimension_numbers<[1], [1], [0], [0], [0, 0, 1, 0], [], []>} : vector<16x8xf32>, vector<16x8xf32>, vector<16x16xf32> -> vector<16x16xf32>
    %cst_114 = arith.constant 0.353553385 : f32
    %181 = vector.broadcast %cst_114 : f32 to vector<16x16xf32>
    %182 = arith.mulf %180, %181 : vector<16x16xf32>
    %183 = arith.addf %182, %6 : vector<16x16xf32>
    %cst_115 = arith.constant dense<0xFF800000> : vector<16xf32>
    %184 = vector.multi_reduction <maximumf>, %183, %cst_115 [1] : vector<16x16xf32> to vector<16xf32>
    %185 = vector.shape_cast %184 : vector<16xf32> to vector<16x1xf32>
    %186 = vector.broadcast %185 : vector<16x1xf32> to vector<16x16xf32>
    %187 = arith.subf %183, %186 : vector<16x16xf32>
    %188 = math.exp %187 : vector<16x16xf32>
    %cst_116 = arith.constant dense<0.000000e+00> : vector<16xf32>
    %189 = vector.multi_reduction <add>, %188, %cst_116 [1] : vector<16x16xf32> to vector<16xf32>
    %190 = vector.shape_cast %189 : vector<16xf32> to vector<16x1xf32>
    %191 = tpu.reciprocal %190 {approx = true} : vector<16x1xf32> -> vector<16x1xf32>
    %192 = vector.broadcast %191 : vector<16x1xf32> to vector<16x16xf32>
    %193 = arith.mulf %188, %192 : vector<16x16xf32>
    %cst_117 = arith.constant dense<0.000000e+00> : vector<16x8xf32>
    %194 = tpu.matmul %193, %179, %cst_117 {dimension_numbers = #tpu.dot_dimension_numbers<[1], [0], [0], [1], [0, 0, 1, 1], [], []>} : vector<16x16xf32>, vector<16x8xf32>, vector<16x8xf32> -> vector<16x8xf32>
    %c3_118 = arith.constant 3 : index
    %c0_119 = arith.constant 0 : index
    %c0_120 = arith.constant 0 : index
    %195 = vector.load %arg5[%c3_118, %c0_119, %c0_120] : memref<8x8x32xf32, #tpu.memory_space<vmem>>, vector<1x8x32xf32>
    %196 = vector.shape_cast %195 : vector<1x8x32xf32> to vector<8x32xf32>
    %cst_121 = arith.constant dense<0.000000e+00> : vector<16x32xf32>
    %197 = tpu.matmul %194, %196, %cst_121 {dimension_numbers = #tpu.dot_dimension_numbers<[1], [0], [0], [1], [0, 0, 1, 1], [], []>} : vector<16x8xf32>, vector<8x32xf32>, vector<16x32xf32> -> vector<16x32xf32>
    %198 = arith.addf %158, %197 : vector<16x32xf32>
    %199 = vector.broadcast %31 : vector<1x32xf32> to vector<16x32xf32>
    %200 = arith.addf %198, %199 : vector<16x32xf32>
    %201 = arith.addf %200, %28 : vector<16x32xf32>
    %cst_122 = arith.constant dense<0.000000e+00> : vector<16xf32>
    %202 = vector.multi_reduction <add>, %201, %cst_122 [1] : vector<16x32xf32> to vector<16xf32>
    %203 = vector.shape_cast %202 : vector<16xf32> to vector<16x1xf32>
    %cst_123 = arith.constant 3.200000e+01 : f32
    %204 = vector.broadcast %cst_123 : f32 to vector<16x1xf32>
    %205 = arith.divf %203, %204 : vector<16x1xf32>
    %206 = arith.mulf %201, %201 : vector<16x32xf32>
    %cst_124 = arith.constant dense<0.000000e+00> : vector<16xf32>
    %207 = vector.multi_reduction <add>, %206, %cst_124 [1] : vector<16x32xf32> to vector<16xf32>
    %208 = vector.shape_cast %207 : vector<16xf32> to vector<16x1xf32>
    %cst_125 = arith.constant 3.200000e+01 : f32
    %209 = vector.broadcast %cst_125 : f32 to vector<16x1xf32>
    %210 = arith.divf %208, %209 : vector<16x1xf32>
    %211 = arith.mulf %205, %205 : vector<16x1xf32>
    %212 = arith.subf %210, %211 : vector<16x1xf32>
    %213 = vector.broadcast %205 : vector<16x1xf32> to vector<16x32xf32>
    %214 = arith.subf %201, %213 : vector<16x32xf32>
    %cst_126 = arith.constant 9.99999974E-6 : f32
    %215 = vector.broadcast %cst_126 : f32 to vector<16x1xf32>
    %216 = arith.addf %212, %215 : vector<16x1xf32>
    %217 = math.rsqrt %216 : vector<16x1xf32>
    %218 = vector.broadcast %217 : vector<16x1xf32> to vector<16x32xf32>
    %219 = arith.mulf %214, %218 : vector<16x32xf32>
    %220 = vector.broadcast %32 : vector<1x32xf32> to vector<16x32xf32>
    %221 = arith.mulf %219, %220 : vector<16x32xf32>
    %222 = vector.broadcast %33 : vector<1x32xf32> to vector<16x32xf32>
    %223 = arith.addf %221, %222 : vector<16x32xf32>
    %c0_127 = arith.constant 0 : index
    %c0_128 = arith.constant 0 : index
    %c0_129 = arith.constant 0 : index
    %224 = vector.load %arg6[%c0_127, %c0_128, %c0_129] : memref<2x32x128xf32, #tpu.memory_space<vmem>>, vector<1x32x128xf32>
    %225 = vector.shape_cast %224 : vector<1x32x128xf32> to vector<32x128xf32>
    %cst_130 = arith.constant dense<0.000000e+00> : vector<16x128xf32>
    %226 = tpu.matmul %223, %225, %cst_130 {dimension_numbers = #tpu.dot_dimension_numbers<[1], [0], [0], [1], [0, 0, 1, 1], [], []>} : vector<16x32xf32>, vector<32x128xf32>, vector<16x128xf32> -> vector<16x128xf32>
    %227 = vector.broadcast %34 : vector<1x128xf32> to vector<16x128xf32>
    %228 = arith.addf %226, %227 : vector<16x128xf32>
    %cst_131 = arith.constant 5.000000e-01 : f32
    %229 = vector.broadcast %cst_131 : f32 to vector<16x128xf32>
    %230 = arith.mulf %229, %228 : vector<16x128xf32>
    %cst_132 = arith.constant 0.707106769 : f32
    %231 = vector.broadcast %cst_132 : f32 to vector<16x128xf32>
    %232 = arith.mulf %228, %231 : vector<16x128xf32>
    %233 = math.erf %232 : vector<16x128xf32>
    %cst_133 = arith.constant 1.000000e+00 : f32
    %234 = vector.broadcast %cst_133 : f32 to vector<16x128xf32>
    %235 = arith.addf %234, %233 : vector<16x128xf32>
    %236 = arith.mulf %230, %235 : vector<16x128xf32>
    %c0_134 = arith.constant 0 : index
    %c0_135 = arith.constant 0 : index
    %c0_136 = arith.constant 0 : index
    %237 = vector.load %arg7[%c0_134, %c0_135, %c0_136] : memref<2x128x32xf32, #tpu.memory_space<vmem>>, vector<1x128x32xf32>
    %238 = vector.shape_cast %237 : vector<1x128x32xf32> to vector<128x32xf32>
    %cst_137 = arith.constant dense<0.000000e+00> : vector<16x32xf32>
    %239 = tpu.matmul %236, %238, %cst_137 {dimension_numbers = #tpu.dot_dimension_numbers<[1], [0], [0], [1], [0, 0, 1, 1], [], []>} : vector<16x128xf32>, vector<128x32xf32>, vector<16x32xf32> -> vector<16x32xf32>
    %240 = vector.broadcast %35 : vector<1x32xf32> to vector<16x32xf32>
    %241 = arith.addf %239, %240 : vector<16x32xf32>
    %242 = arith.addf %241, %223 : vector<16x32xf32>
    %cst_138 = arith.constant dense<0.000000e+00> : vector<16xf32>
    %243 = vector.multi_reduction <add>, %242, %cst_138 [1] : vector<16x32xf32> to vector<16xf32>
    %244 = vector.shape_cast %243 : vector<16xf32> to vector<16x1xf32>
    %cst_139 = arith.constant 3.200000e+01 : f32
    %245 = vector.broadcast %cst_139 : f32 to vector<16x1xf32>
    %246 = arith.divf %244, %245 : vector<16x1xf32>
    %247 = arith.mulf %242, %242 : vector<16x32xf32>
    %cst_140 = arith.constant dense<0.000000e+00> : vector<16xf32>
    %248 = vector.multi_reduction <add>, %247, %cst_140 [1] : vector<16x32xf32> to vector<16xf32>
    %249 = vector.shape_cast %248 : vector<16xf32> to vector<16x1xf32>
    %cst_141 = arith.constant 3.200000e+01 : f32
    %250 = vector.broadcast %cst_141 : f32 to vector<16x1xf32>
    %251 = arith.divf %249, %250 : vector<16x1xf32>
    %252 = arith.mulf %246, %246 : vector<16x1xf32>
    %253 = arith.subf %251, %252 : vector<16x1xf32>
    %254 = vector.broadcast %246 : vector<16x1xf32> to vector<16x32xf32>
    %255 = arith.subf %242, %254 : vector<16x32xf32>
    %cst_142 = arith.constant 9.99999974E-6 : f32
    %256 = vector.broadcast %cst_142 : f32 to vector<16x1xf32>
    %257 = arith.addf %253, %256 : vector<16x1xf32>
    %258 = math.rsqrt %257 : vector<16x1xf32>
    %259 = vector.broadcast %258 : vector<16x1xf32> to vector<16x32xf32>
    %260 = arith.mulf %255, %259 : vector<16x32xf32>
    %261 = vector.broadcast %36 : vector<1x32xf32> to vector<16x32xf32>
    %262 = arith.mulf %260, %261 : vector<16x32xf32>
    %263 = vector.broadcast %37 : vector<1x32xf32> to vector<16x32xf32>
    %264 = arith.addf %262, %263 : vector<16x32xf32>
    %c1_143 = arith.constant 1 : index
    %c0_144 = arith.constant 0 : index
    %c0_145 = arith.constant 0 : index
    %265 = vector.load %arg8[%c1_143, %c0_144, %c0_145] : memref<2x8x128xf32, #tpu.memory_space<vmem>>, vector<1x8x128xf32>
    %266 = vector.shape_cast %265 : vector<1x8x128xf32> to vector<8x128xf32>
    %267 = vector.extract_strided_slice %266 {offsets = [0, 0], sizes = [1, 32], strides = [1, 1]} : vector<8x128xf32> to vector<1x32xf32>
    %268 = vector.extract_strided_slice %266 {offsets = [1, 0], sizes = [1, 32], strides = [1, 1]} : vector<8x128xf32> to vector<1x32xf32>
    %269 = vector.extract_strided_slice %266 {offsets = [2, 0], sizes = [1, 32], strides = [1, 1]} : vector<8x128xf32> to vector<1x32xf32>
    %270 = vector.extract_strided_slice %266 {offsets = [3, 0], sizes = [1, 128], strides = [1, 1]} : vector<8x128xf32> to vector<1x128xf32>
    %271 = vector.extract_strided_slice %266 {offsets = [4, 0], sizes = [1, 32], strides = [1, 1]} : vector<8x128xf32> to vector<1x32xf32>
    %272 = vector.extract_strided_slice %266 {offsets = [5, 0], sizes = [1, 32], strides = [1, 1]} : vector<8x128xf32> to vector<1x32xf32>
    %273 = vector.extract_strided_slice %266 {offsets = [6, 0], sizes = [1, 32], strides = [1, 1]} : vector<8x128xf32> to vector<1x32xf32>
    %cst_146 = arith.constant 0.000000e+00 : f32
    %274 = vector.broadcast %cst_146 : f32 to vector<16x32xf32>
    %c12 = arith.constant 12 : index
    %c0_147 = arith.constant 0 : index
    %c0_148 = arith.constant 0 : index
    %275 = vector.load %arg3[%c12, %c0_147, %c0_148] : memref<24x32x8xf32, #tpu.memory_space<vmem>>, vector<1x32x8xf32>
    %276 = vector.shape_cast %275 : vector<1x32x8xf32> to vector<32x8xf32>
    %cst_149 = arith.constant dense<0.000000e+00> : vector<16x8xf32>
    %277 = tpu.matmul %264, %276, %cst_149 {dimension_numbers = #tpu.dot_dimension_numbers<[1], [0], [0], [1], [0, 0, 1, 1], [], []>} : vector<16x32xf32>, vector<32x8xf32>, vector<16x8xf32> -> vector<16x8xf32>
    %c12_150 = arith.constant 12 : index
    %c0_151 = arith.constant 0 : index
    %c0_152 = arith.constant 0 : index
    %278 = vector.load %arg4[%c12_150, %c0_151, %c0_152] : memref<24x1x8xf32, #tpu.memory_space<vmem>>, vector<1x1x8xf32>
    %279 = vector.shape_cast %278 : vector<1x1x8xf32> to vector<1x8xf32>
    %280 = vector.broadcast %279 : vector<1x8xf32> to vector<16x8xf32>
    %281 = arith.addf %277, %280 : vector<16x8xf32>
    %c13 = arith.constant 13 : index
    %c0_153 = arith.constant 0 : index
    %c0_154 = arith.constant 0 : index
    %282 = vector.load %arg3[%c13, %c0_153, %c0_154] : memref<24x32x8xf32, #tpu.memory_space<vmem>>, vector<1x32x8xf32>
    %283 = vector.shape_cast %282 : vector<1x32x8xf32> to vector<32x8xf32>
    %cst_155 = arith.constant dense<0.000000e+00> : vector<16x8xf32>
    %284 = tpu.matmul %264, %283, %cst_155 {dimension_numbers = #tpu.dot_dimension_numbers<[1], [0], [0], [1], [0, 0, 1, 1], [], []>} : vector<16x32xf32>, vector<32x8xf32>, vector<16x8xf32> -> vector<16x8xf32>
    %c13_156 = arith.constant 13 : index
    %c0_157 = arith.constant 0 : index
    %c0_158 = arith.constant 0 : index
    %285 = vector.load %arg4[%c13_156, %c0_157, %c0_158] : memref<24x1x8xf32, #tpu.memory_space<vmem>>, vector<1x1x8xf32>
    %286 = vector.shape_cast %285 : vector<1x1x8xf32> to vector<1x8xf32>
    %287 = vector.broadcast %286 : vector<1x8xf32> to vector<16x8xf32>
    %288 = arith.addf %284, %287 : vector<16x8xf32>
    %c14 = arith.constant 14 : index
    %c0_159 = arith.constant 0 : index
    %c0_160 = arith.constant 0 : index
    %289 = vector.load %arg3[%c14, %c0_159, %c0_160] : memref<24x32x8xf32, #tpu.memory_space<vmem>>, vector<1x32x8xf32>
    %290 = vector.shape_cast %289 : vector<1x32x8xf32> to vector<32x8xf32>
    %cst_161 = arith.constant dense<0.000000e+00> : vector<16x8xf32>
    %291 = tpu.matmul %264, %290, %cst_161 {dimension_numbers = #tpu.dot_dimension_numbers<[1], [0], [0], [1], [0, 0, 1, 1], [], []>} : vector<16x32xf32>, vector<32x8xf32>, vector<16x8xf32> -> vector<16x8xf32>
    %c14_162 = arith.constant 14 : index
    %c0_163 = arith.constant 0 : index
    %c0_164 = arith.constant 0 : index
    %292 = vector.load %arg4[%c14_162, %c0_163, %c0_164] : memref<24x1x8xf32, #tpu.memory_space<vmem>>, vector<1x1x8xf32>
    %293 = vector.shape_cast %292 : vector<1x1x8xf32> to vector<1x8xf32>
    %294 = vector.broadcast %293 : vector<1x8xf32> to vector<16x8xf32>
    %295 = arith.addf %291, %294 : vector<16x8xf32>
    %cst_165 = arith.constant dense<0.000000e+00> : vector<16x16xf32>
    %296 = tpu.matmul %281, %288, %cst_165 {dimension_numbers = #tpu.dot_dimension_numbers<[1], [1], [0], [0], [0, 0, 1, 0], [], []>} : vector<16x8xf32>, vector<16x8xf32>, vector<16x16xf32> -> vector<16x16xf32>
    %cst_166 = arith.constant 0.353553385 : f32
    %297 = vector.broadcast %cst_166 : f32 to vector<16x16xf32>
    %298 = arith.mulf %296, %297 : vector<16x16xf32>
    %299 = arith.addf %298, %6 : vector<16x16xf32>
    %cst_167 = arith.constant dense<0xFF800000> : vector<16xf32>
    %300 = vector.multi_reduction <maximumf>, %299, %cst_167 [1] : vector<16x16xf32> to vector<16xf32>
    %301 = vector.shape_cast %300 : vector<16xf32> to vector<16x1xf32>
    %302 = vector.broadcast %301 : vector<16x1xf32> to vector<16x16xf32>
    %303 = arith.subf %299, %302 : vector<16x16xf32>
    %304 = math.exp %303 : vector<16x16xf32>
    %cst_168 = arith.constant dense<0.000000e+00> : vector<16xf32>
    %305 = vector.multi_reduction <add>, %304, %cst_168 [1] : vector<16x16xf32> to vector<16xf32>
    %306 = vector.shape_cast %305 : vector<16xf32> to vector<16x1xf32>
    %307 = tpu.reciprocal %306 {approx = true} : vector<16x1xf32> -> vector<16x1xf32>
    %308 = vector.broadcast %307 : vector<16x1xf32> to vector<16x16xf32>
    %309 = arith.mulf %304, %308 : vector<16x16xf32>
    %cst_169 = arith.constant dense<0.000000e+00> : vector<16x8xf32>
    %310 = tpu.matmul %309, %295, %cst_169 {dimension_numbers = #tpu.dot_dimension_numbers<[1], [0], [0], [1], [0, 0, 1, 1], [], []>} : vector<16x16xf32>, vector<16x8xf32>, vector<16x8xf32> -> vector<16x8xf32>
    %c4_170 = arith.constant 4 : index
    %c0_171 = arith.constant 0 : index
    %c0_172 = arith.constant 0 : index
    %311 = vector.load %arg5[%c4_170, %c0_171, %c0_172] : memref<8x8x32xf32, #tpu.memory_space<vmem>>, vector<1x8x32xf32>
    %312 = vector.shape_cast %311 : vector<1x8x32xf32> to vector<8x32xf32>
    %cst_173 = arith.constant dense<0.000000e+00> : vector<16x32xf32>
    %313 = tpu.matmul %310, %312, %cst_173 {dimension_numbers = #tpu.dot_dimension_numbers<[1], [0], [0], [1], [0, 0, 1, 1], [], []>} : vector<16x8xf32>, vector<8x32xf32>, vector<16x32xf32> -> vector<16x32xf32>
    %314 = arith.addf %274, %313 : vector<16x32xf32>
    %c15 = arith.constant 15 : index
    %c0_174 = arith.constant 0 : index
    %c0_175 = arith.constant 0 : index
    %315 = vector.load %arg3[%c15, %c0_174, %c0_175] : memref<24x32x8xf32, #tpu.memory_space<vmem>>, vector<1x32x8xf32>
    %316 = vector.shape_cast %315 : vector<1x32x8xf32> to vector<32x8xf32>
    %cst_176 = arith.constant dense<0.000000e+00> : vector<16x8xf32>
    %317 = tpu.matmul %264, %316, %cst_176 {dimension_numbers = #tpu.dot_dimension_numbers<[1], [0], [0], [1], [0, 0, 1, 1], [], []>} : vector<16x32xf32>, vector<32x8xf32>, vector<16x8xf32> -> vector<16x8xf32>
    %c15_177 = arith.constant 15 : index
    %c0_178 = arith.constant 0 : index
    %c0_179 = arith.constant 0 : index
    %318 = vector.load %arg4[%c15_177, %c0_178, %c0_179] : memref<24x1x8xf32, #tpu.memory_space<vmem>>, vector<1x1x8xf32>
    %319 = vector.shape_cast %318 : vector<1x1x8xf32> to vector<1x8xf32>
    %320 = vector.broadcast %319 : vector<1x8xf32> to vector<16x8xf32>
    %321 = arith.addf %317, %320 : vector<16x8xf32>
    %c16 = arith.constant 16 : index
    %c0_180 = arith.constant 0 : index
    %c0_181 = arith.constant 0 : index
    %322 = vector.load %arg3[%c16, %c0_180, %c0_181] : memref<24x32x8xf32, #tpu.memory_space<vmem>>, vector<1x32x8xf32>
    %323 = vector.shape_cast %322 : vector<1x32x8xf32> to vector<32x8xf32>
    %cst_182 = arith.constant dense<0.000000e+00> : vector<16x8xf32>
    %324 = tpu.matmul %264, %323, %cst_182 {dimension_numbers = #tpu.dot_dimension_numbers<[1], [0], [0], [1], [0, 0, 1, 1], [], []>} : vector<16x32xf32>, vector<32x8xf32>, vector<16x8xf32> -> vector<16x8xf32>
    %c16_183 = arith.constant 16 : index
    %c0_184 = arith.constant 0 : index
    %c0_185 = arith.constant 0 : index
    %325 = vector.load %arg4[%c16_183, %c0_184, %c0_185] : memref<24x1x8xf32, #tpu.memory_space<vmem>>, vector<1x1x8xf32>
    %326 = vector.shape_cast %325 : vector<1x1x8xf32> to vector<1x8xf32>
    %327 = vector.broadcast %326 : vector<1x8xf32> to vector<16x8xf32>
    %328 = arith.addf %324, %327 : vector<16x8xf32>
    %c17 = arith.constant 17 : index
    %c0_186 = arith.constant 0 : index
    %c0_187 = arith.constant 0 : index
    %329 = vector.load %arg3[%c17, %c0_186, %c0_187] : memref<24x32x8xf32, #tpu.memory_space<vmem>>, vector<1x32x8xf32>
    %330 = vector.shape_cast %329 : vector<1x32x8xf32> to vector<32x8xf32>
    %cst_188 = arith.constant dense<0.000000e+00> : vector<16x8xf32>
    %331 = tpu.matmul %264, %330, %cst_188 {dimension_numbers = #tpu.dot_dimension_numbers<[1], [0], [0], [1], [0, 0, 1, 1], [], []>} : vector<16x32xf32>, vector<32x8xf32>, vector<16x8xf32> -> vector<16x8xf32>
    %c17_189 = arith.constant 17 : index
    %c0_190 = arith.constant 0 : index
    %c0_191 = arith.constant 0 : index
    %332 = vector.load %arg4[%c17_189, %c0_190, %c0_191] : memref<24x1x8xf32, #tpu.memory_space<vmem>>, vector<1x1x8xf32>
    %333 = vector.shape_cast %332 : vector<1x1x8xf32> to vector<1x8xf32>
    %334 = vector.broadcast %333 : vector<1x8xf32> to vector<16x8xf32>
    %335 = arith.addf %331, %334 : vector<16x8xf32>
    %cst_192 = arith.constant dense<0.000000e+00> : vector<16x16xf32>
    %336 = tpu.matmul %321, %328, %cst_192 {dimension_numbers = #tpu.dot_dimension_numbers<[1], [1], [0], [0], [0, 0, 1, 0], [], []>} : vector<16x8xf32>, vector<16x8xf32>, vector<16x16xf32> -> vector<16x16xf32>
    %cst_193 = arith.constant 0.353553385 : f32
    %337 = vector.broadcast %cst_193 : f32 to vector<16x16xf32>
    %338 = arith.mulf %336, %337 : vector<16x16xf32>
    %339 = arith.addf %338, %6 : vector<16x16xf32>
    %cst_194 = arith.constant dense<0xFF800000> : vector<16xf32>
    %340 = vector.multi_reduction <maximumf>, %339, %cst_194 [1] : vector<16x16xf32> to vector<16xf32>
    %341 = vector.shape_cast %340 : vector<16xf32> to vector<16x1xf32>
    %342 = vector.broadcast %341 : vector<16x1xf32> to vector<16x16xf32>
    %343 = arith.subf %339, %342 : vector<16x16xf32>
    %344 = math.exp %343 : vector<16x16xf32>
    %cst_195 = arith.constant dense<0.000000e+00> : vector<16xf32>
    %345 = vector.multi_reduction <add>, %344, %cst_195 [1] : vector<16x16xf32> to vector<16xf32>
    %346 = vector.shape_cast %345 : vector<16xf32> to vector<16x1xf32>
    %347 = tpu.reciprocal %346 {approx = true} : vector<16x1xf32> -> vector<16x1xf32>
    %348 = vector.broadcast %347 : vector<16x1xf32> to vector<16x16xf32>
    %349 = arith.mulf %344, %348 : vector<16x16xf32>
    %cst_196 = arith.constant dense<0.000000e+00> : vector<16x8xf32>
    %350 = tpu.matmul %349, %335, %cst_196 {dimension_numbers = #tpu.dot_dimension_numbers<[1], [0], [0], [1], [0, 0, 1, 1], [], []>} : vector<16x16xf32>, vector<16x8xf32>, vector<16x8xf32> -> vector<16x8xf32>
    %c5_197 = arith.constant 5 : index
    %c0_198 = arith.constant 0 : index
    %c0_199 = arith.constant 0 : index
    %351 = vector.load %arg5[%c5_197, %c0_198, %c0_199] : memref<8x8x32xf32, #tpu.memory_space<vmem>>, vector<1x8x32xf32>
    %352 = vector.shape_cast %351 : vector<1x8x32xf32> to vector<8x32xf32>
    %cst_200 = arith.constant dense<0.000000e+00> : vector<16x32xf32>
    %353 = tpu.matmul %350, %352, %cst_200 {dimension_numbers = #tpu.dot_dimension_numbers<[1], [0], [0], [1], [0, 0, 1, 1], [], []>} : vector<16x8xf32>, vector<8x32xf32>, vector<16x32xf32> -> vector<16x32xf32>
    %354 = arith.addf %314, %353 : vector<16x32xf32>
    %c18 = arith.constant 18 : index
    %c0_201 = arith.constant 0 : index
    %c0_202 = arith.constant 0 : index
    %355 = vector.load %arg3[%c18, %c0_201, %c0_202] : memref<24x32x8xf32, #tpu.memory_space<vmem>>, vector<1x32x8xf32>
    %356 = vector.shape_cast %355 : vector<1x32x8xf32> to vector<32x8xf32>
    %cst_203 = arith.constant dense<0.000000e+00> : vector<16x8xf32>
    %357 = tpu.matmul %264, %356, %cst_203 {dimension_numbers = #tpu.dot_dimension_numbers<[1], [0], [0], [1], [0, 0, 1, 1], [], []>} : vector<16x32xf32>, vector<32x8xf32>, vector<16x8xf32> -> vector<16x8xf32>
    %c18_204 = arith.constant 18 : index
    %c0_205 = arith.constant 0 : index
    %c0_206 = arith.constant 0 : index
    %358 = vector.load %arg4[%c18_204, %c0_205, %c0_206] : memref<24x1x8xf32, #tpu.memory_space<vmem>>, vector<1x1x8xf32>
    %359 = vector.shape_cast %358 : vector<1x1x8xf32> to vector<1x8xf32>
    %360 = vector.broadcast %359 : vector<1x8xf32> to vector<16x8xf32>
    %361 = arith.addf %357, %360 : vector<16x8xf32>
    %c19 = arith.constant 19 : index
    %c0_207 = arith.constant 0 : index
    %c0_208 = arith.constant 0 : index
    %362 = vector.load %arg3[%c19, %c0_207, %c0_208] : memref<24x32x8xf32, #tpu.memory_space<vmem>>, vector<1x32x8xf32>
    %363 = vector.shape_cast %362 : vector<1x32x8xf32> to vector<32x8xf32>
    %cst_209 = arith.constant dense<0.000000e+00> : vector<16x8xf32>
    %364 = tpu.matmul %264, %363, %cst_209 {dimension_numbers = #tpu.dot_dimension_numbers<[1], [0], [0], [1], [0, 0, 1, 1], [], []>} : vector<16x32xf32>, vector<32x8xf32>, vector<16x8xf32> -> vector<16x8xf32>
    %c19_210 = arith.constant 19 : index
    %c0_211 = arith.constant 0 : index
    %c0_212 = arith.constant 0 : index
    %365 = vector.load %arg4[%c19_210, %c0_211, %c0_212] : memref<24x1x8xf32, #tpu.memory_space<vmem>>, vector<1x1x8xf32>
    %366 = vector.shape_cast %365 : vector<1x1x8xf32> to vector<1x8xf32>
    %367 = vector.broadcast %366 : vector<1x8xf32> to vector<16x8xf32>
    %368 = arith.addf %364, %367 : vector<16x8xf32>
    %c20 = arith.constant 20 : index
    %c0_213 = arith.constant 0 : index
    %c0_214 = arith.constant 0 : index
    %369 = vector.load %arg3[%c20, %c0_213, %c0_214] : memref<24x32x8xf32, #tpu.memory_space<vmem>>, vector<1x32x8xf32>
    %370 = vector.shape_cast %369 : vector<1x32x8xf32> to vector<32x8xf32>
    %cst_215 = arith.constant dense<0.000000e+00> : vector<16x8xf32>
    %371 = tpu.matmul %264, %370, %cst_215 {dimension_numbers = #tpu.dot_dimension_numbers<[1], [0], [0], [1], [0, 0, 1, 1], [], []>} : vector<16x32xf32>, vector<32x8xf32>, vector<16x8xf32> -> vector<16x8xf32>
    %c20_216 = arith.constant 20 : index
    %c0_217 = arith.constant 0 : index
    %c0_218 = arith.constant 0 : index
    %372 = vector.load %arg4[%c20_216, %c0_217, %c0_218] : memref<24x1x8xf32, #tpu.memory_space<vmem>>, vector<1x1x8xf32>
    %373 = vector.shape_cast %372 : vector<1x1x8xf32> to vector<1x8xf32>
    %374 = vector.broadcast %373 : vector<1x8xf32> to vector<16x8xf32>
    %375 = arith.addf %371, %374 : vector<16x8xf32>
    %cst_219 = arith.constant dense<0.000000e+00> : vector<16x16xf32>
    %376 = tpu.matmul %361, %368, %cst_219 {dimension_numbers = #tpu.dot_dimension_numbers<[1], [1], [0], [0], [0, 0, 1, 0], [], []>} : vector<16x8xf32>, vector<16x8xf32>, vector<16x16xf32> -> vector<16x16xf32>
    %cst_220 = arith.constant 0.353553385 : f32
    %377 = vector.broadcast %cst_220 : f32 to vector<16x16xf32>
    %378 = arith.mulf %376, %377 : vector<16x16xf32>
    %379 = arith.addf %378, %6 : vector<16x16xf32>
    %cst_221 = arith.constant dense<0xFF800000> : vector<16xf32>
    %380 = vector.multi_reduction <maximumf>, %379, %cst_221 [1] : vector<16x16xf32> to vector<16xf32>
    %381 = vector.shape_cast %380 : vector<16xf32> to vector<16x1xf32>
    %382 = vector.broadcast %381 : vector<16x1xf32> to vector<16x16xf32>
    %383 = arith.subf %379, %382 : vector<16x16xf32>
    %384 = math.exp %383 : vector<16x16xf32>
    %cst_222 = arith.constant dense<0.000000e+00> : vector<16xf32>
    %385 = vector.multi_reduction <add>, %384, %cst_222 [1] : vector<16x16xf32> to vector<16xf32>
    %386 = vector.shape_cast %385 : vector<16xf32> to vector<16x1xf32>
    %387 = tpu.reciprocal %386 {approx = true} : vector<16x1xf32> -> vector<16x1xf32>
    %388 = vector.broadcast %387 : vector<16x1xf32> to vector<16x16xf32>
    %389 = arith.mulf %384, %388 : vector<16x16xf32>
    %cst_223 = arith.constant dense<0.000000e+00> : vector<16x8xf32>
    %390 = tpu.matmul %389, %375, %cst_223 {dimension_numbers = #tpu.dot_dimension_numbers<[1], [0], [0], [1], [0, 0, 1, 1], [], []>} : vector<16x16xf32>, vector<16x8xf32>, vector<16x8xf32> -> vector<16x8xf32>
    %c6_224 = arith.constant 6 : index
    %c0_225 = arith.constant 0 : index
    %c0_226 = arith.constant 0 : index
    %391 = vector.load %arg5[%c6_224, %c0_225, %c0_226] : memref<8x8x32xf32, #tpu.memory_space<vmem>>, vector<1x8x32xf32>
    %392 = vector.shape_cast %391 : vector<1x8x32xf32> to vector<8x32xf32>
    %cst_227 = arith.constant dense<0.000000e+00> : vector<16x32xf32>
    %393 = tpu.matmul %390, %392, %cst_227 {dimension_numbers = #tpu.dot_dimension_numbers<[1], [0], [0], [1], [0, 0, 1, 1], [], []>} : vector<16x8xf32>, vector<8x32xf32>, vector<16x32xf32> -> vector<16x32xf32>
    %394 = arith.addf %354, %393 : vector<16x32xf32>
    %c21 = arith.constant 21 : index
    %c0_228 = arith.constant 0 : index
    %c0_229 = arith.constant 0 : index
    %395 = vector.load %arg3[%c21, %c0_228, %c0_229] : memref<24x32x8xf32, #tpu.memory_space<vmem>>, vector<1x32x8xf32>
    %396 = vector.shape_cast %395 : vector<1x32x8xf32> to vector<32x8xf32>
    %cst_230 = arith.constant dense<0.000000e+00> : vector<16x8xf32>
    %397 = tpu.matmul %264, %396, %cst_230 {dimension_numbers = #tpu.dot_dimension_numbers<[1], [0], [0], [1], [0, 0, 1, 1], [], []>} : vector<16x32xf32>, vector<32x8xf32>, vector<16x8xf32> -> vector<16x8xf32>
    %c21_231 = arith.constant 21 : index
    %c0_232 = arith.constant 0 : index
    %c0_233 = arith.constant 0 : index
    %398 = vector.load %arg4[%c21_231, %c0_232, %c0_233] : memref<24x1x8xf32, #tpu.memory_space<vmem>>, vector<1x1x8xf32>
    %399 = vector.shape_cast %398 : vector<1x1x8xf32> to vector<1x8xf32>
    %400 = vector.broadcast %399 : vector<1x8xf32> to vector<16x8xf32>
    %401 = arith.addf %397, %400 : vector<16x8xf32>
    %c22 = arith.constant 22 : index
    %c0_234 = arith.constant 0 : index
    %c0_235 = arith.constant 0 : index
    %402 = vector.load %arg3[%c22, %c0_234, %c0_235] : memref<24x32x8xf32, #tpu.memory_space<vmem>>, vector<1x32x8xf32>
    %403 = vector.shape_cast %402 : vector<1x32x8xf32> to vector<32x8xf32>
    %cst_236 = arith.constant dense<0.000000e+00> : vector<16x8xf32>
    %404 = tpu.matmul %264, %403, %cst_236 {dimension_numbers = #tpu.dot_dimension_numbers<[1], [0], [0], [1], [0, 0, 1, 1], [], []>} : vector<16x32xf32>, vector<32x8xf32>, vector<16x8xf32> -> vector<16x8xf32>
    %c22_237 = arith.constant 22 : index
    %c0_238 = arith.constant 0 : index
    %c0_239 = arith.constant 0 : index
    %405 = vector.load %arg4[%c22_237, %c0_238, %c0_239] : memref<24x1x8xf32, #tpu.memory_space<vmem>>, vector<1x1x8xf32>
    %406 = vector.shape_cast %405 : vector<1x1x8xf32> to vector<1x8xf32>
    %407 = vector.broadcast %406 : vector<1x8xf32> to vector<16x8xf32>
    %408 = arith.addf %404, %407 : vector<16x8xf32>
    %c23 = arith.constant 23 : index
    %c0_240 = arith.constant 0 : index
    %c0_241 = arith.constant 0 : index
    %409 = vector.load %arg3[%c23, %c0_240, %c0_241] : memref<24x32x8xf32, #tpu.memory_space<vmem>>, vector<1x32x8xf32>
    %410 = vector.shape_cast %409 : vector<1x32x8xf32> to vector<32x8xf32>
    %cst_242 = arith.constant dense<0.000000e+00> : vector<16x8xf32>
    %411 = tpu.matmul %264, %410, %cst_242 {dimension_numbers = #tpu.dot_dimension_numbers<[1], [0], [0], [1], [0, 0, 1, 1], [], []>} : vector<16x32xf32>, vector<32x8xf32>, vector<16x8xf32> -> vector<16x8xf32>
    %c23_243 = arith.constant 23 : index
    %c0_244 = arith.constant 0 : index
    %c0_245 = arith.constant 0 : index
    %412 = vector.load %arg4[%c23_243, %c0_244, %c0_245] : memref<24x1x8xf32, #tpu.memory_space<vmem>>, vector<1x1x8xf32>
    %413 = vector.shape_cast %412 : vector<1x1x8xf32> to vector<1x8xf32>
    %414 = vector.broadcast %413 : vector<1x8xf32> to vector<16x8xf32>
    %415 = arith.addf %411, %414 : vector<16x8xf32>
    %cst_246 = arith.constant dense<0.000000e+00> : vector<16x16xf32>
    %416 = tpu.matmul %401, %408, %cst_246 {dimension_numbers = #tpu.dot_dimension_numbers<[1], [1], [0], [0], [0, 0, 1, 0], [], []>} : vector<16x8xf32>, vector<16x8xf32>, vector<16x16xf32> -> vector<16x16xf32>
    %cst_247 = arith.constant 0.353553385 : f32
    %417 = vector.broadcast %cst_247 : f32 to vector<16x16xf32>
    %418 = arith.mulf %416, %417 : vector<16x16xf32>
    %419 = arith.addf %418, %6 : vector<16x16xf32>
    %cst_248 = arith.constant dense<0xFF800000> : vector<16xf32>
    %420 = vector.multi_reduction <maximumf>, %419, %cst_248 [1] : vector<16x16xf32> to vector<16xf32>
    %421 = vector.shape_cast %420 : vector<16xf32> to vector<16x1xf32>
    %422 = vector.broadcast %421 : vector<16x1xf32> to vector<16x16xf32>
    %423 = arith.subf %419, %422 : vector<16x16xf32>
    %424 = math.exp %423 : vector<16x16xf32>
    %cst_249 = arith.constant dense<0.000000e+00> : vector<16xf32>
    %425 = vector.multi_reduction <add>, %424, %cst_249 [1] : vector<16x16xf32> to vector<16xf32>
    %426 = vector.shape_cast %425 : vector<16xf32> to vector<16x1xf32>
    %427 = tpu.reciprocal %426 {approx = true} : vector<16x1xf32> -> vector<16x1xf32>
    %428 = vector.broadcast %427 : vector<16x1xf32> to vector<16x16xf32>
    %429 = arith.mulf %424, %428 : vector<16x16xf32>
    %cst_250 = arith.constant dense<0.000000e+00> : vector<16x8xf32>
    %430 = tpu.matmul %429, %415, %cst_250 {dimension_numbers = #tpu.dot_dimension_numbers<[1], [0], [0], [1], [0, 0, 1, 1], [], []>} : vector<16x16xf32>, vector<16x8xf32>, vector<16x8xf32> -> vector<16x8xf32>
    %c7_251 = arith.constant 7 : index
    %c0_252 = arith.constant 0 : index
    %c0_253 = arith.constant 0 : index
    %431 = vector.load %arg5[%c7_251, %c0_252, %c0_253] : memref<8x8x32xf32, #tpu.memory_space<vmem>>, vector<1x8x32xf32>
    %432 = vector.shape_cast %431 : vector<1x8x32xf32> to vector<8x32xf32>
    %cst_254 = arith.constant dense<0.000000e+00> : vector<16x32xf32>
    %433 = tpu.matmul %430, %432, %cst_254 {dimension_numbers = #tpu.dot_dimension_numbers<[1], [0], [0], [1], [0, 0, 1, 1], [], []>} : vector<16x8xf32>, vector<8x32xf32>, vector<16x32xf32> -> vector<16x32xf32>
    %434 = arith.addf %394, %433 : vector<16x32xf32>
    %435 = vector.broadcast %267 : vector<1x32xf32> to vector<16x32xf32>
    %436 = arith.addf %434, %435 : vector<16x32xf32>
    %437 = arith.addf %436, %264 : vector<16x32xf32>
    %cst_255 = arith.constant dense<0.000000e+00> : vector<16xf32>
    %438 = vector.multi_reduction <add>, %437, %cst_255 [1] : vector<16x32xf32> to vector<16xf32>
    %439 = vector.shape_cast %438 : vector<16xf32> to vector<16x1xf32>
    %cst_256 = arith.constant 3.200000e+01 : f32
    %440 = vector.broadcast %cst_256 : f32 to vector<16x1xf32>
    %441 = arith.divf %439, %440 : vector<16x1xf32>
    %442 = arith.mulf %437, %437 : vector<16x32xf32>
    %cst_257 = arith.constant dense<0.000000e+00> : vector<16xf32>
    %443 = vector.multi_reduction <add>, %442, %cst_257 [1] : vector<16x32xf32> to vector<16xf32>
    %444 = vector.shape_cast %443 : vector<16xf32> to vector<16x1xf32>
    %cst_258 = arith.constant 3.200000e+01 : f32
    %445 = vector.broadcast %cst_258 : f32 to vector<16x1xf32>
    %446 = arith.divf %444, %445 : vector<16x1xf32>
    %447 = arith.mulf %441, %441 : vector<16x1xf32>
    %448 = arith.subf %446, %447 : vector<16x1xf32>
    %449 = vector.broadcast %441 : vector<16x1xf32> to vector<16x32xf32>
    %450 = arith.subf %437, %449 : vector<16x32xf32>
    %cst_259 = arith.constant 9.99999974E-6 : f32
    %451 = vector.broadcast %cst_259 : f32 to vector<16x1xf32>
    %452 = arith.addf %448, %451 : vector<16x1xf32>
    %453 = math.rsqrt %452 : vector<16x1xf32>
    %454 = vector.broadcast %453 : vector<16x1xf32> to vector<16x32xf32>
    %455 = arith.mulf %450, %454 : vector<16x32xf32>
    %456 = vector.broadcast %268 : vector<1x32xf32> to vector<16x32xf32>
    %457 = arith.mulf %455, %456 : vector<16x32xf32>
    %458 = vector.broadcast %269 : vector<1x32xf32> to vector<16x32xf32>
    %459 = arith.addf %457, %458 : vector<16x32xf32>
    %c1_260 = arith.constant 1 : index
    %c0_261 = arith.constant 0 : index
    %c0_262 = arith.constant 0 : index
    %460 = vector.load %arg6[%c1_260, %c0_261, %c0_262] : memref<2x32x128xf32, #tpu.memory_space<vmem>>, vector<1x32x128xf32>
    %461 = vector.shape_cast %460 : vector<1x32x128xf32> to vector<32x128xf32>
    %cst_263 = arith.constant dense<0.000000e+00> : vector<16x128xf32>
    %462 = tpu.matmul %459, %461, %cst_263 {dimension_numbers = #tpu.dot_dimension_numbers<[1], [0], [0], [1], [0, 0, 1, 1], [], []>} : vector<16x32xf32>, vector<32x128xf32>, vector<16x128xf32> -> vector<16x128xf32>
    %463 = vector.broadcast %270 : vector<1x128xf32> to vector<16x128xf32>
    %464 = arith.addf %462, %463 : vector<16x128xf32>
    %cst_264 = arith.constant 5.000000e-01 : f32
    %465 = vector.broadcast %cst_264 : f32 to vector<16x128xf32>
    %466 = arith.mulf %465, %464 : vector<16x128xf32>
    %cst_265 = arith.constant 0.707106769 : f32
    %467 = vector.broadcast %cst_265 : f32 to vector<16x128xf32>
    %468 = arith.mulf %464, %467 : vector<16x128xf32>
    %469 = math.erf %468 : vector<16x128xf32>
    %cst_266 = arith.constant 1.000000e+00 : f32
    %470 = vector.broadcast %cst_266 : f32 to vector<16x128xf32>
    %471 = arith.addf %470, %469 : vector<16x128xf32>
    %472 = arith.mulf %466, %471 : vector<16x128xf32>
    %c1_267 = arith.constant 1 : index
    %c0_268 = arith.constant 0 : index
    %c0_269 = arith.constant 0 : index
    %473 = vector.load %arg7[%c1_267, %c0_268, %c0_269] : memref<2x128x32xf32, #tpu.memory_space<vmem>>, vector<1x128x32xf32>
    %474 = vector.shape_cast %473 : vector<1x128x32xf32> to vector<128x32xf32>
    %cst_270 = arith.constant dense<0.000000e+00> : vector<16x32xf32>
    %475 = tpu.matmul %472, %474, %cst_270 {dimension_numbers = #tpu.dot_dimension_numbers<[1], [0], [0], [1], [0, 0, 1, 1], [], []>} : vector<16x128xf32>, vector<128x32xf32>, vector<16x32xf32> -> vector<16x32xf32>
    %476 = vector.broadcast %271 : vector<1x32xf32> to vector<16x32xf32>
    %477 = arith.addf %475, %476 : vector<16x32xf32>
    %478 = arith.addf %477, %459 : vector<16x32xf32>
    %cst_271 = arith.constant dense<0.000000e+00> : vector<16xf32>
    %479 = vector.multi_reduction <add>, %478, %cst_271 [1] : vector<16x32xf32> to vector<16xf32>
    %480 = vector.shape_cast %479 : vector<16xf32> to vector<16x1xf32>
    %cst_272 = arith.constant 3.200000e+01 : f32
    %481 = vector.broadcast %cst_272 : f32 to vector<16x1xf32>
    %482 = arith.divf %480, %481 : vector<16x1xf32>
    %483 = arith.mulf %478, %478 : vector<16x32xf32>
    %cst_273 = arith.constant dense<0.000000e+00> : vector<16xf32>
    %484 = vector.multi_reduction <add>, %483, %cst_273 [1] : vector<16x32xf32> to vector<16xf32>
    %485 = vector.shape_cast %484 : vector<16xf32> to vector<16x1xf32>
    %cst_274 = arith.constant 3.200000e+01 : f32
    %486 = vector.broadcast %cst_274 : f32 to vector<16x1xf32>
    %487 = arith.divf %485, %486 : vector<16x1xf32>
    %488 = arith.mulf %482, %482 : vector<16x1xf32>
    %489 = arith.subf %487, %488 : vector<16x1xf32>
    %490 = vector.broadcast %482 : vector<16x1xf32> to vector<16x32xf32>
    %491 = arith.subf %478, %490 : vector<16x32xf32>
    %cst_275 = arith.constant 9.99999974E-6 : f32
    %492 = vector.broadcast %cst_275 : f32 to vector<16x1xf32>
    %493 = arith.addf %489, %492 : vector<16x1xf32>
    %494 = math.rsqrt %493 : vector<16x1xf32>
    %495 = vector.broadcast %494 : vector<16x1xf32> to vector<16x32xf32>
    %496 = arith.mulf %491, %495 : vector<16x32xf32>
    %497 = vector.broadcast %272 : vector<1x32xf32> to vector<16x32xf32>
    %498 = arith.mulf %496, %497 : vector<16x32xf32>
    %499 = vector.broadcast %273 : vector<1x32xf32> to vector<16x32xf32>
    %500 = arith.addf %498, %499 : vector<16x32xf32>
    %501 = vector.broadcast %3 : vector<1x32xf32> to vector<16x32xf32>
    %502 = arith.mulf %500, %501 : vector<16x32xf32>
    %cst_276 = arith.constant dense<0.000000e+00> : vector<16xf32>
    %503 = vector.multi_reduction <add>, %502, %cst_276 [1] : vector<16x32xf32> to vector<16xf32>
    %504 = vector.shape_cast %503 : vector<16xf32> to vector<16x1xf32>
    %505 = vector.broadcast %4 : vector<1x1xf32> to vector<16x1xf32>
    %506 = arith.addf %504, %505 : vector<16x1xf32>
    %c0_277 = arith.constant 0 : index
    %c0_278 = arith.constant 0 : index
    %507 = vector.load %arg10[%c0_277, %c0_278] : memref<16x1xf32, #tpu.memory_space<vmem>>, vector<16x1xf32>
    tpu.vector_store %arg10[%c0_277, %c0_278], %506 {strides = array<i32>} : memref<16x1xf32, #tpu.memory_space<vmem>>, vector<16x1xf32>,
    return
  }
  func.func @transform_0(%arg0: i32) -> (i32, i32) {
    %c0_i32 = arith.constant 0 : i32
    %c0_i32_0 = arith.constant 0 : i32
    %c0_i32_1 = arith.constant 0 : i32
    return %c0_i32, %c0_i32_0 : i32, i32
  }
  func.func @transform_1(%arg0: i32) -> (i32, i32) {
    %c0_i32 = arith.constant 0 : i32
    %c0_i32_0 = arith.constant 0 : i32
    %c0_i32_1 = arith.constant 0 : i32
    return %c0_i32, %c0_i32_0 : i32, i32
  }
  func.func @transform_2(%arg0: i32) -> (i32, i32, i32) {
    %c0_i32 = arith.constant 0 : i32
    %c0_i32_0 = arith.constant 0 : i32
    %c0_i32_1 = arith.constant 0 : i32
    %c0_i32_2 = arith.constant 0 : i32
    return %c0_i32, %c0_i32_0, %c0_i32_1 : i32, i32, i32
  }
  func.func @transform_3(%arg0: i32) -> (i32, i32, i32) {
    %c0_i32 = arith.constant 0 : i32
    %c0_i32_0 = arith.constant 0 : i32
    %c0_i32_1 = arith.constant 0 : i32
    %c0_i32_2 = arith.constant 0 : i32
    return %c0_i32, %c0_i32_0, %c0_i32_1 : i32, i32, i32
  }
  func.func @transform_4(%arg0: i32) -> (i32, i32, i32) {
    %c0_i32 = arith.constant 0 : i32
    %c0_i32_0 = arith.constant 0 : i32
    %c0_i32_1 = arith.constant 0 : i32
    %c0_i32_2 = arith.constant 0 : i32
    return %c0_i32, %c0_i32_0, %c0_i32_1 : i32, i32, i32
  }
  func.func @transform_5(%arg0: i32) -> (i32, i32, i32) {
    %c0_i32 = arith.constant 0 : i32
    %c0_i32_0 = arith.constant 0 : i32
    %c0_i32_1 = arith.constant 0 : i32
    %c0_i32_2 = arith.constant 0 : i32
    return %c0_i32, %c0_i32_0, %c0_i32_1 : i32, i32, i32
  }
  func.func @transform_6(%arg0: i32) -> (i32, i32, i32) {
    %c0_i32 = arith.constant 0 : i32
    %c0_i32_0 = arith.constant 0 : i32
    %c0_i32_1 = arith.constant 0 : i32
    %c0_i32_2 = arith.constant 0 : i32
    return %c0_i32, %c0_i32_0, %c0_i32_1 : i32, i32, i32
  }
  func.func @transform_7(%arg0: i32) -> (i32, i32, i32) {
    %c0_i32 = arith.constant 0 : i32
    %c0_i32_0 = arith.constant 0 : i32
    %c0_i32_1 = arith.constant 0 : i32
    %c0_i32_2 = arith.constant 0 : i32
    return %c0_i32, %c0_i32_0, %c0_i32_1 : i32, i32, i32
  }
  func.func @transform_8(%arg0: i32) -> (i32, i32) {
    %c0_i32 = arith.constant 0 : i32
    %c0_i32_0 = arith.constant 0 : i32
    %c0_i32_1 = arith.constant 0 : i32
    return %c0_i32, %c0_i32_0 : i32, i32
  }
  func.func @transform_9(%arg0: i32) -> (i32, i32) {
    %c0_i32 = arith.constant 0 : i32
    %c0_i32_0 = arith.constant 0 : i32
    %c0_i32_1 = arith.constant 0 : i32
    return %c0_i32, %c0_i32_0 : i32, i32
  }
}

</mosaic_0001>

<llo_original>
// kernel: roberta_regression_forward.1
$region0: #{roberta_regression_forward.1}
  #allocation0 [shape = 'u32[]', space=smem, size = 0x4, offset = 0x4, fixed_abs, tag = 'smem constant byte address 0x4 - core index']
  #allocation1 [shape = 'u32[144,128]{1,0:T(1,128)}', space=vmem, size = 0x12000, scoped, tag = 'internal scratch']
  %s0 = inlined_call_operand.vmem [shape: f32[16,32], index: 0, kind: input, shape index: {}]
  %s1 = inlined_call_operand.vmem [shape: f32[16,16], index: 1, kind: input, shape index: {}]
  %s2 = inlined_call_operand.vmem [shape: f32[24,32,8], index: 2, kind: input, shape index: {}]
  %s3 = inlined_call_operand.vmem [shape: f32[24,1,8], index: 3, kind: input, shape index: {}]
  %s4 = inlined_call_operand.vmem [shape: f32[8,8,32], index: 4, kind: input, shape index: {}]
  %s5 = inlined_call_operand.vmem [shape: f32[2,32,128], index: 5, kind: input, shape index: {}]
  %s6 = inlined_call_operand.vmem [shape: f32[2,128,32], index: 6, kind: input, shape index: {}]
  %s7 = inlined_call_operand.vmem [shape: f32[2,8,128], index: 7, kind: input, shape index: {}]
  %s8 = inlined_call_operand.vmem [shape: f32[8,128], index: 8, kind: input, shape index: {}]
  %s9 = inlined_call_operand.vmem [shape: f32[16,1], index: 9, kind: output, shape index: {}]
  %s10 = sld [smem:[#allocation0]]
  $region46: #{roberta_regression_forward.1} parent=0
    _
  %s12 = ssub.s32 1, %s10
  %s13 = scalar_select 0, %s12, %s10
  // Predicated region
  $region2: #{roberta_regression_forward.1} parent=0 // pred_check
    _
  $region3: #{roberta_regression_forward.1} parent=0 // pred_check_branch
    %15 = sbr.rel (0) target = $region5
  $region4: #{roberta_regression_forward.1} parent=0 // pred_region
    _
  $region5: #{roberta_regression_forward.1} parent=0 // pred_fallthru
    _
  // Predicated region
  $region6: #{roberta_regression_forward.1} parent=0 // pred_check
    _
  $region7: #{roberta_regression_forward.1} parent=0 // pred_check_branch
    %17 = sbr.rel (0) target = $region9
  $region8: #{roberta_regression_forward.1} parent=0 // pred_region
    _
  $region9: #{roberta_regression_forward.1} parent=0 // pred_fallthru
    _
  // Predicated region
  $region10: #{roberta_regression_forward.1} parent=0 // pred_check
    _
  $region11: #{roberta_regression_forward.1} parent=0 // pred_check_branch
    %19 = sbr.rel (0) target = $region13
  $region12: #{roberta_regression_forward.1} parent=0 // pred_region
    _
  $region13: #{roberta_regression_forward.1} parent=0 // pred_fallthru
    _
  // Predicated region
  $region14: #{roberta_regression_forward.1} parent=0 // pred_check
    _
  $region15: #{roberta_regression_forward.1} parent=0 // pred_check_branch
    %21 = sbr.rel (0) target = $region17
  $region16: #{roberta_regression_forward.1} parent=0 // pred_region
    _
  $region17: #{roberta_regression_forward.1} parent=0 // pred_fallthru
    _
  // Predicated region
  $region18: #{roberta_regression_forward.1} parent=0 // pred_check
    _
  $region19: #{roberta_regression_forward.1} parent=0 // pred_check_branch
    %23 = sbr.rel (0) target = $region21
  $region20: #{roberta_regression_forward.1} parent=0 // pred_region
    _
  $region21: #{roberta_regression_forward.1} parent=0 // pred_fallthru
    _
  // Predicated region
  $region22: #{roberta_regression_forward.1} parent=0 // pred_check
    _
  $region23: #{roberta_regression_forward.1} parent=0 // pred_check_branch
    %25 = sbr.rel (0) target = $region25
  $region24: #{roberta_regression_forward.1} parent=0 // pred_region
    _
  $region25: #{roberta_regression_forward.1} parent=0 // pred_fallthru
    _
  // Predicated region
  $region26: #{roberta_regression_forward.1} parent=0 // pred_check
    _
  $region27: #{roberta_regression_forward.1} parent=0 // pred_check_branch
    %27 = sbr.rel (0) target = $region29
  $region28: #{roberta_regression_forward.1} parent=0 // pred_region
    _
  $region29: #{roberta_regression_forward.1} parent=0 // pred_fallthru
    _
  // Predicated region
  $region30: #{roberta_regression_forward.1} parent=0 // pred_check
    _
  $region31: #{roberta_regression_forward.1} parent=0 // pred_check_branch
    %29 = sbr.rel (0) target = $region33
  $region32: #{roberta_regression_forward.1} parent=0 // pred_region
    _
  $region33: #{roberta_regression_forward.1} parent=0 // pred_fallthru
    _
  // Predicated region
  $region34: #{roberta_regression_forward.1} parent=0 // pred_check
    _
  $region35: #{roberta_regression_forward.1} parent=0 // pred_check_branch
    %31 = sbr.rel (0) target = $region37
  $region36: #{roberta_regression_forward.1} parent=0 // pred_region
    _
  $region37: #{roberta_regression_forward.1} parent=0 // pred_fallthru
    _
  %v32 = vld [vmem:[%s8] sm:$0xff]
  %v33 = vld [vmem:[%s0] sm:$0xff]
  %v34 = vld [vmem:[%s0 + $0x8] sm:$0xff]
  %v35 = vld [vmem:[%s1] sm:$0xff]
  %v36 = vld [vmem:[%s1 + $0x8] sm:$0xff]
  %vm37 = vcmask 261120
  %v38 = vsel %vm37, %v33, 0.0
  %39 = vadd.xlane.f32.xlu0 %v38
  %v40 = vpop.xlane.xlu0 %39
  %v41 = vsel %vm37, %v34, 0.0
  %42 = vadd.xlane.f32.xlu0 %v41
  %v43 = vpop.xlane.xlu0 %42
  %v44 = vrcp.pop 32.0
  %v45 = vmul.f32 %v40, %v44
  %v46 = vmul.f32 %v43, %v44
  %v47 = vmul.f32 %v33, %v33
  %v48 = vmul.f32 %v34, %v34
  %v49 = vsel %vm37, %v47, 0.0
  %50 = vadd.xlane.f32.xlu0 %v49
  %v51 = vpop.xlane.xlu0 %50
  %v52 = vsel %vm37, %v48, 0.0
  %53 = vadd.xlane.f32.xlu0 %v52
  %v54 = vpop.xlane.xlu0 %53
  %v55 = vmul.f32 %v51, %v44
  %v56 = vmul.f32 %v54, %v44
  %v57 = vmul.f32 %v45, %v45
  %v58 = vmul.f32 %v46, %v46
  %v59 = vsub.f32 %v55, %v57
  %v60 = vsub.f32 %v56, %v58
  %v61 = vsub.f32 %v33, %v45
  %v62 = vsub.f32 %v34, %v46
  %v63 = vadd.f32 %v59, 1e-05
  %v64 = vadd.f32 %v60, 1e-05
  %v65 = vrsqrt.pop %v63
  %v66 = vrsqrt.pop %v64
  %v67 = vmul.f32 %v61, %v65
  %v68 = vmul.f32 %v62, %v66
  %v69 = vlaneseq
  %v70 = vshrl.u32 %v69, 7
  %v71 = vsub.s32 0, %v70
  %v72 = vrot.slane %v32, %v71
  %v73 = vmul.f32 %v67, %v72
  %v74 = vmul.f32 %v68, %v72
  %v75 = vlaneseq
  %v76 = vshrl.u32 %v75, 7
  %v77 = vsub.s32 1, %v76
  %v78 = vrot.slane %v32, %v77
  %v79 = vadd.f32 %v73, %v78
  %v80 = vadd.f32 %v74, %v78
  %v81 = vld [vmem:[%s7] sm:$0xff]
  %v82 = vld [vmem:[%s2] sm:$0xff]
  %v83 = vld [vmem:[%s2 + $0x8] sm:$0xff]
  %v84 = vld [vmem:[%s2 + $0x10] sm:$0xff]
  %v85 = vld [vmem:[%s2 + $0x18] sm:$0xff]
  %v86 = vld [vmem:[%s3] sm:$0x1]
  %v88 = vlaneseq
  %v89 = vshrl.u32 %v88, 7
  %v90 = vsub.s32 0, %v89
  %v91 = vrot.slane %v86, %v90
  %v94 = vsel %vm37, %v79, 0
  %v97 = vsel %vm37, %v80, 0
  %99 = vmatprep.subr.mxu0 0.0
  %100 = vmatpush1.msra.mxu0 %v82
  %101 = vmatprep.subr.mxu0 0.0
  %102 = vmatpush1.msra.mxu0 %v83
  %103 = vmatprep.subr.mxu0 0.0
  %104 = vmatpush1.msra.mxu0 %v84
  %105 = vmatprep.subr.mxu0 0.0
  %106 = vmatpush1.msra.mxu0 %v85
  %107 = vmatprep.subr.mxu0 0.0
  %108 = vmatpush1.msra.mxu0 0.0
  %109 = vmatprep.subr.mxu0 0.0
  %110 = vmatpush1.msra.mxu0 0.0
  %111 = vmatprep.subr.mxu0 0.0
  %112 = vmatpush1.msra.mxu0 0.0
  %113 = vmatprep.subr.mxu0 0.0
  %114 = vmatpush1.msra.mxu0 0.0
  %115 = vmatprep.subr.mxu0 0.0
  %116 = vmatpush1.msra.mxu0 0.0
  %117 = vmatprep.subr.mxu0 0.0
  %118 = vmatpush1.msra.mxu0 0.0
  %119 = vmatprep.subr.mxu0 0.0
  %120 = vmatpush1.msra.mxu0 0.0
  %121 = vmatprep.subr.mxu0 0.0
  %122 = vmatpush1.msra.mxu0 0.0
  %123 = vmatprep.subr.mxu0 0.0
  %124 = vmatpush1.msra.mxu0 0.0
  %125 = vmatprep.subr.mxu0 0.0
  %126 = vmatpush1.msra.mxu0 0.0
  %127 = vmatprep.subr.mxu0 0.0
  %128 = vmatpush1.msra.mxu0 0.0
  %129 = vmatprep.subr.mxu0 0.0
  %130 = vmatpush1.msra.mxu0 0.0
  %131 = vmatprep.subr.mxu0 0.0
  %132 = vmatpush1.msra.mxu0 0.0
  %133 = vmatprep.subr.mxu0 0.0
  %134 = vmatpush1.msra.mxu0 0.0
  %135 = vmatprep.subr.mxu0 0.0
  %136 = vmatpush1.msra.mxu0 0.0
  %137 = vmatprep.subr.mxu0 0.0
  %138 = vmatpush1.msra.mxu0 0.0
  %139 = vmatprep.subr.mxu0 0.0
  %140 = vmatpush1.msra.mxu0 0.0
  %141 = vmatprep.subr.mxu0 0.0
  %142 = vmatpush1.msra.mxu0 0.0
  %143 = vmatprep.subr.mxu0 0.0
  %144 = vmatpush1.msra.mxu0 0.0
  %145 = vmatprep.subr.mxu0 0.0
  %146 = vmatpush1.msra.mxu0 0.0
  %147 = vmatprep.subr.mxu0 0.0
  %148 = vmatpush1.msra.mxu0 0.0
  %149 = vmatprep.subr.mxu0 0.0
  %150 = vmatpush1.msra.mxu0 0.0
  %151 = vmatprep.subr.mxu0 0.0
  %152 = vmatpush1.msra.mxu0 0.0
  %153 = vmatprep.subr.mxu0 0.0
  %154 = vmatpush1.msra.mxu0 0.0
  %155 = vmatprep.subr.mxu0 0.0
  %156 = vmatpush1.msra.mxu0 0.0
  %157 = vmatprep.subr.mxu0 0.0
  %158 = vmatpush1.msra.mxu0 0.0
  %159 = vmatprep.subr.mxu0 0.0
  %160 = vmatpush1.msra.mxu0 0.0
  %161 = vmatprep.subr.mxu0 0.0
  %162 = vmatpush1.msra.mxu0 0.0
  %163 = vmatprep.mubr.f32.mxu0 0.0
  %164 = vmatmul.mubr.f32.gmra.mrb[0].mxu0 %v94
  %v165 = vpop.f32.mrb[0].mxu0
  %v166 = vadd.f32 %v91, %v165
  %v167 = vpop.f32.mrb[0].mxu0
  %168 = vmatprep.mubr.f32.mxu0 0.0
  %169 = vmatmul.mubr.f32.gmra.mrb[0].mxu0 %v97
  %v170 = vpop.f32.mrb[0].mxu0
  %v171 = vadd.f32 %v91, %v170
  %v172 = vpop.f32.mrb[0].mxu0
  %173 = vdwg.mxu0
  %s174 = scalar_lea.vmem %s2, 32
  %v175 = vld [vmem:[%s174] sm:$0xff]
  %v176 = vld [vmem:[%s174 + $0x8] sm:$0xff]
  %v177 = vld [vmem:[%s174 + $0x10] sm:$0xff]
  %v178 = vld [vmem:[%s174 + $0x18] sm:$0xff]
  %s179 = scalar_lea.vmem %s3, 1
  %v180 = vld [vmem:[%s179] sm:$0x1]
  %v182 = vlaneseq
  %v183 = vshrl.u32 %v182, 7
  %v184 = vsub.s32 0, %v183
  %v185 = vrot.slane %v180, %v184
  %187 = vmatprep.subr.mxu0 0.0
  %188 = vmatpush1.msra.mxu0 %v175
  %189 = vmatprep.subr.mxu0 0.0
  %190 = vmatpush1.msra.mxu0 %v176
  %191 = vmatprep.subr.mxu0 0.0
  %192 = vmatpush1.msra.mxu0 %v177
  %193 = vmatprep.subr.mxu0 0.0
  %194 = vmatpush1.msra.mxu0 %v178
  %195 = vmatprep.subr.mxu0 0.0
  %196 = vmatpush1.msra.mxu0 0.0
  %197 = vmatprep.subr.mxu0 0.0
  %198 = vmatpush1.msra.mxu0 0.0
  %199 = vmatprep.subr.mxu0 0.0
  %200 = vmatpush1.msra.mxu0 0.0
  %201 = vmatprep.subr.mxu0 0.0
  %202 = vmatpush1.msra.mxu0 0.0
  %203 = vmatprep.subr.mxu0 0.0
  %204 = vmatpush1.msra.mxu0 0.0
  %205 = vmatprep.subr.mxu0 0.0
  %206 = vmatpush1.msra.mxu0 0.0
  %207 = vmatprep.subr.mxu0 0.0
  %208 = vmatpush1.msra.mxu0 0.0
  %209 = vmatprep.subr.mxu0 0.0
  %210 = vmatpush1.msra.mxu0 0.0
  %211 = vmatprep.subr.mxu0 0.0
  %212 = vmatpush1.msra.mxu0 0.0
  %213 = vmatprep.subr.mxu0 0.0
  %214 = vmatpush1.msra.mxu0 0.0
  %215 = vmatprep.subr.mxu0 0.0
  %216 = vmatpush1.msra.mxu0 0.0
  %217 = vmatprep.subr.mxu0 0.0
  %218 = vmatpush1.msra.mxu0 0.0
  %219 = vmatprep.subr.mxu0 0.0
  %220 = vmatpush1.msra.mxu0 0.0
  %221 = vmatprep.subr.mxu0 0.0
  %222 = vmatpush1.msra.mxu0 0.0
  %223 = vmatprep.subr.mxu0 0.0
  %224 = vmatpush1.msra.mxu0 0.0
  %225 = vmatprep.subr.mxu0 0.0
  %226 = vmatpush1.msra.mxu0 0.0
  %227 = vmatprep.subr.mxu0 0.0
  %228 = vmatpush1.msra.mxu0 0.0
  %229 = vmatprep.subr.mxu0 0.0
  %230 = vmatpush1.msra.mxu0 0.0
  %231 = vmatprep.subr.mxu0 0.0
  %232 = vmatpush1.msra.mxu0 0.0
  %233 = vmatprep.subr.mxu0 0.0
  %234 = vmatpush1.msra.mxu0 0.0
  %235 = vmatprep.subr.mxu0 0.0
  %236 = vmatpush1.msra.mxu0 0.0
  %237 = vmatprep.subr.mxu0 0.0
  %238 = vmatpush1.msra.mxu0 0.0
  %239 = vmatprep.subr.mxu0 0.0
  %240 = vmatpush1.msra.mxu0 0.0
  %241 = vmatprep.subr.mxu0 0.0
  %242 = vmatpush1.msra.mxu0 0.0
  %243 = vmatprep.subr.mxu0 0.0
  %244 = vmatpush1.msra.mxu0 0.0
  %245 = vmatprep.subr.mxu0 0.0
  %246 = vmatpush1.msra.mxu0 0.0
  %247 = vmatprep.subr.mxu0 0.0
  %248 = vmatpush1.msra.mxu0 0.0
  %249 = vmatprep.subr.mxu0 0.0
  %250 = vmatpush1.msra.mxu0 0.0
  %251 = vmatprep.mubr.f32.mxu0 0.0
  %252 = vmatmul.mubr.f32.gmra.mrb[0].mxu0 %v94
  %v253 = vpop.f32.mrb[0].mxu0
  %v254 = vadd.f32 %v185, %v253
  %v255 = vpop.f32.mrb[0].mxu0
  %256 = vmatprep.mubr.f32.mxu0 0.0
  %257 = vmatmul.mubr.f32.gmra.mrb[0].mxu0 %v97
  %v258 = vpop.f32.mrb[0].mxu0
  %v259 = vadd.f32 %v185, %v258
  %v260 = vpop.f32.mrb[0].mxu0
  %261 = vdwg.mxu0
  %s262 = scalar_lea.vmem %s2, 64
  %v263 = vld [vmem:[%s262] sm:$0xff]
  %v264 = vld [vmem:[%s262 + $0x8] sm:$0xff]
  %v265 = vld [vmem:[%s262 + $0x10] sm:$0xff]
  %v266 = vld [vmem:[%s262 + $0x18] sm:$0xff]
  %s267 = scalar_lea.vmem %s3, 2
  %v268 = vld [vmem:[%s267] sm:$0x1]
  %v270 = vlaneseq
  %v271 = vshrl.u32 %v270, 7
  %v272 = vsub.s32 0, %v271
  %v273 = vrot.slane %v268, %v272
  %275 = vmatprep.subr.mxu0 0.0
  %276 = vmatpush1.msra.mxu0 %v263
  %277 = vmatprep.subr.mxu0 0.0
  %278 = vmatpush1.msra.mxu0 %v264
  %279 = vmatprep.subr.mxu0 0.0
  %280 = vmatpush1.msra.mxu0 %v265
  %281 = vmatprep.subr.mxu0 0.0
  %282 = vmatpush1.msra.mxu0 %v266
  %283 = vmatprep.subr.mxu0 0.0
  %284 = vmatpush1.msra.mxu0 0.0
  %285 = vmatprep.subr.mxu0 0.0
  %286 = vmatpush1.msra.mxu0 0.0
  %287 = vmatprep.subr.mxu0 0.0
  %288 = vmatpush1.msra.mxu0 0.0
  %289 = vmatprep.subr.mxu0 0.0
  %290 = vmatpush1.msra.mxu0 0.0
  %291 = vmatprep.subr.mxu0 0.0
  %292 = vmatpush1.msra.mxu0 0.0
  %293 = vmatprep.subr.mxu0 0.0
  %294 = vmatpush1.msra.mxu0 0.0
  %295 = vmatprep.subr.mxu0 0.0
  %296 = vmatpush1.msra.mxu0 0.0
  %297 = vmatprep.subr.mxu0 0.0
  %298 = vmatpush1.msra.mxu0 0.0
  %299 = vmatprep.subr.mxu0 0.0
  %300 = vmatpush1.msra.mxu0 0.0
  %301 = vmatprep.subr.mxu0 0.0
  %302 = vmatpush1.msra.mxu0 0.0
  %303 = vmatprep.subr.mxu0 0.0
  %304 = vmatpush1.msra.mxu0 0.0
  %305 = vmatprep.subr.mxu0 0.0
  %306 = vmatpush1.msra.mxu0 0.0
  %307 = vmatprep.subr.mxu0 0.0
  %308 = vmatpush1.msra.mxu0 0.0
  %309 = vmatprep.subr.mxu0 0.0
  %310 = vmatpush1.msra.mxu0 0.0
  %311 = vmatprep.subr.mxu0 0.0
  %312 = vmatpush1.msra.mxu0 0.0
  %313 = vmatprep.subr.mxu0 0.0
  %314 = vmatpush1.msra.mxu0 0.0
  %315 = vmatprep.subr.mxu0 0.0
  %316 = vmatpush1.msra.mxu0 0.0
  %317 = vmatprep.subr.mxu0 0.0
  %318 = vmatpush1.msra.mxu0 0.0
  %319 = vmatprep.subr.mxu0 0.0
  %320 = vmatpush1.msra.mxu0 0.0
  %321 = vmatprep.subr.mxu0 0.0
  %322 = vmatpush1.msra.mxu0 0.0
  %323 = vmatprep.subr.mxu0 0.0
  %324 = vmatpush1.msra.mxu0 0.0
  %325 = vmatprep.subr.mxu0 0.0
  %326 = vmatpush1.msra.mxu0 0.0
  %327 = vmatprep.subr.mxu0 0.0
  %328 = vmatpush1.msra.mxu0 0.0
  %329 = vmatprep.subr.mxu0 0.0
  %330 = vmatpush1.msra.mxu0 0.0
  %331 = vmatprep.subr.mxu0 0.0
  %332 = vmatpush1.msra.mxu0 0.0
  %333 = vmatprep.subr.mxu0 0.0
  %334 = vmatpush1.msra.mxu0 0.0
  %335 = vmatprep.subr.mxu0 0.0
  %336 = vmatpush1.msra.mxu0 0.0
  %337 = vmatprep.subr.mxu0 0.0
  %338 = vmatpush1.msra.mxu0 0.0
  %339 = vmatprep.mubr.f32.mxu0 0.0
  %340 = vmatmul.mubr.f32.gmra.mrb[0].mxu0 %v94
  %v341 = vpop.f32.mrb[0].mxu0
  %v342 = vadd.f32 %v273, %v341
  %v343 = vpop.f32.mrb[0].mxu0
  %344 = vmatprep.mubr.f32.mxu0 0.0
  %345 = vmatmul.mubr.f32.gmra.mrb[0].mxu0 %v97
  %v346 = vpop.f32.mrb[0].mxu0
  %v347 = vadd.f32 %v273, %v346
  %v348 = vpop.f32.mrb[0].mxu0
  %349 = vdwg.mxu0
  %vm350 = vcmask 64512
  %v352 = vsel %vm350, %v166, 0
  %v355 = vsel %vm350, %v171, 0
  %v358 = vsel %vm350, %v254, 0
  %v361 = vsel %vm350, %v259, 0
  %363 = vmatprep.subr.mxu0 0.0
  %364 = vmatpush1.xpose.msra.mxu0 %v358
  %365 = vmatprep.subr.mxu0 0.0
  %366 = vmatpush1.xpose.msra.mxu0 %v361
  %367 = vmatprep.subr.mxu0 0.0
  %368 = vmatpush1.xpose.msra.mxu0 0.0
  %369 = vmatprep.subr.mxu0 0.0
  %370 = vmatpush1.xpose.msra.mxu0 0.0
  %371 = vmatprep.subr.mxu0 0.0
  %372 = vmatpush1.xpose.msra.mxu0 0.0
  %373 = vmatprep.subr.mxu0 0.0
  %374 = vmatpush1.xpose.msra.mxu0 0.0
  %375 = vmatprep.subr.mxu0 0.0
  %376 = vmatpush1.xpose.msra.mxu0 0.0
  %377 = vmatprep.subr.mxu0 0.0
  %378 = vmatpush1.xpose.msra.mxu0 0.0
  %379 = vmatprep.subr.mxu0 0.0
  %380 = vmatpush1.xpose.msra.mxu0 0.0
  %381 = vmatprep.subr.mxu0 0.0
  %382 = vmatpush1.xpose.msra.mxu0 0.0
  %383 = vmatprep.subr.mxu0 0.0
  %384 = vmatpush1.xpose.msra.mxu0 0.0
  %385 = vmatprep.subr.mxu0 0.0
  %386 = vmatpush1.xpose.msra.mxu0 0.0
  %387 = vmatprep.subr.mxu0 0.0
  %388 = vmatpush1.xpose.msra.mxu0 0.0
  %389 = vmatprep.subr.mxu0 0.0
  %390 = vmatpush1.xpose.msra.mxu0 0.0
  %391 = vmatprep.subr.mxu0 0.0
  %392 = vmatpush1.xpose.msra.mxu0 0.0
  %393 = vmatprep.subr.mxu0 0.0
  %394 = vmatpush1.xpose.msra.mxu0 0.0
  %395 = vmatprep.subr.mxu0 0.0
  %396 = vmatpush1.xpose.msra.mxu0 0.0
  %397 = vmatprep.subr.mxu0 0.0
  %398 = vmatpush1.xpose.msra.mxu0 0.0
  %399 = vmatprep.subr.mxu0 0.0
  %400 = vmatpush1.xpose.msra.mxu0 0.0
  %401 = vmatprep.subr.mxu0 0.0
  %402 = vmatpush1.xpose.msra.mxu0 0.0
  %403 = vmatprep.subr.mxu0 0.0
  %404 = vmatpush1.xpose.msra.mxu0 0.0
  %405 = vmatprep.subr.mxu0 0.0
  %406 = vmatpush1.xpose.msra.mxu0 0.0
  %407 = vmatprep.subr.mxu0 0.0
  %408 = vmatpush1.xpose.msra.mxu0 0.0
  %409 = vmatprep.subr.mxu0 0.0
  %410 = vmatpush1.xpose.msra.mxu0 0.0
  %411 = vmatprep.subr.mxu0 0.0
  %412 = vmatpush1.xpose.msra.mxu0 0.0
  %413 = vmatprep.subr.mxu0 0.0
  %414 = vmatpush1.xpose.msra.mxu0 0.0
  %415 = vmatprep.subr.mxu0 0.0
  %416 = vmatpush1.xpose.msra.mxu0 0.0
  %417 = vmatprep.subr.mxu0 0.0
  %418 = vmatpush1.xpose.msra.mxu0 0.0
  %419 = vmatprep.subr.mxu0 0.0
  %420 = vmatpush1.xpose.msra.mxu0 0.0
  %421 = vmatprep.subr.mxu0 0.0
  %422 = vmatpush1.xpose.msra.mxu0 0.0
  %423 = vmatprep.subr.mxu0 0.0
  %424 = vmatpush1.xpose.msra.mxu0 0.0
  %425 = vmatprep.subr.mxu0 0.0
  %426 = vmatpush1.xpose.msra.mxu0 0.0
  %427 = vmatprep.mubr.f32.mxu0 0.0
  %428 = vmatmul.mubr.f32.gmra.mrb[0].mxu0 %v352
  %v429 = vpop.f32.mrb[0].mxu0
  %v430 = vadd.f32 0.0, %v429
  %v431 = vpop.f32.mrb[0].mxu0
  %432 = vmatprep.mubr.f32.mxu0 0.0
  %433 = vmatmul.mubr.f32.gmra.mrb[0].mxu0 %v355
  %v434 = vpop.f32.mrb[0].mxu0
  %v435 = vadd.f32 0.0, %v434
  %v436 = vpop.f32.mrb[0].mxu0
  %437 = vdwg.mxu0
  %v438 = vmul.f32 %v430, 0.35355338
  %v439 = vmul.f32 %v435, 0.35355338
  %v440 = vadd.f32 %v438, %v35
  %v441 = vadd.f32 %v439, %v36
  %vm442 = vcmask 130048
  %v443 = vsel %vm442, %v440, -inf
  %444 = vmax.xlane.f32.xlu0 %v443
  %v445 = vpop.xlane.xlu0 %444
  %v446 = vsel %vm442, %v441, -inf
  %447 = vmax.xlane.f32.xlu0 %v446
  %v448 = vpop.xlane.xlu0 %447
  %v449 = vsub.f32 %v440, %v445
  %v450 = vsub.f32 %v441, %v448
  %v451 = vmul.f32 %v449, 1.442695
  %v452 = vpow.pop %v451
  %v453 = vmul.f32 %v450, 1.442695
  %v454 = vpow.pop %v453
  %v455 = vsel %vm442, %v452, 0.0
  %456 = vadd.xlane.f32.xlu0 %v455
  %v457 = vpop.xlane.xlu0 %456
  %v458 = vsel %vm442, %v454, 0.0
  %459 = vadd.xlane.f32.xlu0 %v458
  %v460 = vpop.xlane.xlu0 %459
  %v461 = vrcp.pop %v457
  %v462 = vrcp.pop %v460
  %v463 = vmul.f32 %v452, %v461
  %v464 = vmul.f32 %v454, %v462
  %v466 = vsel %vm442, %v463, 0
  %v469 = vsel %vm442, %v464, 0
  %471 = vmatprep.subr.mxu0 0.0
  %472 = vmatpush1.msra.mxu0 %v342
  %473 = vmatprep.subr.mxu0 0.0
  %474 = vmatpush1.msra.mxu0 %v347
  %475 = vmatprep.subr.mxu0 0.0
  %476 = vmatpush1.msra.mxu0 0.0
  %477 = vmatprep.subr.mxu0 0.0
  %478 = vmatpush1.msra.mxu0 0.0
  %479 = vmatprep.subr.mxu0 0.0
  %480 = vmatpush1.msra.mxu0 0.0
  %481 = vmatprep.subr.mxu0 0.0
  %482 = vmatpush1.msra.mxu0 0.0
  %483 = vmatprep.subr.mxu0 0.0
  %484 = vmatpush1.msra.mxu0 0.0
  %485 = vmatprep.subr.mxu0 0.0
  %486 = vmatpush1.msra.mxu0 0.0
  %487 = vmatprep.subr.mxu0 0.0
  %488 = vmatpush1.msra.mxu0 0.0
  %489 = vmatprep.subr.mxu0 0.0
  %490 = vmatpush1.msra.mxu0 0.0
  %491 = vmatprep.subr.mxu0 0.0
  %492 = vmatpush1.msra.mxu0 0.0
  %493 = vmatprep.subr.mxu0 0.0
  %494 = vmatpush1.msra.mxu0 0.0
  %495 = vmatprep.subr.mxu0 0.0
  %496 = vmatpush1.msra.mxu0 0.0
  %497 = vmatprep.subr.mxu0 0.0
  %498 = vmatpush1.msra.mxu0 0.0
  %499 = vmatprep.subr.mxu0 0.0
  %500 = vmatpush1.msra.mxu0 0.0
  %501 = vmatprep.subr.mxu0 0.0
  %502 = vmatpush1.msra.mxu0 0.0
  %503 = vmatprep.subr.mxu0 0.0
  %504 = vmatpush1.msra.mxu0 0.0
  %505 = vmatprep.subr.mxu0 0.0
  %506 = vmatpush1.msra.mxu0 0.0
  %507 = vmatprep.subr.mxu0 0.0
  %508 = vmatpush1.msra.mxu0 0.0
  %509 = vmatprep.subr.mxu0 0.0
  %510 = vmatpush1.msra.mxu0 0.0
  %511 = vmatprep.subr.mxu0 0.0
  %512 = vmatpush1.msra.mxu0 0.0
  %513 = vmatprep.subr.mxu0 0.0
  %514 = vmatpush1.msra.mxu0 0.0
  %515 = vmatprep.subr.mxu0 0.0
  %516 = vmatpush1.msra.mxu0 0.0
  %517 = vmatprep.subr.mxu0 0.0
  %518 = vmatpush1.msra.mxu0 0.0
  %519 = vmatprep.subr.mxu0 0.0
  %520 = vmatpush1.msra.mxu0 0.0
  %521 = vmatprep.subr.mxu0 0.0
  %522 = vmatpush1.msra.mxu0 0.0
  %523 = vmatprep.subr.mxu0 0.0
  %524 = vmatpush1.msra.mxu0 0.0
  %525 = vmatprep.subr.mxu0 0.0
  %526 = vmatpush1.msra.mxu0 0.0
  %527 = vmatprep.subr.mxu0 0.0
  %528 = vmatpush1.msra.mxu0 0.0
  %529 = vmatprep.subr.mxu0 0.0
  %530 = vmatpush1.msra.mxu0 0.0
  %531 = vmatprep.subr.mxu0 0.0
  %532 = vmatpush1.msra.mxu0 0.0
  %533 = vmatprep.subr.mxu0 0.0
  %534 = vmatpush1.msra.mxu0 0.0
  %535 = vmatprep.mubr.f32.mxu0 0.0
  %536 = vmatmul.mubr.f32.gmra.mrb[0].mxu0 %v466
  %v537 = vpop.f32.mrb[0].mxu0
  %v538 = vadd.f32 0.0, %v537
  %v539 = vpop.f32.mrb[0].mxu0
  %540 = vmatprep.mubr.f32.mxu0 0.0
  %541 = vmatmul.mubr.f32.gmra.mrb[0].mxu0 %v469
  %v542 = vpop.f32.mrb[0].mxu0
  %v543 = vadd.f32 0.0, %v542
  %v544 = vpop.f32.mrb[0].mxu0
  %545 = vdwg.mxu0
  %v546 = vld [vmem:[%s4] sm:$0xff]
  %s547 = scalar_lea.vmem %s2, 96
  %v548 = vld [vmem:[%s547] sm:$0xff]
  %v549 = vld [vmem:[%s547 + $0x8] sm:$0xff]
  %v550 = vld [vmem:[%s547 + $0x10] sm:$0xff]
  %v551 = vld [vmem:[%s547 + $0x18] sm:$0xff]
  %s552 = scalar_lea.vmem %s3, 3
  %v553 = vld [vmem:[%s552] sm:$0x1]
  %v555 = vlaneseq
  %v556 = vshrl.u32 %v555, 7
  %v557 = vsub.s32 0, %v556
  %v558 = vrot.slane %v553, %v557
  %560 = vmatprep.subr.mxu0 0.0
  %561 = vmatpush1.msra.mxu0 %v548
  %562 = vmatprep.subr.mxu0 0.0
  %563 = vmatpush1.msra.mxu0 %v549
  %564 = vmatprep.subr.mxu0 0.0
  %565 = vmatpush1.msra.mxu0 %v550
  %566 = vmatprep.subr.mxu0 0.0
  %567 = vmatpush1.msra.mxu0 %v551
  %568 = vmatprep.subr.mxu0 0.0
  %569 = vmatpush1.msra.mxu0 0.0
  %570 = vmatprep.subr.mxu0 0.0
  %571 = vmatpush1.msra.mxu0 0.0
  %572 = vmatprep.subr.mxu0 0.0
  %573 = vmatpush1.msra.mxu0 0.0
  %574 = vmatprep.subr.mxu0 0.0
  %575 = vmatpush1.msra.mxu0 0.0
  %576 = vmatprep.subr.mxu0 0.0
  %577 = vmatpush1.msra.mxu0 0.0
  %578 = vmatprep.subr.mxu0 0.0
  %579 = vmatpush1.msra.mxu0 0.0
  %580 = vmatprep.subr.mxu0 0.0
  %581 = vmatpush1.msra.mxu0 0.0
  %582 = vmatprep.subr.mxu0 0.0
  %583 = vmatpush1.msra.mxu0 0.0
  %584 = vmatprep.subr.mxu0 0.0
  %585 = vmatpush1.msra.mxu0 0.0
  %586 = vmatprep.subr.mxu0 0.0
  %587 = vmatpush1.msra.mxu0 0.0
  %588 = vmatprep.subr.mxu0 0.0
  %589 = vmatpush1.msra.mxu0 0.0
  %590 = vmatprep.subr.mxu0 0.0
  %591 = vmatpush1.msra.mxu0 0.0
  %592 = vmatprep.subr.mxu0 0.0
  %593 = vmatpush1.msra.mxu0 0.0
  %594 = vmatprep.subr.mxu0 0.0
  %595 = vmatpush1.msra.mxu0 0.0
  %596 = vmatprep.subr.mxu0 0.0
  %597 = vmatpush1.msra.mxu0 0.0
  %598 = vmatprep.subr.mxu0 0.0
  %599 = vmatpush1.msra.mxu0 0.0
  %600 = vmatprep.subr.mxu0 0.0
  %601 = vmatpush1.msra.mxu0 0.0
  %602 = vmatprep.subr.mxu0 0.0
  %603 = vmatpush1.msra.mxu0 0.0
  %604 = vmatprep.subr.mxu0 0.0
  %605 = vmatpush1.msra.mxu0 0.0
  %606 = vmatprep.subr.mxu0 0.0
  %607 = vmatpush1.msra.mxu0 0.0
  %608 = vmatprep.subr.mxu0 0.0
  %609 = vmatpush1.msra.mxu0 0.0
  %610 = vmatprep.subr.mxu0 0.0
  %611 = vmatpush1.msra.mxu0 0.0
  %612 = vmatprep.subr.mxu0 0.0
  %613 = vmatpush1.msra.mxu0 0.0
  %614 = vmatprep.subr.mxu0 0.0
  %615 = vmatpush1.msra.mxu0 0.0
  %616 = vmatprep.subr.mxu0 0.0
  %617 = vmatpush1.msra.mxu0 0.0
  %618 = vmatprep.subr.mxu0 0.0
  %619 = vmatpush1.msra.mxu0 0.0
  %620 = vmatprep.subr.mxu0 0.0
  %621 = vmatpush1.msra.mxu0 0.0
  %622 = vmatprep.subr.mxu0 0.0
  %623 = vmatpush1.msra.mxu0 0.0
  %624 = vmatprep.mubr.f32.mxu0 0.0
  %625 = vmatmul.mubr.f32.gmra.mrb[0].mxu0 %v94
  %v626 = vpop.f32.mrb[0].mxu0
  %v627 = vadd.f32 %v558, %v626
  %v628 = vpop.f32.mrb[0].mxu0
  %629 = vmatprep.mubr.f32.mxu0 0.0
  %630 = vmatmul.mubr.f32.gmra.mrb[0].mxu0 %v97
  %v631 = vpop.f32.mrb[0].mxu0
  %v632 = vadd.f32 %v558, %v631
  %v633 = vpop.f32.mrb[0].mxu0
  %634 = vdwg.mxu0
  %s635 = scalar_lea.vmem %s2, 128
  %v636 = vld [vmem:[%s635] sm:$0xff]
  %v637 = vld [vmem:[%s635 + $0x8] sm:$0xff]
  %v638 = vld [vmem:[%s635 + $0x10] sm:$0xff]
  %v639 = vld [vmem:[%s635 + $0x18] sm:$0xff]
  %s640 = scalar_lea.vmem %s3, 4
  %v641 = vld [vmem:[%s640] sm:$0x1]
  %v643 = vlaneseq
  %v644 = vshrl.u32 %v643, 7
  %v645 = vsub.s32 0, %v644
  %v646 = vrot.slane %v641, %v645
  %648 = vmatprep.subr.mxu0 0.0
  %649 = vmatpush1.msra.mxu0 %v636
  %650 = vmatprep.subr.mxu0 0.0
  %651 = vmatpush1.msra.mxu0 %v637
  %652 = vmatprep.subr.mxu0 0.0
  %653 = vmatpush1.msra.mxu0 %v638
  %654 = vmatprep.subr.mxu0 0.0
  %655 = vmatpush1.msra.mxu0 %v639
  %656 = vmatprep.subr.mxu0 0.0
  %657 = vmatpush1.msra.mxu0 0.0
  %658 = vmatprep.subr.mxu0 0.0
  %659 = vmatpush1.msra.mxu0 0.0
  %660 = vmatprep.subr.mxu0 0.0
  %661 = vmatpush1.msra.mxu0 0.0
  %662 = vmatprep.subr.mxu0 0.0
  %663 = vmatpush1.msra.mxu0 0.0
  %664 = vmatprep.subr.mxu0 0.0
  %665 = vmatpush1.msra.mxu0 0.0
  %666 = vmatprep.subr.mxu0 0.0
  %667 = vmatpush1.msra.mxu0 0.0
  %668 = vmatprep.subr.mxu0 0.0
  %669 = vmatpush1.msra.mxu0 0.0
  %670 = vmatprep.subr.mxu0 0.0
  %671 = vmatpush1.msra.mxu0 0.0
  %672 = vmatprep.subr.mxu0 0.0
  %673 = vmatpush1.msra.mxu0 0.0
  %674 = vmatprep.subr.mxu0 0.0
  %675 = vmatpush1.msra.mxu0 0.0
  %676 = vmatprep.subr.mxu0 0.0
  %677 = vmatpush1.msra.mxu0 0.0
  %678 = vmatprep.subr.mxu0 0.0
  %679 = vmatpush1.msra.mxu0 0.0
  %680 = vmatprep.subr.mxu0 0.0
  %681 = vmatpush1.msra.mxu0 0.0
  %682 = vmatprep.subr.mxu0 0.0
  %683 = vmatpush1.msra.mxu0 0.0
  %684 = vmatprep.subr.mxu0 0.0
  %685 = vmatpush1.msra.mxu0 0.0
  %686 = vmatprep.subr.mxu0 0.0
  %687 = vmatpush1.msra.mxu0 0.0
  %688 = vmatprep.subr.mxu0 0.0
  %689 = vmatpush1.msra.mxu0 0.0
  %690 = vmatprep.subr.mxu0 0.0
  %691 = vmatpush1.msra.mxu0 0.0
  %692 = vmatprep.subr.mxu0 0.0
  %693 = vmatpush1.msra.mxu0 0.0
  %694 = vmatprep.subr.mxu0 0.0
  %695 = vmatpush1.msra.mxu0 0.0
  %696 = vmatprep.subr.mxu0 0.0
  %697 = vmatpush1.msra.mxu0 0.0
  %698 = vmatprep.subr.mxu0 0.0
  %699 = vmatpush1.msra.mxu0 0.0
  %700 = vmatprep.subr.mxu0 0.0
  %701 = vmatpush1.msra.mxu0 0.0
  %702 = vmatprep.subr.mxu0 0.0
  %703 = vmatpush1.msra.mxu0 0.0
  %704 = vmatprep.subr.mxu0 0.0
  %705 = vmatpush1.msra.mxu0 0.0
  %706 = vmatprep.subr.mxu0 0.0
  %707 = vmatpush1.msra.mxu0 0.0
  %708 = vmatprep.subr.mxu0 0.0
  %709 = vmatpush1.msra.mxu0 0.0
  %710 = vmatprep.subr.mxu0 0.0
  %711 = vmatpush1.msra.mxu0 0.0
  %712 = vmatprep.mubr.f32.mxu0 0.0
  %713 = vmatmul.mubr.f32.gmra.mrb[0].mxu0 %v94
  %v714 = vpop.f32.mrb[0].mxu0
  %v715 = vadd.f32 %v646, %v714
  %v716 = vpop.f32.mrb[0].mxu0
  %717 = vmatprep.mubr.f32.mxu0 0.0
  %718 = vmatmul.mubr.f32.gmra.mrb[0].mxu0 %v97
  %v719 = vpop.f32.mrb[0].mxu0
  %v720 = vadd.f32 %v646, %v719
  %v721 = vpop.f32.mrb[0].mxu0
  %722 = vdwg.mxu0
  %s723 = scalar_lea.vmem %s2, 160
  %v724 = vld [vmem:[%s723] sm:$0xff]
  %v725 = vld [vmem:[%s723 + $0x8] sm:$0xff]
  %v726 = vld [vmem:[%s723 + $0x10] sm:$0xff]
  %v727 = vld [vmem:[%s723 + $0x18] sm:$0xff]
  %s728 = scalar_lea.vmem %s3, 5
  %v729 = vld [vmem:[%s728] sm:$0x1]
  %v731 = vlaneseq
  %v732 = vshrl.u32 %v731, 7
  %v733 = vsub.s32 0, %v732
  %v734 = vrot.slane %v729, %v733
  %736 = vmatprep.subr.mxu0 0.0
  %737 = vmatpush1.msra.mxu0 %v724
  %738 = vmatprep.subr.mxu0 0.0
  %739 = vmatpush1.msra.mxu0 %v725
  %740 = vmatprep.subr.mxu0 0.0
  %741 = vmatpush1.msra.mxu0 %v726
  %742 = vmatprep.subr.mxu0 0.0
  %743 = vmatpush1.msra.mxu0 %v727
  %744 = vmatprep.subr.mxu0 0.0
  %745 = vmatpush1.msra.mxu0 0.0
  %746 = vmatprep.subr.mxu0 0.0
  %747 = vmatpush1.msra.mxu0 0.0
  %748 = vmatprep.subr.mxu0 0.0
  %749 = vmatpush1.msra.mxu0 0.0
  %750 = vmatprep.subr.mxu0 0.0
  %751 = vmatpush1.msra.mxu0 0.0
  %752 = vmatprep.subr.mxu0 0.0
  %753 = vmatpush1.msra.mxu0 0.0
  %754 = vmatprep.subr.mxu0 0.0
  %755 = vmatpush1.msra.mxu0 0.0
  %756 = vmatprep.subr.mxu0 0.0
  %757 = vmatpush1.msra.mxu0 0.0
  %758 = vmatprep.subr.mxu0 0.0
  %759 = vmatpush1.msra.mxu0 0.0
  %760 = vmatprep.subr.mxu0 0.0
  %761 = vmatpush1.msra.mxu0 0.0
  %762 = vmatprep.subr.mxu0 0.0
  %763 = vmatpush1.msra.mxu0 0.0
  %764 = vmatprep.subr.mxu0 0.0
  %765 = vmatpush1.msra.mxu0 0.0
  %766 = vmatprep.subr.mxu0 0.0
  %767 = vmatpush1.msra.mxu0 0.0
  %768 = vmatprep.subr.mxu0 0.0
  %769 = vmatpush1.msra.mxu0 0.0
  %770 = vmatprep.subr.mxu0 0.0
  %771 = vmatpush1.msra.mxu0 0.0
  %772 = vmatprep.subr.mxu0 0.0
  %773 = vmatpush1.msra.mxu0 0.0
  %774 = vmatprep.subr.mxu0 0.0
  %775 = vmatpush1.msra.mxu0 0.0
  %776 = vmatprep.subr.mxu0 0.0
  %777 = vmatpush1.msra.mxu0 0.0
  %778 = vmatprep.subr.mxu0 0.0
  %779 = vmatpush1.msra.mxu0 0.0
  %780 = vmatprep.subr.mxu0 0.0
  %781 = vmatpush1.msra.mxu0 0.0
  %782 = vmatprep.subr.mxu0 0.0
  %783 = vmatpush1.msra.mxu0 0.0
  %784 = vmatprep.subr.mxu0 0.0
  %785 = vmatpush1.msra.mxu0 0.0
  %786 = vmatprep.subr.mxu0 0.0
  %787 = vmatpush1.msra.mxu0 0.0
  %788 = vmatprep.subr.mxu0 0.0
  %789 = vmatpush1.msra.mxu0 0.0
  %790 = vmatprep.subr.mxu0 0.0
  %791 = vmatpush1.msra.mxu0 0.0
  %792 = vmatprep.subr.mxu0 0.0
  %793 = vmatpush1.msra.mxu0 0.0
  %794 = vmatprep.subr.mxu0 0.0
  %795 = vmatpush1.msra.mxu0 0.0
  %796 = vmatprep.subr.mxu0 0.0
  %797 = vmatpush1.msra.mxu0 0.0
  %798 = vmatprep.subr.mxu0 0.0
  %799 = vmatpush1.msra.mxu0 0.0
  %800 = vmatprep.mubr.f32.mxu0 0.0
  %801 = vmatmul.mubr.f32.gmra.mrb[0].mxu0 %v94
  %v802 = vpop.f32.mrb[0].mxu0
  %v803 = vadd.f32 %v734, %v802
  %v804 = vpop.f32.mrb[0].mxu0
  %805 = vmatprep.mubr.f32.mxu0 0.0
  %806 = vmatmul.mubr.f32.gmra.mrb[0].mxu0 %v97
  %v807 = vpop.f32.mrb[0].mxu0
  %v808 = vadd.f32 %v734, %v807
  %v809 = vpop.f32.mrb[0].mxu0
  %810 = vdwg.mxu0
  %v812 = vsel %vm350, %v627, 0
  %v815 = vsel %vm350, %v632, 0
  %v818 = vsel %vm350, %v715, 0
  %v821 = vsel %vm350, %v720, 0
  %823 = vmatprep.subr.mxu0 0.0
  %824 = vmatpush1.xpose.msra.mxu0 %v818
  %825 = vmatprep.subr.mxu0 0.0
  %826 = vmatpush1.xpose.msra.mxu0 %v821
  %827 = vmatprep.subr.mxu0 0.0
  %828 = vmatpush1.xpose.msra.mxu0 0.0
  %829 = vmatprep.subr.mxu0 0.0
  %830 = vmatpush1.xpose.msra.mxu0 0.0
  %831 = vmatprep.subr.mxu0 0.0
  %832 = vmatpush1.xpose.msra.mxu0 0.0
  %833 = vmatprep.subr.mxu0 0.0
  %834 = vmatpush1.xpose.msra.mxu0 0.0
  %835 = vmatprep.subr.mxu0 0.0
  %836 = vmatpush1.xpose.msra.mxu0 0.0
  %837 = vmatprep.subr.mxu0 0.0
  %838 = vmatpush1.xpose.msra.mxu0 0.0
  %839 = vmatprep.subr.mxu0 0.0
  %840 = vmatpush1.xpose.msra.mxu0 0.0
  %841 = vmatprep.subr.mxu0 0.0
  %842 = vmatpush1.xpose.msra.mxu0 0.0
  %843 = vmatprep.subr.mxu0 0.0
  %844 = vmatpush1.xpose.msra.mxu0 0.0
  %845 = vmatprep.subr.mxu0 0.0
  %846 = vmatpush1.xpose.msra.mxu0 0.0
  %847 = vmatprep.subr.mxu0 0.0
  %848 = vmatpush1.xpose.msra.mxu0 0.0
  %849 = vmatprep.subr.mxu0 0.0
  %850 = vmatpush1.xpose.msra.mxu0 0.0
  %851 = vmatprep.subr.mxu0 0.0
  %852 = vmatpush1.xpose.msra.mxu0 0.0
  %853 = vmatprep.subr.mxu0 0.0
  %854 = vmatpush1.xpose.msra.mxu0 0.0
  %855 = vmatprep.subr.mxu0 0.0
  %856 = vmatpush1.xpose.msra.mxu0 0.0
  %857 = vmatprep.subr.mxu0 0.0
  %858 = vmatpush1.xpose.msra.mxu0 0.0
  %859 = vmatprep.subr.mxu0 0.0
  %860 = vmatpush1.xpose.msra.mxu0 0.0
  %861 = vmatprep.subr.mxu0 0.0
  %862 = vmatpush1.xpose.msra.mxu0 0.0
  %863 = vmatprep.subr.mxu0 0.0
  %864 = vmatpush1.xpose.msra.mxu0 0.0
  %865 = vmatprep.subr.mxu0 0.0
  %866 = vmatpush1.xpose.msra.mxu0 0.0
  %867 = vmatprep.subr.mxu0 0.0
  %868 = vmatpush1.xpose.msra.mxu0 0.0
  %869 = vmatprep.subr.mxu0 0.0
  %870 = vmatpush1.xpose.msra.mxu0 0.0
  %871 = vmatprep.subr.mxu0 0.0
  %872 = vmatpush1.xpose.msra.mxu0 0.0
  %873 = vmatprep.subr.mxu0 0.0
  %874 = vmatpush1.xpose.msra.mxu0 0.0
  %875 = vmatprep.subr.mxu0 0.0
  %876 = vmatpush1.xpose.msra.mxu0 0.0
  %877 = vmatprep.subr.mxu0 0.0
  %878 = vmatpush1.xpose.msra.mxu0 0.0
  %879 = vmatprep.subr.mxu0 0.0
  %880 = vmatpush1.xpose.msra.mxu0 0.0
  %881 = vmatprep.subr.mxu0 0.0
  %882 = vmatpush1.xpose.msra.mxu0 0.0
  %883 = vmatprep.subr.mxu0 0.0
  %884 = vmatpush1.xpose.msra.mxu0 0.0
  %885 = vmatprep.subr.mxu0 0.0
  %886 = vmatpush1.xpose.msra.mxu0 0.0
  %887 = vmatprep.mubr.f32.mxu0 0.0
  %888 = vmatmul.mubr.f32.gmra.mrb[0].mxu0 %v812
  %v889 = vpop.f32.mrb[0].mxu0
  %v890 = vadd.f32 0.0, %v889
  %v891 = vpop.f32.mrb[0].mxu0
  %892 = vmatprep.mubr.f32.mxu0 0.0
  %893 = vmatmul.mubr.f32.gmra.mrb[0].mxu0 %v815
  %v894 = vpop.f32.mrb[0].mxu0
  %v895 = vadd.f32 0.0, %v894
  %v896 = vpop.f32.mrb[0].mxu0
  %897 = vdwg.mxu0
  %v898 = vmul.f32 %v890, 0.35355338
  %v899 = vmul.f32 %v895, 0.35355338
  %v900 = vadd.f32 %v898, %v35
  %v901 = vadd.f32 %v899, %v36
  %v902 = vsel %vm442, %v900, -inf
  %903 = vmax.xlane.f32.xlu0 %v902
  %v904 = vpop.xlane.xlu0 %903
  %v905 = vsel %vm442, %v901, -inf
  %906 = vmax.xlane.f32.xlu0 %v905
  %v907 = vpop.xlane.xlu0 %906
  %v908 = vsub.f32 %v900, %v904
  %v909 = vsub.f32 %v901, %v907
  %v910 = vmul.f32 %v908, 1.442695
  %v911 = vpow.pop %v910
  %v912 = vmul.f32 %v909, 1.442695
  %v913 = vpow.pop %v912
  %v914 = vsel %vm442, %v911, 0.0
  %915 = vadd.xlane.f32.xlu0 %v914
  %v916 = vpop.xlane.xlu0 %915
  %v917 = vsel %vm442, %v913, 0.0
  %918 = vadd.xlane.f32.xlu0 %v917
  %v919 = vpop.xlane.xlu0 %918
  %v920 = vrcp.pop %v916
  %v921 = vrcp.pop %v919
  %v922 = vmul.f32 %v911, %v920
  %v923 = vmul.f32 %v913, %v921
  %v925 = vsel %vm442, %v922, 0
  %v928 = vsel %vm442, %v923, 0
  %930 = vmatprep.subr.mxu0 0.0
  %931 = vmatpush1.msra.mxu0 %v803
  %932 = vmatprep.subr.mxu0 0.0
  %933 = vmatpush1.msra.mxu0 %v808
  %934 = vmatprep.subr.mxu0 0.0
  %935 = vmatpush1.msra.mxu0 0.0
  %936 = vmatprep.subr.mxu0 0.0
  %937 = vmatpush1.msra.mxu0 0.0
  %938 = vmatprep.subr.mxu0 0.0
  %939 = vmatpush1.msra.mxu0 0.0
  %940 = vmatprep.subr.mxu0 0.0
  %941 = vmatpush1.msra.mxu0 0.0
  %942 = vmatprep.subr.mxu0 0.0
  %943 = vmatpush1.msra.mxu0 0.0
  %944 = vmatprep.subr.mxu0 0.0
  %945 = vmatpush1.msra.mxu0 0.0
  %946 = vmatprep.subr.mxu0 0.0
  %947 = vmatpush1.msra.mxu0 0.0
  %948 = vmatprep.subr.mxu0 0.0
  %949 = vmatpush1.msra.mxu0 0.0
  %950 = vmatprep.subr.mxu0 0.0
  %951 = vmatpush1.msra.mxu0 0.0
  %952 = vmatprep.subr.mxu0 0.0
  %953 = vmatpush1.msra.mxu0 0.0
  %954 = vmatprep.subr.mxu0 0.0
  %955 = vmatpush1.msra.mxu0 0.0
  %956 = vmatprep.subr.mxu0 0.0
  %957 = vmatpush1.msra.mxu0 0.0
  %958 = vmatprep.subr.mxu0 0.0
  %959 = vmatpush1.msra.mxu0 0.0
  %960 = vmatprep.subr.mxu0 0.0
  %961 = vmatpush1.msra.mxu0 0.0
  %962 = vmatprep.subr.mxu0 0.0
  %963 = vmatpush1.msra.mxu0 0.0
  %964 = vmatprep.subr.mxu0 0.0
  %965 = vmatpush1.msra.mxu0 0.0
  %966 = vmatprep.subr.mxu0 0.0
  %967 = vmatpush1.msra.mxu0 0.0
  %968 = vmatprep.subr.mxu0 0.0
  %969 = vmatpush1.msra.mxu0 0.0
  %970 = vmatprep.subr.mxu0 0.0
  %971 = vmatpush1.msra.mxu0 0.0
  %972 = vmatprep.subr.mxu0 0.0
  %973 = vmatpush1.msra.mxu0 0.0
  %974 = vmatprep.subr.mxu0 0.0
  %975 = vmatpush1.msra.mxu0 0.0
  %976 = vmatprep.subr.mxu0 0.0
  %977 = vmatpush1.msra.mxu0 0.0
  %978 = vmatprep.subr.mxu0 0.0
  %979 = vmatpush1.msra.mxu0 0.0
  %980 = vmatprep.subr.mxu0 0.0
  %981 = vmatpush1.msra.mxu0 0.0
  %982 = vmatprep.subr.mxu0 0.0
  %983 = vmatpush1.msra.mxu0 0.0
  %984 = vmatprep.subr.mxu0 0.0
  %985 = vmatpush1.msra.mxu0 0.0
  %986 = vmatprep.subr.mxu0 0.0
  %987 = vmatpush1.msra.mxu0 0.0
  %988 = vmatprep.subr.mxu0 0.0
  %989 = vmatpush1.msra.mxu0 0.0
  %990 = vmatprep.subr.mxu0 0.0
  %991 = vmatpush1.msra.mxu0 0.0
  %992 = vmatprep.subr.mxu0 0.0
  %993 = vmatpush1.msra.mxu0 0.0
  %994 = vmatprep.mubr.f32.mxu0 0.0
  %995 = vmatmul.mubr.f32.gmra.mrb[0].mxu0 %v925
  %v996 = vpop.f32.mrb[0].mxu0
  %v997 = vadd.f32 0.0, %v996
  %v998 = vpop.f32.mrb[0].mxu0
  %999 = vmatprep.mubr.f32.mxu0 0.0
  %1000 = vmatmul.mubr.f32.gmra.mrb[0].mxu0 %v928
  %v1001 = vpop.f32.mrb[0].mxu0
  %v1002 = vadd.f32 0.0, %v1001
  %v1003 = vpop.f32.mrb[0].mxu0
  %1004 = vdwg.mxu0
  %s1005 = scalar_lea.vmem %s4, 8
  %v1006 = vld [vmem:[%s1005] sm:$0xff]
  %v1008 = vsel %vm350, %v997, 0
  %v1011 = vsel %vm350, %v1002, 0
  %1013 = vmatprep.subr.mxu0 0.0
  %1014 = vmatpush1.msra.mxu0 %v1006
  %1015 = vmatprep.subr.mxu0 0.0
  %1016 = vmatpush1.msra.mxu0 0.0
  %1017 = vmatprep.subr.mxu0 0.0
  %1018 = vmatpush1.msra.mxu0 0.0
  %1019 = vmatprep.subr.mxu0 0.0
  %1020 = vmatpush1.msra.mxu0 0.0
  %1021 = vmatprep.subr.mxu0 0.0
  %1022 = vmatpush1.msra.mxu0 0.0
  %1023 = vmatprep.subr.mxu0 0.0
  %1024 = vmatpush1.msra.mxu0 0.0
  %1025 = vmatprep.subr.mxu0 0.0
  %1026 = vmatpush1.msra.mxu0 0.0
  %1027 = vmatprep.subr.mxu0 0.0
  %1028 = vmatpush1.msra.mxu0 0.0
  %1029 = vmatprep.subr.mxu0 0.0
  %1030 = vmatpush1.msra.mxu0 0.0
  %1031 = vmatprep.subr.mxu0 0.0
  %1032 = vmatpush1.msra.mxu0 0.0
  %1033 = vmatprep.subr.mxu0 0.0
  %1034 = vmatpush1.msra.mxu0 0.0
  %1035 = vmatprep.subr.mxu0 0.0
  %1036 = vmatpush1.msra.mxu0 0.0
  %1037 = vmatprep.subr.mxu0 0.0
  %1038 = vmatpush1.msra.mxu0 0.0
  %1039 = vmatprep.subr.mxu0 0.0
  %1040 = vmatpush1.msra.mxu0 0.0
  %1041 = vmatprep.subr.mxu0 0.0
  %1042 = vmatpush1.msra.mxu0 0.0
  %1043 = vmatprep.subr.mxu0 0.0
  %1044 = vmatpush1.msra.mxu0 0.0
  %1045 = vmatprep.subr.mxu0 0.0
  %1046 = vmatpush1.msra.mxu0 0.0
  %1047 = vmatprep.subr.mxu0 0.0
  %1048 = vmatpush1.msra.mxu0 0.0
  %1049 = vmatprep.subr.mxu0 0.0
  %1050 = vmatpush1.msra.mxu0 0.0
  %1051 = vmatprep.subr.mxu0 0.0
  %1052 = vmatpush1.msra.mxu0 0.0
  %1053 = vmatprep.subr.mxu0 0.0
  %1054 = vmatpush1.msra.mxu0 0.0
  %1055 = vmatprep.subr.mxu0 0.0
  %1056 = vmatpush1.msra.mxu0 0.0
  %1057 = vmatprep.subr.mxu0 0.0
  %1058 = vmatpush1.msra.mxu0 0.0
  %1059 = vmatprep.subr.mxu0 0.0
  %1060 = vmatpush1.msra.mxu0 0.0
  %1061 = vmatprep.subr.mxu0 0.0
  %1062 = vmatpush1.msra.mxu0 0.0
  %1063 = vmatprep.subr.mxu0 0.0
  %1064 = vmatpush1.msra.mxu0 0.0
  %1065 = vmatprep.subr.mxu0 0.0
  %1066 = vmatpush1.msra.mxu0 0.0
  %1067 = vmatprep.subr.mxu0 0.0
  %1068 = vmatpush1.msra.mxu0 0.0
  %1069 = vmatprep.subr.mxu0 0.0
  %1070 = vmatpush1.msra.mxu0 0.0
  %1071 = vmatprep.subr.mxu0 0.0
  %1072 = vmatpush1.msra.mxu0 0.0
  %1073 = vmatprep.subr.mxu0 0.0
  %1074 = vmatpush1.msra.mxu0 0.0
  %1075 = vmatprep.subr.mxu0 0.0
  %1076 = vmatpush1.msra.mxu0 0.0
  %1077 = vmatprep.mubr.f32.mxu0 0.0
  %1078 = vmatmul.mubr.f32.gmra.mrb[0].mxu0 %v1008
  %v1079 = vpop.f32.mrb[0].mxu0
  %v1080 = vadd.f32 0.0, %v1079
  %v1081 = vpop.f32.mrb[0].mxu0
  %1082 = vmatprep.mubr.f32.mxu0 0.0
  %1083 = vmatmul.mubr.f32.gmra.mrb[0].mxu0 %v1011
  %v1084 = vpop.f32.mrb[0].mxu0
  %v1085 = vadd.f32 0.0, %v1084
  %v1086 = vpop.f32.mrb[0].mxu0
  %1087 = vdwg.mxu0
  %v1089 = vsel %vm350, %v538, 0
  %v1092 = vsel %vm350, %v543, 0
  %1094 = vmatprep.subr.mxu0 0.0
  %1095 = vmatpush1.msra.mxu0 %v546
  %1096 = vmatprep.subr.mxu0 0.0
  %1097 = vmatpush1.msra.mxu0 0.0
  %1098 = vmatprep.subr.mxu0 0.0
  %1099 = vmatpush1.msra.mxu0 0.0
  %1100 = vmatprep.subr.mxu0 0.0
  %1101 = vmatpush1.msra.mxu0 0.0
  %1102 = vmatprep.subr.mxu0 0.0
  %1103 = vmatpush1.msra.mxu0 0.0
  %1104 = vmatprep.subr.mxu0 0.0
  %1105 = vmatpush1.msra.mxu0 0.0
  %1106 = vmatprep.subr.mxu0 0.0
  %1107 = vmatpush1.msra.mxu0 0.0
  %1108 = vmatprep.subr.mxu0 0.0
  %1109 = vmatpush1.msra.mxu0 0.0
  %1110 = vmatprep.subr.mxu0 0.0
  %1111 = vmatpush1.msra.mxu0 0.0
  %1112 = vmatprep.subr.mxu0 0.0
  %1113 = vmatpush1.msra.mxu0 0.0
  %1114 = vmatprep.subr.mxu0 0.0
  %1115 = vmatpush1.msra.mxu0 0.0
  %1116 = vmatprep.subr.mxu0 0.0
  %1117 = vmatpush1.msra.mxu0 0.0
  %1118 = vmatprep.subr.mxu0 0.0
  %1119 = vmatpush1.msra.mxu0 0.0
  %1120 = vmatprep.subr.mxu0 0.0
  %1121 = vmatpush1.msra.mxu0 0.0
  %1122 = vmatprep.subr.mxu0 0.0
  %1123 = vmatpush1.msra.mxu0 0.0
  %1124 = vmatprep.subr.mxu0 0.0
  %1125 = vmatpush1.msra.mxu0 0.0
  %1126 = vmatprep.subr.mxu0 0.0
  %1127 = vmatpush1.msra.mxu0 0.0
  %1128 = vmatprep.subr.mxu0 0.0
  %1129 = vmatpush1.msra.mxu0 0.0
  %1130 = vmatprep.subr.mxu0 0.0
  %1131 = vmatpush1.msra.mxu0 0.0
  %1132 = vmatprep.subr.mxu0 0.0
  %1133 = vmatpush1.msra.mxu0 0.0
  %1134 = vmatprep.subr.mxu0 0.0
  %1135 = vmatpush1.msra.mxu0 0.0
  %1136 = vmatprep.subr.mxu0 0.0
  %1137 = vmatpush1.msra.mxu0 0.0
  %1138 = vmatprep.subr.mxu0 0.0
  %1139 = vmatpush1.msra.mxu0 0.0
  %1140 = vmatprep.subr.mxu0 0.0
  %1141 = vmatpush1.msra.mxu0 0.0
  %1142 = vmatprep.subr.mxu0 0.0
  %1143 = vmatpush1.msra.mxu0 0.0
  %1144 = vmatprep.subr.mxu0 0.0
  %1145 = vmatpush1.msra.mxu0 0.0
  %1146 = vmatprep.subr.mxu0 0.0
  %1147 = vmatpush1.msra.mxu0 0.0
  %1148 = vmatprep.subr.mxu0 0.0
  %1149 = vmatpush1.msra.mxu0 0.0
  %1150 = vmatprep.subr.mxu0 0.0
  %1151 = vmatpush1.msra.mxu0 0.0
  %1152 = vmatprep.subr.mxu0 0.0
  %1153 = vmatpush1.msra.mxu0 0.0
  %1154 = vmatprep.subr.mxu0 0.0
  %1155 = vmatpush1.msra.mxu0 0.0
  %1156 = vmatprep.subr.mxu0 0.0
  %1157 = vmatpush1.msra.mxu0 0.0
  %1158 = vmatprep.mubr.f32.mxu0 0.0
  %1159 = vmatmul.mubr.f32.gmra.mrb[0].mxu0 %v1089
  %v1160 = vpop.f32.mrb[0].mxu0
  %v1161 = vadd.f32 %v1080, %v1160
  %v1162 = vpop.f32.mrb[0].mxu0
  %1163 = vmatprep.mubr.f32.mxu0 0.0
  %1164 = vmatmul.mubr.f32.gmra.mrb[0].mxu0 %v1092
  %v1165 = vpop.f32.mrb[0].mxu0
  %v1166 = vadd.f32 %v1085, %v1165
  %v1167 = vpop.f32.mrb[0].mxu0
  %1168 = vdwg.mxu0
  %s1169 = scalar_lea.vmem %s2, 192
  %v1170 = vld [vmem:[%s1169] sm:$0xff]
  %v1171 = vld [vmem:[%s1169 + $0x8] sm:$0xff]
  %v1172 = vld [vmem:[%s1169 + $0x10] sm:$0xff]
  %v1173 = vld [vmem:[%s1169 + $0x18] sm:$0xff]
  %s1174 = scalar_lea.vmem %s3, 6
  %v1175 = vld [vmem:[%s1174] sm:$0x1]
  %v1177 = vlaneseq
  %v1178 = vshrl.u32 %v1177, 7
  %v1179 = vsub.s32 0, %v1178
  %v1180 = vrot.slane %v1175, %v1179
  %1182 = vmatprep.subr.mxu0 0.0
  %1183 = vmatpush1.msra.mxu0 %v1170
  %1184 = vmatprep.subr.mxu0 0.0
  %1185 = vmatpush1.msra.mxu0 %v1171
  %1186 = vmatprep.subr.mxu0 0.0
  %1187 = vmatpush1.msra.mxu0 %v1172
  %1188 = vmatprep.subr.mxu0 0.0
  %1189 = vmatpush1.msra.mxu0 %v1173
  %1190 = vmatprep.subr.mxu0 0.0
  %1191 = vmatpush1.msra.mxu0 0.0
  %1192 = vmatprep.subr.mxu0 0.0
  %1193 = vmatpush1.msra.mxu0 0.0
  %1194 = vmatprep.subr.mxu0 0.0
  %1195 = vmatpush1.msra.mxu0 0.0
  %1196 = vmatprep.subr.mxu0 0.0
  %1197 = vmatpush1.msra.mxu0 0.0
  %1198 = vmatprep.subr.mxu0 0.0
  %1199 = vmatpush1.msra.mxu0 0.0
  %1200 = vmatprep.subr.mxu0 0.0
  %1201 = vmatpush1.msra.mxu0 0.0
  %1202 = vmatprep.subr.mxu0 0.0
  %1203 = vmatpush1.msra.mxu0 0.0
  %1204 = vmatprep.subr.mxu0 0.0
  %1205 = vmatpush1.msra.mxu0 0.0
  %1206 = vmatprep.subr.mxu0 0.0
  %1207 = vmatpush1.msra.mxu0 0.0
  %1208 = vmatprep.subr.mxu0 0.0
  %1209 = vmatpush1.msra.mxu0 0.0
  %1210 = vmatprep.subr.mxu0 0.0
  %1211 = vmatpush1.msra.mxu0 0.0
  %1212 = vmatprep.subr.mxu0 0.0
  %1213 = vmatpush1.msra.mxu0 0.0
  %1214 = vmatprep.subr.mxu0 0.0
  %1215 = vmatpush1.msra.mxu0 0.0
  %1216 = vmatprep.subr.mxu0 0.0
  %1217 = vmatpush1.msra.mxu0 0.0
  %1218 = vmatprep.subr.mxu0 0.0
  %1219 = vmatpush1.msra.mxu0 0.0
  %1220 = vmatprep.subr.mxu0 0.0
  %1221 = vmatpush1.msra.mxu0 0.0
  %1222 = vmatprep.subr.mxu0 0.0
  %1223 = vmatpush1.msra.mxu0 0.0
  %1224 = vmatprep.subr.mxu0 0.0
  %1225 = vmatpush1.msra.mxu0 0.0
  %1226 = vmatprep.subr.mxu0 0.0
  %1227 = vmatpush1.msra.mxu0 0.0
  %1228 = vmatprep.subr.mxu0 0.0
  %1229 = vmatpush1.msra.mxu0 0.0
  %1230 = vmatprep.subr.mxu0 0.0
  %1231 = vmatpush1.msra.mxu0 0.0
  %1232 = vmatprep.subr.mxu0 0.0
  %1233 = vmatpush1.msra.mxu0 0.0
  %1234 = vmatprep.subr.mxu0 0.0
  %1235 = vmatpush1.msra.mxu0 0.0
  %1236 = vmatprep.subr.mxu0 0.0
  %1237 = vmatpush1.msra.mxu0 0.0
  %1238 = vmatprep.subr.mxu0 0.0
  %1239 = vmatpush1.msra.mxu0 0.0
  %1240 = vmatprep.subr.mxu0 0.0
  %1241 = vmatpush1.msra.mxu0 0.0
  %1242 = vmatprep.subr.mxu0 0.0
  %1243 = vmatpush1.msra.mxu0 0.0
  %1244 = vmatprep.subr.mxu0 0.0
  %1245 = vmatpush1.msra.mxu0 0.0
  %1246 = vmatprep.mubr.f32.mxu0 0.0
  %1247 = vmatmul.mubr.f32.gmra.mrb[0].mxu0 %v94
  %v1248 = vpop.f32.mrb[0].mxu0
  %v1249 = vadd.f32 %v1180, %v1248
  %v1250 = vpop.f32.mrb[0].mxu0
  %1251 = vmatprep.mubr.f32.mxu0 0.0
  %1252 = vmatmul.mubr.f32.gmra.mrb[0].mxu0 %v97
  %v1253 = vpop.f32.mrb[0].mxu0
  %v1254 = vadd.f32 %v1180, %v1253
  %v1255 = vpop.f32.mrb[0].mxu0
  %1256 = vdwg.mxu0
  %s1257 = scalar_lea.vmem %s2, 224
  %v1258 = vld [vmem:[%s1257] sm:$0xff]
  %v1259 = vld [vmem:[%s1257 + $0x8] sm:$0xff]
  %v1260 = vld [vmem:[%s1257 + $0x10] sm:$0xff]
  %v1261 = vld [vmem:[%s1257 + $0x18] sm:$0xff]
  %s1262 = scalar_lea.vmem %s3, 7
  %v1263 = vld [vmem:[%s1262] sm:$0x1]
  %v1265 = vlaneseq
  %v1266 = vshrl.u32 %v1265, 7
  %v1267 = vsub.s32 0, %v1266
  %v1268 = vrot.slane %v1263, %v1267
  %1270 = vmatprep.subr.mxu0 0.0
  %1271 = vmatpush1.msra.mxu0 %v1258
  %1272 = vmatprep.subr.mxu0 0.0
  %1273 = vmatpush1.msra.mxu0 %v1259
  %1274 = vmatprep.subr.mxu0 0.0
  %1275 = vmatpush1.msra.mxu0 %v1260
  %1276 = vmatprep.subr.mxu0 0.0
  %1277 = vmatpush1.msra.mxu0 %v1261
  %1278 = vmatprep.subr.mxu0 0.0
  %1279 = vmatpush1.msra.mxu0 0.0
  %1280 = vmatprep.subr.mxu0 0.0
  %1281 = vmatpush1.msra.mxu0 0.0
  %1282 = vmatprep.subr.mxu0 0.0
  %1283 = vmatpush1.msra.mxu0 0.0
  %1284 = vmatprep.subr.mxu0 0.0
  %1285 = vmatpush1.msra.mxu0 0.0
  %1286 = vmatprep.subr.mxu0 0.0
  %1287 = vmatpush1.msra.mxu0 0.0
  %1288 = vmatprep.subr.mxu0 0.0
  %1289 = vmatpush1.msra.mxu0 0.0
  %1290 = vmatprep.subr.mxu0 0.0
  %1291 = vmatpush1.msra.mxu0 0.0
  %1292 = vmatprep.subr.mxu0 0.0
  %1293 = vmatpush1.msra.mxu0 0.0
  %1294 = vmatprep.subr.mxu0 0.0
  %1295 = vmatpush1.msra.mxu0 0.0
  %1296 = vmatprep.subr.mxu0 0.0
  %1297 = vmatpush1.msra.mxu0 0.0
  %1298 = vmatprep.subr.mxu0 0.0
  %1299 = vmatpush1.msra.mxu0 0.0
  %1300 = vmatprep.subr.mxu0 0.0
  %1301 = vmatpush1.msra.mxu0 0.0
  %1302 = vmatprep.subr.mxu0 0.0
  %1303 = vmatpush1.msra.mxu0 0.0
  %1304 = vmatprep.subr.mxu0 0.0
  %1305 = vmatpush1.msra.mxu0 0.0
  %1306 = vmatprep.subr.mxu0 0.0
  %1307 = vmatpush1.msra.mxu0 0.0
  %1308 = vmatprep.subr.mxu0 0.0
  %1309 = vmatpush1.msra.mxu0 0.0
  %1310 = vmatprep.subr.mxu0 0.0
  %1311 = vmatpush1.msra.mxu0 0.0
  %1312 = vmatprep.subr.mxu0 0.0
  %1313 = vmatpush1.msra.mxu0 0.0
  %1314 = vmatprep.subr.mxu0 0.0
  %1315 = vmatpush1.msra.mxu0 0.0
  %1316 = vmatprep.subr.mxu0 0.0
  %1317 = vmatpush1.msra.mxu0 0.0
  %1318 = vmatprep.subr.mxu0 0.0
  %1319 = vmatpush1.msra.mxu0 0.0
  %1320 = vmatprep.subr.mxu0 0.0
  %1321 = vmatpush1.msra.mxu0 0.0
  %1322 = vmatprep.subr.mxu0 0.0
  %1323 = vmatpush1.msra.mxu0 0.0
  %1324 = vmatprep.subr.mxu0 0.0
  %1325 = vmatpush1.msra.mxu0 0.0
  %1326 = vmatprep.subr.mxu0 0.0
  %1327 = vmatpush1.msra.mxu0 0.0
  %1328 = vmatprep.subr.mxu0 0.0
  %1329 = vmatpush1.msra.mxu0 0.0
  %1330 = vmatprep.subr.mxu0 0.0
  %1331 = vmatpush1.msra.mxu0 0.0
  %1332 = vmatprep.subr.mxu0 0.0
  %1333 = vmatpush1.msra.mxu0 0.0
  %1334 = vmatprep.mubr.f32.mxu0 0.0
  %1335 = vmatmul.mubr.f32.gmra.mrb[0].mxu0 %v94
  %v1336 = vpop.f32.mrb[0].mxu0
  %v1337 = vadd.f32 %v1268, %v1336
  %v1338 = vpop.f32.mrb[0].mxu0
  %1339 = vmatprep.mubr.f32.mxu0 0.0
  %1340 = vmatmul.mubr.f32.gmra.mrb[0].mxu0 %v97
  %v1341 = vpop.f32.mrb[0].mxu0
  %v1342 = vadd.f32 %v1268, %v1341
  %v1343 = vpop.f32.mrb[0].mxu0
  %1344 = vdwg.mxu0
  %s1345 = scalar_lea.vmem %s2, 256
  %v1346 = vld [vmem:[%s1345] sm:$0xff]
  %v1347 = vld [vmem:[%s1345 + $0x8] sm:$0xff]
  %v1348 = vld [vmem:[%s1345 + $0x10] sm:$0xff]
  %v1349 = vld [vmem:[%s1345 + $0x18] sm:$0xff]
  %s1350 = scalar_lea.vmem %s3, 8
  %v1351 = vld [vmem:[%s1350] sm:$0x1]
  %v1353 = vlaneseq
  %v1354 = vshrl.u32 %v1353, 7
  %v1355 = vsub.s32 0, %v1354
  %v1356 = vrot.slane %v1351, %v1355
  %1358 = vmatprep.subr.mxu0 0.0
  %1359 = vmatpush1.msra.mxu0 %v1346
  %1360 = vmatprep.subr.mxu0 0.0
  %1361 = vmatpush1.msra.mxu0 %v1347
  %1362 = vmatprep.subr.mxu0 0.0
  %1363 = vmatpush1.msra.mxu0 %v1348
  %1364 = vmatprep.subr.mxu0 0.0
  %1365 = vmatpush1.msra.mxu0 %v1349
  %1366 = vmatprep.subr.mxu0 0.0
  %1367 = vmatpush1.msra.mxu0 0.0
  %1368 = vmatprep.subr.mxu0 0.0
  %1369 = vmatpush1.msra.mxu0 0.0
  %1370 = vmatprep.subr.mxu0 0.0
  %1371 = vmatpush1.msra.mxu0 0.0
  %1372 = vmatprep.subr.mxu0 0.0
  %1373 = vmatpush1.msra.mxu0 0.0
  %1374 = vmatprep.subr.mxu0 0.0
  %1375 = vmatpush1.msra.mxu0 0.0
  %1376 = vmatprep.subr.mxu0 0.0
  %1377 = vmatpush1.msra.mxu0 0.0
  %1378 = vmatprep.subr.mxu0 0.0
  %1379 = vmatpush1.msra.mxu0 0.0
  %1380 = vmatprep.subr.mxu0 0.0
  %1381 = vmatpush1.msra.mxu0 0.0
  %1382 = vmatprep.subr.mxu0 0.0
  %1383 = vmatpush1.msra.mxu0 0.0
  %1384 = vmatprep.subr.mxu0 0.0
  %1385 = vmatpush1.msra.mxu0 0.0
  %1386 = vmatprep.subr.mxu0 0.0
  %1387 = vmatpush1.msra.mxu0 0.0
  %1388 = vmatprep.subr.mxu0 0.0
  %1389 = vmatpush1.msra.mxu0 0.0
  %1390 = vmatprep.subr.mxu0 0.0
  %1391 = vmatpush1.msra.mxu0 0.0
  %1392 = vmatprep.subr.mxu0 0.0
  %1393 = vmatpush1.msra.mxu0 0.0
  %1394 = vmatprep.subr.mxu0 0.0
  %1395 = vmatpush1.msra.mxu0 0.0
  %1396 = vmatprep.subr.mxu0 0.0
  %1397 = vmatpush1.msra.mxu0 0.0
  %1398 = vmatprep.subr.mxu0 0.0
  %1399 = vmatpush1.msra.mxu0 0.0
  %1400 = vmatprep.subr.mxu0 0.0
  %1401 = vmatpush1.msra.mxu0 0.0
  %1402 = vmatprep.subr.mxu0 0.0
  %1403 = vmatpush1.msra.mxu0 0.0
  %1404 = vmatprep.subr.mxu0 0.0
  %1405 = vmatpush1.msra.mxu0 0.0
  %1406 = vmatprep.subr.mxu0 0.0
  %1407 = vmatpush1.msra.mxu0 0.0
  %1408 = vmatprep.subr.mxu0 0.0
  %1409 = vmatpush1.msra.mxu0 0.0
  %1410 = vmatprep.subr.mxu0 0.0
  %1411 = vmatpush1.msra.mxu0 0.0
  %1412 = vmatprep.subr.mxu0 0.0
  %1413 = vmatpush1.msra.mxu0 0.0
  %1414 = vmatprep.subr.mxu0 0.0
  %1415 = vmatpush1.msra.mxu0 0.0
  %1416 = vmatprep.subr.mxu0 0.0
  %1417 = vmatpush1.msra.mxu0 0.0
  %1418 = vmatprep.subr.mxu0 0.0
  %1419 = vmatpush1.msra.mxu0 0.0
  %1420 = vmatprep.subr.mxu0 0.0
  %1421 = vmatpush1.msra.mxu0 0.0
  %1422 = vmatprep.mubr.f32.mxu0 0.0
  %1423 = vmatmul.mubr.f32.gmra.mrb[0].mxu0 %v94
  %v1424 = vpop.f32.mrb[0].mxu0
  %v1425 = vadd.f32 %v1356, %v1424
  %v1426 = vpop.f32.mrb[0].mxu0
  %1427 = vmatprep.mubr.f32.mxu0 0.0
  %1428 = vmatmul.mubr.f32.gmra.mrb[0].mxu0 %v97
  %v1429 = vpop.f32.mrb[0].mxu0
  %v1430 = vadd.f32 %v1356, %v1429
  %v1431 = vpop.f32.mrb[0].mxu0
  %1432 = vdwg.mxu0
  %v1434 = vsel %vm350, %v1249, 0
  %v1437 = vsel %vm350, %v1254, 0
  %v1440 = vsel %vm350, %v1337, 0
  %v1443 = vsel %vm350, %v1342, 0
  %1445 = vmatprep.subr.mxu0 0.0
  %1446 = vmatpush1.xpose.msra.mxu0 %v1440
  %1447 = vmatprep.subr.mxu0 0.0
  %1448 = vmatpush1.xpose.msra.mxu0 %v1443
  %1449 = vmatprep.subr.mxu0 0.0
  %1450 = vmatpush1.xpose.msra.mxu0 0.0
  %1451 = vmatprep.subr.mxu0 0.0
  %1452 = vmatpush1.xpose.msra.mxu0 0.0
  %1453 = vmatprep.subr.mxu0 0.0
  %1454 = vmatpush1.xpose.msra.mxu0 0.0
  %1455 = vmatprep.subr.mxu0 0.0
  %1456 = vmatpush1.xpose.msra.mxu0 0.0
  %1457 = vmatprep.subr.mxu0 0.0
  %1458 = vmatpush1.xpose.msra.mxu0 0.0
  %1459 = vmatprep.subr.mxu0 0.0
  %1460 = vmatpush1.xpose.msra.mxu0 0.0
  %1461 = vmatprep.subr.mxu0 0.0
  %1462 = vmatpush1.xpose.msra.mxu0 0.0
  %1463 = vmatprep.subr.mxu0 0.0
  %1464 = vmatpush1.xpose.msra.mxu0 0.0
  %1465 = vmatprep.subr.mxu0 0.0
  %1466 = vmatpush1.xpose.msra.mxu0 0.0
  %1467 = vmatprep.subr.mxu0 0.0
  %1468 = vmatpush1.xpose.msra.mxu0 0.0
  %1469 = vmatprep.subr.mxu0 0.0
  %1470 = vmatpush1.xpose.msra.mxu0 0.0
  %1471 = vmatprep.subr.mxu0 0.0
  %1472 = vmatpush1.xpose.msra.mxu0 0.0
  %1473 = vmatprep.subr.mxu0 0.0
  %1474 = vmatpush1.xpose.msra.mxu0 0.0
  %1475 = vmatprep.subr.mxu0 0.0
  %1476 = vmatpush1.xpose.msra.mxu0 0.0
  %1477 = vmatprep.subr.mxu0 0.0
  %1478 = vmatpush1.xpose.msra.mxu0 0.0
  %1479 = vmatprep.subr.mxu0 0.0
  %1480 = vmatpush1.xpose.msra.mxu0 0.0
  %1481 = vmatprep.subr.mxu0 0.0
  %1482 = vmatpush1.xpose.msra.mxu0 0.0
  %1483 = vmatprep.subr.mxu0 0.0
  %1484 = vmatpush1.xpose.msra.mxu0 0.0
  %1485 = vmatprep.subr.mxu0 0.0
  %1486 = vmatpush1.xpose.msra.mxu0 0.0
  %1487 = vmatprep.subr.mxu0 0.0
  %1488 = vmatpush1.xpose.msra.mxu0 0.0
  %1489 = vmatprep.subr.mxu0 0.0
  %1490 = vmatpush1.xpose.msra.mxu0 0.0
  %1491 = vmatprep.subr.mxu0 0.0
  %1492 = vmatpush1.xpose.msra.mxu0 0.0
  %1493 = vmatprep.subr.mxu0 0.0
  %1494 = vmatpush1.xpose.msra.mxu0 0.0
  %1495 = vmatprep.subr.mxu0 0.0
  %1496 = vmatpush1.xpose.msra.mxu0 0.0
  %1497 = vmatprep.subr.mxu0 0.0
  %1498 = vmatpush1.xpose.msra.mxu0 0.0
  %1499 = vmatprep.subr.mxu0 0.0
  %1500 = vmatpush1.xpose.msra.mxu0 0.0
  %1501 = vmatprep.subr.mxu0 0.0
  %1502 = vmatpush1.xpose.msra.mxu0 0.0
  %1503 = vmatprep.subr.mxu0 0.0
  %1504 = vmatpush1.xpose.msra.mxu0 0.0
  %1505 = vmatprep.subr.mxu0 0.0
  %1506 = vmatpush1.xpose.msra.mxu0 0.0
  %1507 = vmatprep.subr.mxu0 0.0
  %1508 = vmatpush1.xpose.msra.mxu0 0.0
  %1509 = vmatprep.mubr.f32.mxu0 0.0
  %1510 = vmatmul.mubr.f32.gmra.mrb[0].mxu0 %v1434
  %v1511 = vpop.f32.mrb[0].mxu0
  %v1512 = vadd.f32 0.0, %v1511
  %v1513 = vpop.f32.mrb[0].mxu0
  %1514 = vmatprep.mubr.f32.mxu0 0.0
  %1515 = vmatmul.mubr.f32.gmra.mrb[0].mxu0 %v1437
  %v1516 = vpop.f32.mrb[0].mxu0
  %v1517 = vadd.f32 0.0, %v1516
  %v1518 = vpop.f32.mrb[0].mxu0
  %1519 = vdwg.mxu0
  %v1520 = vmul.f32 %v1512, 0.35355338
  %v1521 = vmul.f32 %v1517, 0.35355338
  %v1522 = vadd.f32 %v1520, %v35
  %v1523 = vadd.f32 %v1521, %v36
  %v1524 = vsel %vm442, %v1522, -inf
  %1525 = vmax.xlane.f32.xlu0 %v1524
  %v1526 = vpop.xlane.xlu0 %1525
  %v1527 = vsel %vm442, %v1523, -inf
  %1528 = vmax.xlane.f32.xlu0 %v1527
  %v1529 = vpop.xlane.xlu0 %1528
  %v1530 = vsub.f32 %v1522, %v1526
  %v1531 = vsub.f32 %v1523, %v1529
  %v1532 = vmul.f32 %v1530, 1.442695
  %v1533 = vpow.pop %v1532
  %v1534 = vmul.f32 %v1531, 1.442695
  %v1535 = vpow.pop %v1534
  %v1536 = vsel %vm442, %v1533, 0.0
  %1537 = vadd.xlane.f32.xlu0 %v1536
  %v1538 = vpop.xlane.xlu0 %1537
  %v1539 = vsel %vm442, %v1535, 0.0
  %1540 = vadd.xlane.f32.xlu0 %v1539
  %v1541 = vpop.xlane.xlu0 %1540
  %v1542 = vrcp.pop %v1538
  %v1543 = vrcp.pop %v1541
  %v1544 = vmul.f32 %v1533, %v1542
  %v1545 = vmul.f32 %v1535, %v1543
  %v1547 = vsel %vm442, %v1544, 0
  %v1550 = vsel %vm442, %v1545, 0
  %1552 = vmatprep.subr.mxu0 0.0
  %1553 = vmatpush1.msra.mxu0 %v1425
  %1554 = vmatprep.subr.mxu0 0.0
  %1555 = vmatpush1.msra.mxu0 %v1430
  %1556 = vmatprep.subr.mxu0 0.0
  %1557 = vmatpush1.msra.mxu0 0.0
  %1558 = vmatprep.subr.mxu0 0.0
  %1559 = vmatpush1.msra.mxu0 0.0
  %1560 = vmatprep.subr.mxu0 0.0
  %1561 = vmatpush1.msra.mxu0 0.0
  %1562 = vmatprep.subr.mxu0 0.0
  %1563 = vmatpush1.msra.mxu0 0.0
  %1564 = vmatprep.subr.mxu0 0.0
  %1565 = vmatpush1.msra.mxu0 0.0
  %1566 = vmatprep.subr.mxu0 0.0
  %1567 = vmatpush1.msra.mxu0 0.0
  %1568 = vmatprep.subr.mxu0 0.0
  %1569 = vmatpush1.msra.mxu0 0.0
  %1570 = vmatprep.subr.mxu0 0.0
  %1571 = vmatpush1.msra.mxu0 0.0
  %1572 = vmatprep.subr.mxu0 0.0
  %1573 = vmatpush1.msra.mxu0 0.0
  %1574 = vmatprep.subr.mxu0 0.0
  %1575 = vmatpush1.msra.mxu0 0.0
  %1576 = vmatprep.subr.mxu0 0.0
  %1577 = vmatpush1.msra.mxu0 0.0
  %1578 = vmatprep.subr.mxu0 0.0
  %1579 = vmatpush1.msra.mxu0 0.0
  %1580 = vmatprep.subr.mxu0 0.0
  %1581 = vmatpush1.msra.mxu0 0.0
  %1582 = vmatprep.subr.mxu0 0.0
  %1583 = vmatpush1.msra.mxu0 0.0
  %1584 = vmatprep.subr.mxu0 0.0
  %1585 = vmatpush1.msra.mxu0 0.0
  %1586 = vmatprep.subr.mxu0 0.0
  %1587 = vmatpush1.msra.mxu0 0.0
  %1588 = vmatprep.subr.mxu0 0.0
  %1589 = vmatpush1.msra.mxu0 0.0
  %1590 = vmatprep.subr.mxu0 0.0
  %1591 = vmatpush1.msra.mxu0 0.0
  %1592 = vmatprep.subr.mxu0 0.0
  %1593 = vmatpush1.msra.mxu0 0.0
  %1594 = vmatprep.subr.mxu0 0.0
  %1595 = vmatpush1.msra.mxu0 0.0
  %1596 = vmatprep.subr.mxu0 0.0
  %1597 = vmatpush1.msra.mxu0 0.0
  %1598 = vmatprep.subr.mxu0 0.0
  %1599 = vmatpush1.msra.mxu0 0.0
  %1600 = vmatprep.subr.mxu0 0.0
  %1601 = vmatpush1.msra.mxu0 0.0
  %1602 = vmatprep.subr.mxu0 0.0
  %1603 = vmatpush1.msra.mxu0 0.0
  %1604 = vmatprep.subr.mxu0 0.0
  %1605 = vmatpush1.msra.mxu0 0.0
  %1606 = vmatprep.subr.mxu0 0.0
  %1607 = vmatpush1.msra.mxu0 0.0
  %1608 = vmatprep.subr.mxu0 0.0
  %1609 = vmatpush1.msra.mxu0 0.0
  %1610 = vmatprep.subr.mxu0 0.0
  %1611 = vmatpush1.msra.mxu0 0.0
  %1612 = vmatprep.subr.mxu0 0.0
  %1613 = vmatpush1.msra.mxu0 0.0
  %1614 = vmatprep.subr.mxu0 0.0
  %1615 = vmatpush1.msra.mxu0 0.0
  %1616 = vmatprep.mubr.f32.mxu0 0.0
  %1617 = vmatmul.mubr.f32.gmra.mrb[0].mxu0 %v1547
  %v1618 = vpop.f32.mrb[0].mxu0
  %v1619 = vadd.f32 0.0, %v1618
  %v1620 = vpop.f32.mrb[0].mxu0
  %1621 = vmatprep.mubr.f32.mxu0 0.0
  %1622 = vmatmul.mubr.f32.gmra.mrb[0].mxu0 %v1550
  %v1623 = vpop.f32.mrb[0].mxu0
  %v1624 = vadd.f32 0.0, %v1623
  %v1625 = vpop.f32.mrb[0].mxu0
  %1626 = vdwg.mxu0
  %s1627 = scalar_lea.vmem %s4, 16
  %v1628 = vld [vmem:[%s1627] sm:$0xff]
  %v1630 = vsel %vm350, %v1619, 0
  %v1633 = vsel %vm350, %v1624, 0
  %1635 = vmatprep.subr.mxu0 0.0
  %1636 = vmatpush1.msra.mxu0 %v1628
  %1637 = vmatprep.subr.mxu0 0.0
  %1638 = vmatpush1.msra.mxu0 0.0
  %1639 = vmatprep.subr.mxu0 0.0
  %1640 = vmatpush1.msra.mxu0 0.0
  %1641 = vmatprep.subr.mxu0 0.0
  %1642 = vmatpush1.msra.mxu0 0.0
  %1643 = vmatprep.subr.mxu0 0.0
  %1644 = vmatpush1.msra.mxu0 0.0
  %1645 = vmatprep.subr.mxu0 0.0
  %1646 = vmatpush1.msra.mxu0 0.0
  %1647 = vmatprep.subr.mxu0 0.0
  %1648 = vmatpush1.msra.mxu0 0.0
  %1649 = vmatprep.subr.mxu0 0.0
  %1650 = vmatpush1.msra.mxu0 0.0
  %1651 = vmatprep.subr.mxu0 0.0
  %1652 = vmatpush1.msra.mxu0 0.0
  %1653 = vmatprep.subr.mxu0 0.0
  %1654 = vmatpush1.msra.mxu0 0.0
  %1655 = vmatprep.subr.mxu0 0.0
  %1656 = vmatpush1.msra.mxu0 0.0
  %1657 = vmatprep.subr.mxu0 0.0
  %1658 = vmatpush1.msra.mxu0 0.0
  %1659 = vmatprep.subr.mxu0 0.0
  %1660 = vmatpush1.msra.mxu0 0.0
  %1661 = vmatprep.subr.mxu0 0.0
  %1662 = vmatpush1.msra.mxu0 0.0
  %1663 = vmatprep.subr.mxu0 0.0
  %1664 = vmatpush1.msra.mxu0 0.0
  %1665 = vmatprep.subr.mxu0 0.0
  %1666 = vmatpush1.msra.mxu0 0.0
  %1667 = vmatprep.subr.mxu0 0.0
  %1668 = vmatpush1.msra.mxu0 0.0
  %1669 = vmatprep.subr.mxu0 0.0
  %1670 = vmatpush1.msra.mxu0 0.0
  %1671 = vmatprep.subr.mxu0 0.0
  %1672 = vmatpush1.msra.mxu0 0.0
  %1673 = vmatprep.subr.mxu0 0.0
  %1674 = vmatpush1.msra.mxu0 0.0
  %1675 = vmatprep.subr.mxu0 0.0
  %1676 = vmatpush1.msra.mxu0 0.0
  %1677 = vmatprep.subr.mxu0 0.0
  %1678 = vmatpush1.msra.mxu0 0.0
  %1679 = vmatprep.subr.mxu0 0.0
  %1680 = vmatpush1.msra.mxu0 0.0
  %1681 = vmatprep.subr.mxu0 0.0
  %1682 = vmatpush1.msra.mxu0 0.0
  %1683 = vmatprep.subr.mxu0 0.0
  %1684 = vmatpush1.msra.mxu0 0.0
  %1685 = vmatprep.subr.mxu0 0.0
  %1686 = vmatpush1.msra.mxu0 0.0
  %1687 = vmatprep.subr.mxu0 0.0
  %1688 = vmatpush1.msra.mxu0 0.0
  %1689 = vmatprep.subr.mxu0 0.0
  %1690 = vmatpush1.msra.mxu0 0.0
  %1691 = vmatprep.subr.mxu0 0.0
  %1692 = vmatpush1.msra.mxu0 0.0
  %1693 = vmatprep.subr.mxu0 0.0
  %1694 = vmatpush1.msra.mxu0 0.0
  %1695 = vmatprep.subr.mxu0 0.0
  %1696 = vmatpush1.msra.mxu0 0.0
  %1697 = vmatprep.subr.mxu0 0.0
  %1698 = vmatpush1.msra.mxu0 0.0
  %1699 = vmatprep.mubr.f32.mxu0 0.0
  %1700 = vmatmul.mubr.f32.gmra.mrb[0].mxu0 %v1630
  %v1701 = vpop.f32.mrb[0].mxu0
  %v1702 = vadd.f32 0.0, %v1701
  %v1703 = vpop.f32.mrb[0].mxu0
  %1704 = vmatprep.mubr.f32.mxu0 0.0
  %1705 = vmatmul.mubr.f32.gmra.mrb[0].mxu0 %v1633
  %v1706 = vpop.f32.mrb[0].mxu0
  %v1707 = vadd.f32 0.0, %v1706
  %v1708 = vpop.f32.mrb[0].mxu0
  %1709 = vdwg.mxu0
  %v1710 = vadd.f32 %v1161, %v1702
  %v1711 = vadd.f32 %v1166, %v1707
  %s1712 = scalar_lea.vmem %s2, 288
  %v1713 = vld [vmem:[%s1712] sm:$0xff]
  %v1714 = vld [vmem:[%s1712 + $0x8] sm:$0xff]
  %v1715 = vld [vmem:[%s1712 + $0x10] sm:$0xff]
  %v1716 = vld [vmem:[%s1712 + $0x18] sm:$0xff]
  %s1717 = scalar_lea.vmem %s3, 9
  %v1718 = vld [vmem:[%s1717] sm:$0x1]
  %v1720 = vlaneseq
  %v1721 = vshrl.u32 %v1720, 7
  %v1722 = vsub.s32 0, %v1721
  %v1723 = vrot.slane %v1718, %v1722
  %1725 = vmatprep.subr.mxu0 0.0
  %1726 = vmatpush1.msra.mxu0 %v1713
  %1727 = vmatprep.subr.mxu0 0.0
  %1728 = vmatpush1.msra.mxu0 %v1714
  %1729 = vmatprep.subr.mxu0 0.0
  %1730 = vmatpush1.msra.mxu0 %v1715
  %1731 = vmatprep.subr.mxu0 0.0
  %1732 = vmatpush1.msra.mxu0 %v1716
  %1733 = vmatprep.subr.mxu0 0.0
  %1734 = vmatpush1.msra.mxu0 0.0
  %1735 = vmatprep.subr.mxu0 0.0
  %1736 = vmatpush1.msra.mxu0 0.0
  %1737 = vmatprep.subr.mxu0 0.0
  %1738 = vmatpush1.msra.mxu0 0.0
  %1739 = vmatprep.subr.mxu0 0.0
  %1740 = vmatpush1.msra.mxu0 0.0
  %1741 = vmatprep.subr.mxu0 0.0
  %1742 = vmatpush1.msra.mxu0 0.0
  %1743 = vmatprep.subr.mxu0 0.0
  %1744 = vmatpush1.msra.mxu0 0.0
  %1745 = vmatprep.subr.mxu0 0.0
  %1746 = vmatpush1.msra.mxu0 0.0
  %1747 = vmatprep.subr.mxu0 0.0
  %1748 = vmatpush1.msra.mxu0 0.0
  %1749 = vmatprep.subr.mxu0 0.0
  %1750 = vmatpush1.msra.mxu0 0.0
  %1751 = vmatprep.subr.mxu0 0.0
  %1752 = vmatpush1.msra.mxu0 0.0
  %1753 = vmatprep.subr.mxu0 0.0
  %1754 = vmatpush1.msra.mxu0 0.0
  %1755 = vmatprep.subr.mxu0 0.0
  %1756 = vmatpush1.msra.mxu0 0.0
  %1757 = vmatprep.subr.mxu0 0.0
  %1758 = vmatpush1.msra.mxu0 0.0
  %1759 = vmatprep.subr.mxu0 0.0
  %1760 = vmatpush1.msra.mxu0 0.0
  %1761 = vmatprep.subr.mxu0 0.0
  %1762 = vmatpush1.msra.mxu0 0.0
  %1763 = vmatprep.subr.mxu0 0.0
  %1764 = vmatpush1.msra.mxu0 0.0
  %1765 = vmatprep.subr.mxu0 0.0
  %1766 = vmatpush1.msra.mxu0 0.0
  %1767 = vmatprep.subr.mxu0 0.0
  %1768 = vmatpush1.msra.mxu0 0.0
  %1769 = vmatprep.subr.mxu0 0.0
  %1770 = vmatpush1.msra.mxu0 0.0
  %1771 = vmatprep.subr.mxu0 0.0
  %1772 = vmatpush1.msra.mxu0 0.0
  %1773 = vmatprep.subr.mxu0 0.0
  %1774 = vmatpush1.msra.mxu0 0.0
  %1775 = vmatprep.subr.mxu0 0.0
  %1776 = vmatpush1.msra.mxu0 0.0
  %1777 = vmatprep.subr.mxu0 0.0
  %1778 = vmatpush1.msra.mxu0 0.0
  %1779 = vmatprep.subr.mxu0 0.0
  %1780 = vmatpush1.msra.mxu0 0.0
  %1781 = vmatprep.subr.mxu0 0.0
  %1782 = vmatpush1.msra.mxu0 0.0
  %1783 = vmatprep.subr.mxu0 0.0
  %1784 = vmatpush1.msra.mxu0 0.0
  %1785 = vmatprep.subr.mxu0 0.0
  %1786 = vmatpush1.msra.mxu0 0.0
  %1787 = vmatprep.subr.mxu0 0.0
  %1788 = vmatpush1.msra.mxu0 0.0
  %1789 = vmatprep.mubr.f32.mxu0 0.0
  %1790 = vmatmul.mubr.f32.gmra.mrb[0].mxu0 %v94
  %v1791 = vpop.f32.mrb[0].mxu0
  %v1792 = vadd.f32 %v1723, %v1791
  %v1793 = vpop.f32.mrb[0].mxu0
  %1794 = vmatprep.mubr.f32.mxu0 0.0
  %1795 = vmatmul.mubr.f32.gmra.mrb[0].mxu0 %v97
  %v1796 = vpop.f32.mrb[0].mxu0
  %v1797 = vadd.f32 %v1723, %v1796
  %v1798 = vpop.f32.mrb[0].mxu0
  %1799 = vdwg.mxu0
  %s1800 = scalar_lea.vmem %s2, 320
  %v1801 = vld [vmem:[%s1800] sm:$0xff]
  %v1802 = vld [vmem:[%s1800 + $0x8] sm:$0xff]
  %v1803 = vld [vmem:[%s1800 + $0x10] sm:$0xff]
  %v1804 = vld [vmem:[%s1800 + $0x18] sm:$0xff]
  %s1805 = scalar_lea.vmem %s3, 10
  %v1806 = vld [vmem:[%s1805] sm:$0x1]
  %v1808 = vlaneseq
  %v1809 = vshrl.u32 %v1808, 7
  %v1810 = vsub.s32 0, %v1809
  %v1811 = vrot.slane %v1806, %v1810
  %1813 = vmatprep.subr.mxu0 0.0
  %1814 = vmatpush1.msra.mxu0 %v1801
  %1815 = vmatprep.subr.mxu0 0.0
  %1816 = vmatpush1.msra.mxu0 %v1802
  %1817 = vmatprep.subr.mxu0 0.0
  %1818 = vmatpush1.msra.mxu0 %v1803
  %1819 = vmatprep.subr.mxu0 0.0
  %1820 = vmatpush1.msra.mxu0 %v1804
  %1821 = vmatprep.subr.mxu0 0.0
  %1822 = vmatpush1.msra.mxu0 0.0
  %1823 = vmatprep.subr.mxu0 0.0
  %1824 = vmatpush1.msra.mxu0 0.0
  %1825 = vmatprep.subr.mxu0 0.0
  %1826 = vmatpush1.msra.mxu0 0.0
  %1827 = vmatprep.subr.mxu0 0.0
  %1828 = vmatpush1.msra.mxu0 0.0
  %1829 = vmatprep.subr.mxu0 0.0
  %1830 = vmatpush1.msra.mxu0 0.0
  %1831 = vmatprep.subr.mxu0 0.0
  %1832 = vmatpush1.msra.mxu0 0.0
  %1833 = vmatprep.subr.mxu0 0.0
  %1834 = vmatpush1.msra.mxu0 0.0
  %1835 = vmatprep.subr.mxu0 0.0
  %1836 = vmatpush1.msra.mxu0 0.0
  %1837 = vmatprep.subr.mxu0 0.0
  %1838 = vmatpush1.msra.mxu0 0.0
  %1839 = vmatprep.subr.mxu0 0.0
  %1840 = vmatpush1.msra.mxu0 0.0
  %1841 = vmatprep.subr.mxu0 0.0
  %1842 = vmatpush1.msra.mxu0 0.0
  %1843 = vmatprep.subr.mxu0 0.0
  %1844 = vmatpush1.msra.mxu0 0.0
  %1845 = vmatprep.subr.mxu0 0.0
  %1846 = vmatpush1.msra.mxu0 0.0
  %1847 = vmatprep.subr.mxu0 0.0
  %1848 = vmatpush1.msra.mxu0 0.0
  %1849 = vmatprep.subr.mxu0 0.0
  %1850 = vmatpush1.msra.mxu0 0.0
  %1851 = vmatprep.subr.mxu0 0.0
  %1852 = vmatpush1.msra.mxu0 0.0
  %1853 = vmatprep.subr.mxu0 0.0
  %1854 = vmatpush1.msra.mxu0 0.0
  %1855 = vmatprep.subr.mxu0 0.0
  %1856 = vmatpush1.msra.mxu0 0.0
  %1857 = vmatprep.subr.mxu0 0.0
  %1858 = vmatpush1.msra.mxu0 0.0
  %1859 = vmatprep.subr.mxu0 0.0
  %1860 = vmatpush1.msra.mxu0 0.0
  %1861 = vmatprep.subr.mxu0 0.0
  %1862 = vmatpush1.msra.mxu0 0.0
  %1863 = vmatprep.subr.mxu0 0.0
  %1864 = vmatpush1.msra.mxu0 0.0
  %1865 = vmatprep.subr.mxu0 0.0
  %1866 = vmatpush1.msra.mxu0 0.0
  %1867 = vmatprep.subr.mxu0 0.0
  %1868 = vmatpush1.msra.mxu0 0.0
  %1869 = vmatprep.subr.mxu0 0.0
  %1870 = vmatpush1.msra.mxu0 0.0
  %1871 = vmatprep.subr.mxu0 0.0
  %1872 = vmatpush1.msra.mxu0 0.0
  %1873 = vmatprep.subr.mxu0 0.0
  %1874 = vmatpush1.msra.mxu0 0.0
  %1875 = vmatprep.subr.mxu0 0.0
  %1876 = vmatpush1.msra.mxu0 0.0
  %1877 = vmatprep.mubr.f32.mxu0 0.0
  %1878 = vmatmul.mubr.f32.gmra.mrb[0].mxu0 %v94
  %v1879 = vpop.f32.mrb[0].mxu0
  %v1880 = vadd.f32 %v1811, %v1879
  %v1881 = vpop.f32.mrb[0].mxu0
  %1882 = vmatprep.mubr.f32.mxu0 0.0
  %1883 = vmatmul.mubr.f32.gmra.mrb[0].mxu0 %v97
  %v1884 = vpop.f32.mrb[0].mxu0
  %v1885 = vadd.f32 %v1811, %v1884
  %v1886 = vpop.f32.mrb[0].mxu0
  %1887 = vdwg.mxu0
  %s1888 = scalar_lea.vmem %s2, 352
  %v1889 = vld [vmem:[%s1888] sm:$0xff]
  %v1890 = vld [vmem:[%s1888 + $0x8] sm:$0xff]
  %v1891 = vld [vmem:[%s1888 + $0x10] sm:$0xff]
  %v1892 = vld [vmem:[%s1888 + $0x18] sm:$0xff]
  %s1893 = scalar_lea.vmem %s3, 11
  %v1894 = vld [vmem:[%s1893] sm:$0x1]
  %v1896 = vlaneseq
  %v1897 = vshrl.u32 %v1896, 7
  %v1898 = vsub.s32 0, %v1897
  %v1899 = vrot.slane %v1894, %v1898
  %1901 = vmatprep.subr.mxu0 0.0
  %1902 = vmatpush1.msra.mxu0 %v1889
  %1903 = vmatprep.subr.mxu0 0.0
  %1904 = vmatpush1.msra.mxu0 %v1890
  %1905 = vmatprep.subr.mxu0 0.0
  %1906 = vmatpush1.msra.mxu0 %v1891
  %1907 = vmatprep.subr.mxu0 0.0
  %1908 = vmatpush1.msra.mxu0 %v1892
  %1909 = vmatprep.subr.mxu0 0.0
  %1910 = vmatpush1.msra.mxu0 0.0
  %1911 = vmatprep.subr.mxu0 0.0
  %1912 = vmatpush1.msra.mxu0 0.0
  %1913 = vmatprep.subr.mxu0 0.0
  %1914 = vmatpush1.msra.mxu0 0.0
  %1915 = vmatprep.subr.mxu0 0.0
  %1916 = vmatpush1.msra.mxu0 0.0
  %1917 = vmatprep.subr.mxu0 0.0
  %1918 = vmatpush1.msra.mxu0 0.0
  %1919 = vmatprep.subr.mxu0 0.0
  %1920 = vmatpush1.msra.mxu0 0.0
  %1921 = vmatprep.subr.mxu0 0.0
  %1922 = vmatpush1.msra.mxu0 0.0
  %1923 = vmatprep.subr.mxu0 0.0
  %1924 = vmatpush1.msra.mxu0 0.0
  %1925 = vmatprep.subr.mxu0 0.0
  %1926 = vmatpush1.msra.mxu0 0.0
  %1927 = vmatprep.subr.mxu0 0.0
  %1928 = vmatpush1.msra.mxu0 0.0
  %1929 = vmatprep.subr.mxu0 0.0
  %1930 = vmatpush1.msra.mxu0 0.0
  %1931 = vmatprep.subr.mxu0 0.0
  %1932 = vmatpush1.msra.mxu0 0.0
  %1933 = vmatprep.subr.mxu0 0.0
  %1934 = vmatpush1.msra.mxu0 0.0
  %1935 = vmatprep.subr.mxu0 0.0
  %1936 = vmatpush1.msra.mxu0 0.0
  %1937 = vmatprep.subr.mxu0 0.0
  %1938 = vmatpush1.msra.mxu0 0.0
  %1939 = vmatprep.subr.mxu0 0.0
  %1940 = vmatpush1.msra.mxu0 0.0
  %1941 = vmatprep.subr.mxu0 0.0
  %1942 = vmatpush1.msra.mxu0 0.0
  %1943 = vmatprep.subr.mxu0 0.0
  %1944 = vmatpush1.msra.mxu0 0.0
  %1945 = vmatprep.subr.mxu0 0.0
  %1946 = vmatpush1.msra.mxu0 0.0
  %1947 = vmatprep.subr.mxu0 0.0
  %1948 = vmatpush1.msra.mxu0 0.0
  %1949 = vmatprep.subr.mxu0 0.0
  %1950 = vmatpush1.msra.mxu0 0.0
  %1951 = vmatprep.subr.mxu0 0.0
  %1952 = vmatpush1.msra.mxu0 0.0
  %1953 = vmatprep.subr.mxu0 0.0
  %1954 = vmatpush1.msra.mxu0 0.0
  %1955 = vmatprep.subr.mxu0 0.0
  %1956 = vmatpush1.msra.mxu0 0.0
  %1957 = vmatprep.subr.mxu0 0.0
  %1958 = vmatpush1.msra.mxu0 0.0
  %1959 = vmatprep.subr.mxu0 0.0
  %1960 = vmatpush1.msra.mxu0 0.0
  %1961 = vmatprep.subr.mxu0 0.0
  %1962 = vmatpush1.msra.mxu0 0.0
  %1963 = vmatprep.subr.mxu0 0.0
  %1964 = vmatpush1.msra.mxu0 0.0
  %1965 = vmatprep.mubr.f32.mxu0 0.0
  %1966 = vmatmul.mubr.f32.gmra.mrb[0].mxu0 %v94
  %v1967 = vpop.f32.mrb[0].mxu0
  %v1968 = vadd.f32 %v1899, %v1967
  %v1969 = vpop.f32.mrb[0].mxu0
  %1970 = vmatprep.mubr.f32.mxu0 0.0
  %1971 = vmatmul.mubr.f32.gmra.mrb[0].mxu0 %v97
  %v1972 = vpop.f32.mrb[0].mxu0
  %v1973 = vadd.f32 %v1899, %v1972
  %v1974 = vpop.f32.mrb[0].mxu0
  %1975 = vdwg.mxu0
  %v1977 = vsel %vm350, %v1792, 0
  %v1980 = vsel %vm350, %v1797, 0
  %v1983 = vsel %vm350, %v1880, 0
  %v1986 = vsel %vm350, %v1885, 0
  %1988 = vmatprep.subr.mxu0 0.0
  %1989 = vmatpush1.xpose.msra.mxu0 %v1983
  %1990 = vmatprep.subr.mxu0 0.0
  %1991 = vmatpush1.xpose.msra.mxu0 %v1986
  %1992 = vmatprep.subr.mxu0 0.0
  %1993 = vmatpush1.xpose.msra.mxu0 0.0
  %1994 = vmatprep.subr.mxu0 0.0
  %1995 = vmatpush1.xpose.msra.mxu0 0.0
  %1996 = vmatprep.subr.mxu0 0.0
  %1997 = vmatpush1.xpose.msra.mxu0 0.0
  %1998 = vmatprep.subr.mxu0 0.0
  %1999 = vmatpush1.xpose.msra.mxu0 0.0
  %2000 = vmatprep.subr.mxu0 0.0
  %2001 = vmatpush1.xpose.msra.mxu0 0.0
  %2002 = vmatprep.subr.mxu0 0.0
  %2003 = vmatpush1.xpose.msra.mxu0 0.0
  %2004 = vmatprep.subr.mxu0 0.0
  %2005 = vmatpush1.xpose.msra.mxu0 0.0
  %2006 = vmatprep.subr.mxu0 0.0
  %2007 = vmatpush1.xpose.msra.mxu0 0.0
  %2008 = vmatprep.subr.mxu0 0.0
  %2009 = vmatpush1.xpose.msra.mxu0 0.0
  %2010 = vmatprep.subr.mxu0 0.0
  %2011 = vmatpush1.xpose.msra.mxu0 0.0
  %2012 = vmatprep.subr.mxu0 0.0
  %2013 = vmatpush1.xpose.msra.mxu0 0.0
  %2014 = vmatprep.subr.mxu0 0.0
  %2015 = vmatpush1.xpose.msra.mxu0 0.0
  %2016 = vmatprep.subr.mxu0 0.0
  %2017 = vmatpush1.xpose.msra.mxu0 0.0
  %2018 = vmatprep.subr.mxu0 0.0
  %2019 = vmatpush1.xpose.msra.mxu0 0.0
  %2020 = vmatprep.subr.mxu0 0.0
  %2021 = vmatpush1.xpose.msra.mxu0 0.0
  %2022 = vmatprep.subr.mxu0 0.0
  %2023 = vmatpush1.xpose.msra.mxu0 0.0
  %2024 = vmatprep.subr.mxu0 0.0
  %2025 = vmatpush1.xpose.msra.mxu0 0.0
  %2026 = vmatprep.subr.mxu0 0.0
  %2027 = vmatpush1.xpose.msra.mxu0 0.0
  %2028 = vmatprep.subr.mxu0 0.0
  %2029 = vmatpush1.xpose.msra.mxu0 0.0
  %2030 = vmatprep.subr.mxu0 0.0
  %2031 = vmatpush1.xpose.msra.mxu0 0.0
  %2032 = vmatprep.subr.mxu0 0.0
  %2033 = vmatpush1.xpose.msra.mxu0 0.0
  %2034 = vmatprep.subr.mxu0 0.0
  %2035 = vmatpush1.xpose.msra.mxu0 0.0
  %2036 = vmatprep.subr.mxu0 0.0
  %2037 = vmatpush1.xpose.msra.mxu0 0.0
  %2038 = vmatprep.subr.mxu0 0.0
  %2039 = vmatpush1.xpose.msra.mxu0 0.0
  %2040 = vmatprep.subr.mxu0 0.0
  %2041 = vmatpush1.xpose.msra.mxu0 0.0
  %2042 = vmatprep.subr.mxu0 0.0
  %2043 = vmatpush1.xpose.msra.mxu0 0.0
  %2044 = vmatprep.subr.mxu0 0.0
  %2045 = vmatpush1.xpose.msra.mxu0 0.0
  %2046 = vmatprep.subr.mxu0 0.0
  %2047 = vmatpush1.xpose.msra.mxu0 0.0
  %2048 = vmatprep.subr.mxu0 0.0
  %2049 = vmatpush1.xpose.msra.mxu0 0.0
  %2050 = vmatprep.subr.mxu0 0.0
  %2051 = vmatpush1.xpose.msra.mxu0 0.0
  %2052 = vmatprep.mubr.f32.mxu0 0.0
  %2053 = vmatmul.mubr.f32.gmra.mrb[0].mxu0 %v1977
  %v2054 = vpop.f32.mrb[0].mxu0
  %v2055 = vadd.f32 0.0, %v2054
  %v2056 = vpop.f32.mrb[0].mxu0
  %2057 = vmatprep.mubr.f32.mxu0 0.0
  %2058 = vmatmul.mubr.f32.gmra.mrb[0].mxu0 %v1980
  %v2059 = vpop.f32.mrb[0].mxu0
  %v2060 = vadd.f32 0.0, %v2059
  %v2061 = vpop.f32.mrb[0].mxu0
  %2062 = vdwg.mxu0
  %v2063 = vmul.f32 %v2055, 0.35355338
  %v2064 = vmul.f32 %v2060, 0.35355338
  %v2065 = vadd.f32 %v2063, %v35
  %v2066 = vadd.f32 %v2064, %v36
  %v2067 = vsel %vm442, %v2065, -inf
  %2068 = vmax.xlane.f32.xlu0 %v2067
  %v2069 = vpop.xlane.xlu0 %2068
  %v2070 = vsel %vm442, %v2066, -inf
  %2071 = vmax.xlane.f32.xlu0 %v2070
  %v2072 = vpop.xlane.xlu0 %2071
  %v2073 = vsub.f32 %v2065, %v2069
  %v2074 = vsub.f32 %v2066, %v2072
  %v2075 = vmul.f32 %v2073, 1.442695
  %v2076 = vpow.pop %v2075
  %v2077 = vmul.f32 %v2074, 1.442695
  %v2078 = vpow.pop %v2077
  %v2079 = vsel %vm442, %v2076, 0.0
  %2080 = vadd.xlane.f32.xlu0 %v2079
  %v2081 = vpop.xlane.xlu0 %2080
  %v2082 = vsel %vm442, %v2078, 0.0
  %2083 = vadd.xlane.f32.xlu0 %v2082
  %v2084 = vpop.xlane.xlu0 %2083
  %v2085 = vrcp.pop %v2081
  %v2086 = vrcp.pop %v2084
  %v2087 = vmul.f32 %v2076, %v2085
  %v2088 = vmul.f32 %v2078, %v2086
  %v2090 = vsel %vm442, %v2087, 0
  %v2093 = vsel %vm442, %v2088, 0
  %2095 = vmatprep.subr.mxu0 0.0
  %2096 = vmatpush1.msra.mxu0 %v1968
  %2097 = vmatprep.subr.mxu0 0.0
  %2098 = vmatpush1.msra.mxu0 %v1973
  %2099 = vmatprep.subr.mxu0 0.0
  %2100 = vmatpush1.msra.mxu0 0.0
  %2101 = vmatprep.subr.mxu0 0.0
  %2102 = vmatpush1.msra.mxu0 0.0
  %2103 = vmatprep.subr.mxu0 0.0
  %2104 = vmatpush1.msra.mxu0 0.0
  %2105 = vmatprep.subr.mxu0 0.0
  %2106 = vmatpush1.msra.mxu0 0.0
  %2107 = vmatprep.subr.mxu0 0.0
  %2108 = vmatpush1.msra.mxu0 0.0
  %2109 = vmatprep.subr.mxu0 0.0
  %2110 = vmatpush1.msra.mxu0 0.0
  %2111 = vmatprep.subr.mxu0 0.0
  %2112 = vmatpush1.msra.mxu0 0.0
  %2113 = vmatprep.subr.mxu0 0.0
  %2114 = vmatpush1.msra.mxu0 0.0
  %2115 = vmatprep.subr.mxu0 0.0
  %2116 = vmatpush1.msra.mxu0 0.0
  %2117 = vmatprep.subr.mxu0 0.0
  %2118 = vmatpush1.msra.mxu0 0.0
  %2119 = vmatprep.subr.mxu0 0.0
  %2120 = vmatpush1.msra.mxu0 0.0
  %2121 = vmatprep.subr.mxu0 0.0
  %2122 = vmatpush1.msra.mxu0 0.0
  %2123 = vmatprep.subr.mxu0 0.0
  %2124 = vmatpush1.msra.mxu0 0.0
  %2125 = vmatprep.subr.mxu0 0.0
  %2126 = vmatpush1.msra.mxu0 0.0
  %2127 = vmatprep.subr.mxu0 0.0
  %2128 = vmatpush1.msra.mxu0 0.0
  %2129 = vmatprep.subr.mxu0 0.0
  %2130 = vmatpush1.msra.mxu0 0.0
  %2131 = vmatprep.subr.mxu0 0.0
  %2132 = vmatpush1.msra.mxu0 0.0
  %2133 = vmatprep.subr.mxu0 0.0
  %2134 = vmatpush1.msra.mxu0 0.0
  %2135 = vmatprep.subr.mxu0 0.0
  %2136 = vmatpush1.msra.mxu0 0.0
  %2137 = vmatprep.subr.mxu0 0.0
  %2138 = vmatpush1.msra.mxu0 0.0
  %2139 = vmatprep.subr.mxu0 0.0
  %2140 = vmatpush1.msra.mxu0 0.0
  %2141 = vmatprep.subr.mxu0 0.0
  %2142 = vmatpush1.msra.mxu0 0.0
  %2143 = vmatprep.subr.mxu0 0.0
  %2144 = vmatpush1.msra.mxu0 0.0
  %2145 = vmatprep.subr.mxu0 0.0
  %2146 = vmatpush1.msra.mxu0 0.0
  %2147 = vmatprep.subr.mxu0 0.0
  %2148 = vmatpush1.msra.mxu0 0.0
  %2149 = vmatprep.subr.mxu0 0.0
  %2150 = vmatpush1.msra.mxu0 0.0
  %2151 = vmatprep.subr.mxu0 0.0
  %2152 = vmatpush1.msra.mxu0 0.0
  %2153 = vmatprep.subr.mxu0 0.0
  %2154 = vmatpush1.msra.mxu0 0.0
  %2155 = vmatprep.subr.mxu0 0.0
  %2156 = vmatpush1.msra.mxu0 0.0
  %2157 = vmatprep.subr.mxu0 0.0
  %2158 = vmatpush1.msra.mxu0 0.0
  %2159 = vmatprep.mubr.f32.mxu0 0.0
  %2160 = vmatmul.mubr.f32.gmra.mrb[0].mxu0 %v2090
  %v2161 = vpop.f32.mrb[0].mxu0
  %v2162 = vadd.f32 0.0, %v2161
  %v2163 = vpop.f32.mrb[0].mxu0
  %2164 = vmatprep.mubr.f32.mxu0 0.0
  %2165 = vmatmul.mubr.f32.gmra.mrb[0].mxu0 %v2093
  %v2166 = vpop.f32.mrb[0].mxu0
  %v2167 = vadd.f32 0.0, %v2166
  %v2168 = vpop.f32.mrb[0].mxu0
  %2169 = vdwg.mxu0
  %s2170 = scalar_lea.vmem %s4, 24
  %v2171 = vld [vmem:[%s2170] sm:$0xff]
  %v2173 = vsel %vm350, %v2162, 0
  %v2176 = vsel %vm350, %v2167, 0
  %2178 = vmatprep.subr.mxu0 0.0
  %2179 = vmatpush1.msra.mxu0 %v2171
  %2180 = vmatprep.subr.mxu0 0.0
  %2181 = vmatpush1.msra.mxu0 0.0
  %2182 = vmatprep.subr.mxu0 0.0
  %2183 = vmatpush1.msra.mxu0 0.0
  %2184 = vmatprep.subr.mxu0 0.0
  %2185 = vmatpush1.msra.mxu0 0.0
  %2186 = vmatprep.subr.mxu0 0.0
  %2187 = vmatpush1.msra.mxu0 0.0
  %2188 = vmatprep.subr.mxu0 0.0
  %2189 = vmatpush1.msra.mxu0 0.0
  %2190 = vmatprep.subr.mxu0 0.0
  %2191 = vmatpush1.msra.mxu0 0.0
  %2192 = vmatprep.subr.mxu0 0.0
  %2193 = vmatpush1.msra.mxu0 0.0
  %2194 = vmatprep.subr.mxu0 0.0
  %2195 = vmatpush1.msra.mxu0 0.0
  %2196 = vmatprep.subr.mxu0 0.0
  %2197 = vmatpush1.msra.mxu0 0.0
  %2198 = vmatprep.subr.mxu0 0.0
  %2199 = vmatpush1.msra.mxu0 0.0
  %2200 = vmatprep.subr.mxu0 0.0
  %2201 = vmatpush1.msra.mxu0 0.0
  %2202 = vmatprep.subr.mxu0 0.0
  %2203 = vmatpush1.msra.mxu0 0.0
  %2204 = vmatprep.subr.mxu0 0.0
  %2205 = vmatpush1.msra.mxu0 0.0
  %2206 = vmatprep.subr.mxu0 0.0
  %2207 = vmatpush1.msra.mxu0 0.0
  %2208 = vmatprep.subr.mxu0 0.0
  %2209 = vmatpush1.msra.mxu0 0.0
  %2210 = vmatprep.subr.mxu0 0.0
  %2211 = vmatpush1.msra.mxu0 0.0
  %2212 = vmatprep.subr.mxu0 0.0
  %2213 = vmatpush1.msra.mxu0 0.0
  %2214 = vmatprep.subr.mxu0 0.0
  %2215 = vmatpush1.msra.mxu0 0.0
  %2216 = vmatprep.subr.mxu0 0.0
  %2217 = vmatpush1.msra.mxu0 0.0
  %2218 = vmatprep.subr.mxu0 0.0
  %2219 = vmatpush1.msra.mxu0 0.0
  %2220 = vmatprep.subr.mxu0 0.0
  %2221 = vmatpush1.msra.mxu0 0.0
  %2222 = vmatprep.subr.mxu0 0.0
  %2223 = vmatpush1.msra.mxu0 0.0
  %2224 = vmatprep.subr.mxu0 0.0
  %2225 = vmatpush1.msra.mxu0 0.0
  %2226 = vmatprep.subr.mxu0 0.0
  %2227 = vmatpush1.msra.mxu0 0.0
  %2228 = vmatprep.subr.mxu0 0.0
  %2229 = vmatpush1.msra.mxu0 0.0
  %2230 = vmatprep.subr.mxu0 0.0
  %2231 = vmatpush1.msra.mxu0 0.0
  %2232 = vmatprep.subr.mxu0 0.0
  %2233 = vmatpush1.msra.mxu0 0.0
  %2234 = vmatprep.subr.mxu0 0.0
  %2235 = vmatpush1.msra.mxu0 0.0
  %2236 = vmatprep.subr.mxu0 0.0
  %2237 = vmatpush1.msra.mxu0 0.0
  %2238 = vmatprep.subr.mxu0 0.0
  %2239 = vmatpush1.msra.mxu0 0.0
  %2240 = vmatprep.subr.mxu0 0.0
  %2241 = vmatpush1.msra.mxu0 0.0
  %2242 = vmatprep.mubr.f32.mxu0 0.0
  %2243 = vmatmul.mubr.f32.gmra.mrb[0].mxu0 %v2173
  %v2244 = vpop.f32.mrb[0].mxu0
  %v2245 = vadd.f32 0.0, %v2244
  %v2246 = vpop.f32.mrb[0].mxu0
  %2247 = vmatprep.mubr.f32.mxu0 0.0
  %2248 = vmatmul.mubr.f32.gmra.mrb[0].mxu0 %v2176
  %v2249 = vpop.f32.mrb[0].mxu0
  %v2250 = vadd.f32 0.0, %v2249
  %v2251 = vpop.f32.mrb[0].mxu0
  %2252 = vdwg.mxu0
  %v2253 = vadd.f32 %v1710, %v2245
  %v2254 = vadd.f32 %v1711, %v2250
  %v2255 = vlaneseq
  %v2256 = vshrl.u32 %v2255, 7
  %v2257 = vsub.s32 0, %v2256
  %v2258 = vrot.slane %v81, %v2257
  %v2259 = vadd.f32 %v2253, %v2258
  %v2260 = vadd.f32 %v2254, %v2258
  %v2261 = vadd.f32 %v2259, %v79
  %v2262 = vadd.f32 %v2260, %v80
  %v2263 = vsel %vm37, %v2261, 0.0
  %2264 = vadd.xlane.f32.xlu0 %v2263
  %v2265 = vpop.xlane.xlu0 %2264
  %v2266 = vsel %vm37, %v2262, 0.0
  %2267 = vadd.xlane.f32.xlu0 %v2266
  %v2268 = vpop.xlane.xlu0 %2267
  %v2269 = vmul.f32 %v2265, %v44
  %v2270 = vmul.f32 %v2268, %v44
  %v2271 = vmul.f32 %v2261, %v2261
  %v2272 = vmul.f32 %v2262, %v2262
  %v2273 = vsel %vm37, %v2271, 0.0
  %2274 = vadd.xlane.f32.xlu0 %v2273
  %v2275 = vpop.xlane.xlu0 %2274
  %v2276 = vsel %vm37, %v2272, 0.0
  %2277 = vadd.xlane.f32.xlu0 %v2276
  %v2278 = vpop.xlane.xlu0 %2277
  %v2279 = vmul.f32 %v2275, %v44
  %v2280 = vmul.f32 %v2278, %v44
  %v2281 = vmul.f32 %v2269, %v2269
  %v2282 = vmul.f32 %v2270, %v2270
  %v2283 = vsub.f32 %v2279, %v2281
  %v2284 = vsub.f32 %v2280, %v2282
  %v2285 = vsub.f32 %v2261, %v2269
  %v2286 = vsub.f32 %v2262, %v2270
  %v2287 = vadd.f32 %v2283, 1e-05
  %v2288 = vadd.f32 %v2284, 1e-05
  %v2289 = vrsqrt.pop %v2287
  %v2290 = vrsqrt.pop %v2288
  %v2291 = vmul.f32 %v2285, %v2289
  %v2292 = vmul.f32 %v2286, %v2290
  %v2293 = vlaneseq
  %v2294 = vshrl.u32 %v2293, 7
  %v2295 = vsub.s32 1, %v2294
  %v2296 = vrot.slane %v81, %v2295
  %v2297 = vmul.f32 %v2291, %v2296
  %v2298 = vmul.f32 %v2292, %v2296
  %v2299 = vlaneseq
  %v2300 = vshrl.u32 %v2299, 7
  %v2301 = vsub.s32 2, %v2300
  %v2302 = vrot.slane %v81, %v2301
  %v2303 = vadd.f32 %v2297, %v2302
  %v2304 = vadd.f32 %v2298, %v2302
  %v2305 = vld [vmem:[%s5] sm:$0xff]
  %v2306 = vld [vmem:[%s5 + $0x8] sm:$0xff]
  %v2307 = vld [vmem:[%s5 + $0x10] sm:$0xff]
  %v2308 = vld [vmem:[%s5 + $0x18] sm:$0xff]
  %v2309 = vlaneseq
  %v2310 = vshrl.u32 %v2309, 7
  %v2311 = vsub.s32 3, %v2310
  %v2312 = vrot.slane %v81, %v2311
  %v2314 = vsel %vm37, %v2303, 0
  %v2317 = vsel %vm37, %v2304, 0
  %2319 = vmatprep.subr.mxu0 0.0
  %2320 = vmatpush1.msra.mxu0 %v2305
  %2321 = vmatprep.subr.mxu0 0.0
  %2322 = vmatpush1.msra.mxu0 %v2306
  %2323 = vmatprep.subr.mxu0 0.0
  %2324 = vmatpush1.msra.mxu0 %v2307
  %2325 = vmatprep.subr.mxu0 0.0
  %2326 = vmatpush1.msra.mxu0 %v2308
  %2327 = vmatprep.subr.mxu0 0.0
  %2328 = vmatpush1.msra.mxu0 0.0
  %2329 = vmatprep.subr.mxu0 0.0
  %2330 = vmatpush1.msra.mxu0 0.0
  %2331 = vmatprep.subr.mxu0 0.0
  %2332 = vmatpush1.msra.mxu0 0.0
  %2333 = vmatprep.subr.mxu0 0.0
  %2334 = vmatpush1.msra.mxu0 0.0
  %2335 = vmatprep.subr.mxu0 0.0
  %2336 = vmatpush1.msra.mxu0 0.0
  %2337 = vmatprep.subr.mxu0 0.0
  %2338 = vmatpush1.msra.mxu0 0.0
  %2339 = vmatprep.subr.mxu0 0.0
  %2340 = vmatpush1.msra.mxu0 0.0
  %2341 = vmatprep.subr.mxu0 0.0
  %2342 = vmatpush1.msra.mxu0 0.0
  %2343 = vmatprep.subr.mxu0 0.0
  %2344 = vmatpush1.msra.mxu0 0.0
  %2345 = vmatprep.subr.mxu0 0.0
  %2346 = vmatpush1.msra.mxu0 0.0
  %2347 = vmatprep.subr.mxu0 0.0
  %2348 = vmatpush1.msra.mxu0 0.0
  %2349 = vmatprep.subr.mxu0 0.0
  %2350 = vmatpush1.msra.mxu0 0.0
  %2351 = vmatprep.subr.mxu0 0.0
  %2352 = vmatpush1.msra.mxu0 0.0
  %2353 = vmatprep.subr.mxu0 0.0
  %2354 = vmatpush1.msra.mxu0 0.0
  %2355 = vmatprep.subr.mxu0 0.0
  %2356 = vmatpush1.msra.mxu0 0.0
  %2357 = vmatprep.subr.mxu0 0.0
  %2358 = vmatpush1.msra.mxu0 0.0
  %2359 = vmatprep.subr.mxu0 0.0
  %2360 = vmatpush1.msra.mxu0 0.0
  %2361 = vmatprep.subr.mxu0 0.0
  %2362 = vmatpush1.msra.mxu0 0.0
  %2363 = vmatprep.subr.mxu0 0.0
  %2364 = vmatpush1.msra.mxu0 0.0
  %2365 = vmatprep.subr.mxu0 0.0
  %2366 = vmatpush1.msra.mxu0 0.0
  %2367 = vmatprep.subr.mxu0 0.0
  %2368 = vmatpush1.msra.mxu0 0.0
  %2369 = vmatprep.subr.mxu0 0.0
  %2370 = vmatpush1.msra.mxu0 0.0
  %2371 = vmatprep.subr.mxu0 0.0
  %2372 = vmatpush1.msra.mxu0 0.0
  %2373 = vmatprep.subr.mxu0 0.0
  %2374 = vmatpush1.msra.mxu0 0.0
  %2375 = vmatprep.subr.mxu0 0.0
  %2376 = vmatpush1.msra.mxu0 0.0
  %2377 = vmatprep.subr.mxu0 0.0
  %2378 = vmatpush1.msra.mxu0 0.0
  %2379 = vmatprep.subr.mxu0 0.0
  %2380 = vmatpush1.msra.mxu0 0.0
  %2381 = vmatprep.subr.mxu0 0.0
  %2382 = vmatpush1.msra.mxu0 0.0
  %2383 = vmatprep.mubr.f32.mxu0 0.0
  %2384 = vmatmul.mubr.f32.gmra.mrb[0].mxu0 %v2314
  %v2385 = vpop.f32.mrb[0].mxu0
  %v2386 = vadd.f32 %v2312, %v2385
  %v2387 = vpop.f32.mrb[0].mxu0
  %2388 = vmatprep.mubr.f32.mxu0 0.0
  %2389 = vmatmul.mubr.f32.gmra.mrb[0].mxu0 %v2317
  %v2390 = vpop.f32.mrb[0].mxu0
  %v2391 = vadd.f32 %v2312, %v2390
  %v2392 = vpop.f32.mrb[0].mxu0
  %2393 = vdwg.mxu0
  %v2394 = vmul.f32 %v2386, 0.5
  %v2395 = vmul.f32 %v2391, 0.5
  %v2396 = vmul.f32 %v2386, 0.70710677
  %v2397 = vmul.f32 %v2391, 0.70710677
  %v2398 = verf.f32.pop %v2396
  %v2399 = verf.f32.pop %v2397
  %v2400 = vadd.f32 %v2398, 1.0
  %v2401 = vadd.f32 %v2399, 1.0
  %v2402 = vmul.f32 %v2394, %v2400
  %v2403 = vmul.f32 %v2395, %v2401
  %v2404 = vld [vmem:[%s6] sm:$0xff]
  %v2405 = vld [vmem:[%s6 + $0x8] sm:$0xff]
  %v2406 = vld [vmem:[%s6 + $0x10] sm:$0xff]
  %v2407 = vld [vmem:[%s6 + $0x18] sm:$0xff]
  %v2408 = vld [vmem:[%s6 + $0x20] sm:$0xff]
  %v2409 = vld [vmem:[%s6 + $0x28] sm:$0xff]
  %v2410 = vld [vmem:[%s6 + $0x30] sm:$0xff]
  %v2411 = vld [vmem:[%s6 + $0x38] sm:$0xff]
  %v2412 = vld [vmem:[%s6 + $0x40] sm:$0xff]
  %v2413 = vld [vmem:[%s6 + $0x48] sm:$0xff]
  %v2414 = vld [vmem:[%s6 + $0x50] sm:$0xff]
  %v2415 = vld [vmem:[%s6 + $0x58] sm:$0xff]
  %v2416 = vld [vmem:[%s6 + $0x60] sm:$0xff]
  %v2417 = vld [vmem:[%s6 + $0x68] sm:$0xff]
  %v2418 = vld [vmem:[%s6 + $0x70] sm:$0xff]
  %v2419 = vld [vmem:[%s6 + $0x78] sm:$0xff]
  %v2420 = vlaneseq
  %v2421 = vshrl.u32 %v2420, 7
  %v2422 = vsub.s32 4, %v2421
  %v2423 = vrot.slane %v81, %v2422
  %2424 = vmatprep.subr.mxu0 0.0
  %2425 = vmatpush1.msra.mxu0 %v2404
  %2426 = vmatprep.subr.mxu0 0.0
  %2427 = vmatpush1.msra.mxu0 %v2405
  %2428 = vmatprep.subr.mxu0 0.0
  %2429 = vmatpush1.msra.mxu0 %v2406
  %2430 = vmatprep.subr.mxu0 0.0
  %2431 = vmatpush1.msra.mxu0 %v2407
  %2432 = vmatprep.subr.mxu0 0.0
  %2433 = vmatpush1.msra.mxu0 %v2408
  %2434 = vmatprep.subr.mxu0 0.0
  %2435 = vmatpush1.msra.mxu0 %v2409
  %2436 = vmatprep.subr.mxu0 0.0
  %2437 = vmatpush1.msra.mxu0 %v2410
  %2438 = vmatprep.subr.mxu0 0.0
  %2439 = vmatpush1.msra.mxu0 %v2411
  %2440 = vmatprep.subr.mxu0 0.0
  %2441 = vmatpush1.msra.mxu0 %v2412
  %2442 = vmatprep.subr.mxu0 0.0
  %2443 = vmatpush1.msra.mxu0 %v2413
  %2444 = vmatprep.subr.mxu0 0.0
  %2445 = vmatpush1.msra.mxu0 %v2414
  %2446 = vmatprep.subr.mxu0 0.0
  %2447 = vmatpush1.msra.mxu0 %v2415
  %2448 = vmatprep.subr.mxu0 0.0
  %2449 = vmatpush1.msra.mxu0 %v2416
  %2450 = vmatprep.subr.mxu0 0.0
  %2451 = vmatpush1.msra.mxu0 %v2417
  %2452 = vmatprep.subr.mxu0 0.0
  %2453 = vmatpush1.msra.mxu0 %v2418
  %2454 = vmatprep.subr.mxu0 0.0
  %2455 = vmatpush1.msra.mxu0 %v2419
  %2456 = vmatprep.subr.mxu0 0.0
  %2457 = vmatpush1.msra.mxu0 0.0
  %2458 = vmatprep.subr.mxu0 0.0
  %2459 = vmatpush1.msra.mxu0 0.0
  %2460 = vmatprep.subr.mxu0 0.0
  %2461 = vmatpush1.msra.mxu0 0.0
  %2462 = vmatprep.subr.mxu0 0.0
  %2463 = vmatpush1.msra.mxu0 0.0
  %2464 = vmatprep.subr.mxu0 0.0
  %2465 = vmatpush1.msra.mxu0 0.0
  %2466 = vmatprep.subr.mxu0 0.0
  %2467 = vmatpush1.msra.mxu0 0.0
  %2468 = vmatprep.subr.mxu0 0.0
  %2469 = vmatpush1.msra.mxu0 0.0
  %2470 = vmatprep.subr.mxu0 0.0
  %2471 = vmatpush1.msra.mxu0 0.0
  %2472 = vmatprep.subr.mxu0 0.0
  %2473 = vmatpush1.msra.mxu0 0.0
  %2474 = vmatprep.subr.mxu0 0.0
  %2475 = vmatpush1.msra.mxu0 0.0
  %2476 = vmatprep.subr.mxu0 0.0
  %2477 = vmatpush1.msra.mxu0 0.0
  %2478 = vmatprep.subr.mxu0 0.0
  %2479 = vmatpush1.msra.mxu0 0.0
  %2480 = vmatprep.subr.mxu0 0.0
  %2481 = vmatpush1.msra.mxu0 0.0
  %2482 = vmatprep.subr.mxu0 0.0
  %2483 = vmatpush1.msra.mxu0 0.0
  %2484 = vmatprep.subr.mxu0 0.0
  %2485 = vmatpush1.msra.mxu0 0.0
  %2486 = vmatprep.subr.mxu0 0.0
  %2487 = vmatpush1.msra.mxu0 0.0
  %2488 = vmatprep.mubr.f32.mxu0 0.0
  %2489 = vmatmul.mubr.f32.gmra.mrb[0].mxu0 %v2402
  %v2490 = vpop.f32.mrb[0].mxu0
  %v2491 = vadd.f32 %v2423, %v2490
  %v2492 = vpop.f32.mrb[0].mxu0
  %2493 = vmatprep.mubr.f32.mxu0 0.0
  %2494 = vmatmul.mubr.f32.gmra.mrb[0].mxu0 %v2403
  %v2495 = vpop.f32.mrb[0].mxu0
  %v2496 = vadd.f32 %v2423, %v2495
  %v2497 = vpop.f32.mrb[0].mxu0
  %2498 = vdwg.mxu0
  %v2499 = vadd.f32 %v2491, %v2303
  %v2500 = vadd.f32 %v2496, %v2304
  %v2501 = vsel %vm37, %v2499, 0.0
  %2502 = vadd.xlane.f32.xlu0 %v2501
  %v2503 = vpop.xlane.xlu0 %2502
  %v2504 = vsel %vm37, %v2500, 0.0
  %2505 = vadd.xlane.f32.xlu0 %v2504
  %v2506 = vpop.xlane.xlu0 %2505
  %v2507 = vmul.f32 %v2503, %v44
  %v2508 = vmul.f32 %v2506, %v44
  %v2509 = vmul.f32 %v2499, %v2499
  %v2510 = vmul.f32 %v2500, %v2500
  %v2511 = vsel %vm37, %v2509, 0.0
  %2512 = vadd.xlane.f32.xlu0 %v2511
  %v2513 = vpop.xlane.xlu0 %2512
  %v2514 = vsel %vm37, %v2510, 0.0
  %2515 = vadd.xlane.f32.xlu0 %v2514
  %v2516 = vpop.xlane.xlu0 %2515
  %v2517 = vmul.f32 %v2513, %v44
  %v2518 = vmul.f32 %v2516, %v44
  %v2519 = vmul.f32 %v2507, %v2507
  %v2520 = vmul.f32 %v2508, %v2508
  %v2521 = vsub.f32 %v2517, %v2519
  %v2522 = vsub.f32 %v2518, %v2520
  %v2523 = vsub.f32 %v2499, %v2507
  %v2524 = vsub.f32 %v2500, %v2508
  %v2525 = vadd.f32 %v2521, 1e-05
  %v2526 = vadd.f32 %v2522, 1e-05
  %v2527 = vrsqrt.pop %v2525
  %v2528 = vrsqrt.pop %v2526
  %v2529 = vmul.f32 %v2523, %v2527
  %v2530 = vmul.f32 %v2524, %v2528
  %v2531 = vlaneseq
  %v2532 = vshrl.u32 %v2531, 7
  %v2533 = vsub.s32 5, %v2532
  %v2534 = vrot.slane %v81, %v2533
  %v2535 = vmul.f32 %v2529, %v2534
  %v2536 = vmul.f32 %v2530, %v2534
  %v2537 = vlaneseq
  %v2538 = vshrl.u32 %v2537, 7
  %v2539 = vsub.s32 6, %v2538
  %v2540 = vrot.slane %v81, %v2539
  %v2541 = vadd.f32 %v2535, %v2540
  %v2542 = vadd.f32 %v2536, %v2540
  %s2543 = scalar_lea.vmem %s7, 8
  %v2544 = vld [vmem:[%s2543] sm:$0xff]
  %s2545 = scalar_lea.vmem %s2, 384
  %v2546 = vld [vmem:[%s2545] sm:$0xff]
  %v2547 = vld [vmem:[%s2545 + $0x8] sm:$0xff]
  %v2548 = vld [vmem:[%s2545 + $0x10] sm:$0xff]
  %v2549 = vld [vmem:[%s2545 + $0x18] sm:$0xff]
  %s2550 = scalar_lea.vmem %s3, 12
  %v2551 = vld [vmem:[%s2550] sm:$0x1]
  %v2553 = vlaneseq
  %v2554 = vshrl.u32 %v2553, 7
  %v2555 = vsub.s32 0, %v2554
  %v2556 = vrot.slane %v2551, %v2555
  %v2559 = vsel %vm37, %v2541, 0
  %v2562 = vsel %vm37, %v2542, 0
  %2564 = vmatprep.subr.mxu0 0.0
  %2565 = vmatpush1.msra.mxu0 %v2546
  %2566 = vmatprep.subr.mxu0 0.0
  %2567 = vmatpush1.msra.mxu0 %v2547
  %2568 = vmatprep.subr.mxu0 0.0
  %2569 = vmatpush1.msra.mxu0 %v2548
  %2570 = vmatprep.subr.mxu0 0.0
  %2571 = vmatpush1.msra.mxu0 %v2549
  %2572 = vmatprep.subr.mxu0 0.0
  %2573 = vmatpush1.msra.mxu0 0.0
  %2574 = vmatprep.subr.mxu0 0.0
  %2575 = vmatpush1.msra.mxu0 0.0
  %2576 = vmatprep.subr.mxu0 0.0
  %2577 = vmatpush1.msra.mxu0 0.0
  %2578 = vmatprep.subr.mxu0 0.0
  %2579 = vmatpush1.msra.mxu0 0.0
  %2580 = vmatprep.subr.mxu0 0.0
  %2581 = vmatpush1.msra.mxu0 0.0
  %2582 = vmatprep.subr.mxu0 0.0
  %2583 = vmatpush1.msra.mxu0 0.0
  %2584 = vmatprep.subr.mxu0 0.0
  %2585 = vmatpush1.msra.mxu0 0.0
  %2586 = vmatprep.subr.mxu0 0.0
  %2587 = vmatpush1.msra.mxu0 0.0
  %2588 = vmatprep.subr.mxu0 0.0
  %2589 = vmatpush1.msra.mxu0 0.0
  %2590 = vmatprep.subr.mxu0 0.0
  %2591 = vmatpush1.msra.mxu0 0.0
  %2592 = vmatprep.subr.mxu0 0.0
  %2593 = vmatpush1.msra.mxu0 0.0
  %2594 = vmatprep.subr.mxu0 0.0
  %2595 = vmatpush1.msra.mxu0 0.0
  %2596 = vmatprep.subr.mxu0 0.0
  %2597 = vmatpush1.msra.mxu0 0.0
  %2598 = vmatprep.subr.mxu0 0.0
  %2599 = vmatpush1.msra.mxu0 0.0
  %2600 = vmatprep.subr.mxu0 0.0
  %2601 = vmatpush1.msra.mxu0 0.0
  %2602 = vmatprep.subr.mxu0 0.0
  %2603 = vmatpush1.msra.mxu0 0.0
  %2604 = vmatprep.subr.mxu0 0.0
  %2605 = vmatpush1.msra.mxu0 0.0
  %2606 = vmatprep.subr.mxu0 0.0
  %2607 = vmatpush1.msra.mxu0 0.0
  %2608 = vmatprep.subr.mxu0 0.0
  %2609 = vmatpush1.msra.mxu0 0.0
  %2610 = vmatprep.subr.mxu0 0.0
  %2611 = vmatpush1.msra.mxu0 0.0
  %2612 = vmatprep.subr.mxu0 0.0
  %2613 = vmatpush1.msra.mxu0 0.0
  %2614 = vmatprep.subr.mxu0 0.0
  %2615 = vmatpush1.msra.mxu0 0.0
  %2616 = vmatprep.subr.mxu0 0.0
  %2617 = vmatpush1.msra.mxu0 0.0
  %2618 = vmatprep.subr.mxu0 0.0
  %2619 = vmatpush1.msra.mxu0 0.0
  %2620 = vmatprep.subr.mxu0 0.0
  %2621 = vmatpush1.msra.mxu0 0.0
  %2622 = vmatprep.subr.mxu0 0.0
  %2623 = vmatpush1.msra.mxu0 0.0
  %2624 = vmatprep.subr.mxu0 0.0
  %2625 = vmatpush1.msra.mxu0 0.0
  %2626 = vmatprep.subr.mxu0 0.0
  %2627 = vmatpush1.msra.mxu0 0.0
  %2628 = vmatprep.mubr.f32.mxu0 0.0
  %2629 = vmatmul.mubr.f32.gmra.mrb[0].mxu0 %v2559
  %v2630 = vpop.f32.mrb[0].mxu0
  %v2631 = vadd.f32 %v2556, %v2630
  %v2632 = vpop.f32.mrb[0].mxu0
  %2633 = vmatprep.mubr.f32.mxu0 0.0
  %2634 = vmatmul.mubr.f32.gmra.mrb[0].mxu0 %v2562
  %v2635 = vpop.f32.mrb[0].mxu0
  %v2636 = vadd.f32 %v2556, %v2635
  %v2637 = vpop.f32.mrb[0].mxu0
  %2638 = vdwg.mxu0
  %s2639 = scalar_lea.vmem %s2, 416
  %v2640 = vld [vmem:[%s2639] sm:$0xff]
  %v2641 = vld [vmem:[%s2639 + $0x8] sm:$0xff]
  %v2642 = vld [vmem:[%s2639 + $0x10] sm:$0xff]
  %v2643 = vld [vmem:[%s2639 + $0x18] sm:$0xff]
  %s2644 = scalar_lea.vmem %s3, 13
  %v2645 = vld [vmem:[%s2644] sm:$0x1]
  %v2647 = vlaneseq
  %v2648 = vshrl.u32 %v2647, 7
  %v2649 = vsub.s32 0, %v2648
  %v2650 = vrot.slane %v2645, %v2649
  %2652 = vmatprep.subr.mxu0 0.0
  %2653 = vmatpush1.msra.mxu0 %v2640
  %2654 = vmatprep.subr.mxu0 0.0
  %2655 = vmatpush1.msra.mxu0 %v2641
  %2656 = vmatprep.subr.mxu0 0.0
  %2657 = vmatpush1.msra.mxu0 %v2642
  %2658 = vmatprep.subr.mxu0 0.0
  %2659 = vmatpush1.msra.mxu0 %v2643
  %2660 = vmatprep.subr.mxu0 0.0
  %2661 = vmatpush1.msra.mxu0 0.0
  %2662 = vmatprep.subr.mxu0 0.0
  %2663 = vmatpush1.msra.mxu0 0.0
  %2664 = vmatprep.subr.mxu0 0.0
  %2665 = vmatpush1.msra.mxu0 0.0
  %2666 = vmatprep.subr.mxu0 0.0
  %2667 = vmatpush1.msra.mxu0 0.0
  %2668 = vmatprep.subr.mxu0 0.0
  %2669 = vmatpush1.msra.mxu0 0.0
  %2670 = vmatprep.subr.mxu0 0.0
  %2671 = vmatpush1.msra.mxu0 0.0
  %2672 = vmatprep.subr.mxu0 0.0
  %2673 = vmatpush1.msra.mxu0 0.0
  %2674 = vmatprep.subr.mxu0 0.0
  %2675 = vmatpush1.msra.mxu0 0.0
  %2676 = vmatprep.subr.mxu0 0.0
  %2677 = vmatpush1.msra.mxu0 0.0
  %2678 = vmatprep.subr.mxu0 0.0
  %2679 = vmatpush1.msra.mxu0 0.0
  %2680 = vmatprep.subr.mxu0 0.0
  %2681 = vmatpush1.msra.mxu0 0.0
  %2682 = vmatprep.subr.mxu0 0.0
  %2683 = vmatpush1.msra.mxu0 0.0
  %2684 = vmatprep.subr.mxu0 0.0
  %2685 = vmatpush1.msra.mxu0 0.0
  %2686 = vmatprep.subr.mxu0 0.0
  %2687 = vmatpush1.msra.mxu0 0.0
  %2688 = vmatprep.subr.mxu0 0.0
  %2689 = vmatpush1.msra.mxu0 0.0
  %2690 = vmatprep.subr.mxu0 0.0
  %2691 = vmatpush1.msra.mxu0 0.0
  %2692 = vmatprep.subr.mxu0 0.0
  %2693 = vmatpush1.msra.mxu0 0.0
  %2694 = vmatprep.subr.mxu0 0.0
  %2695 = vmatpush1.msra.mxu0 0.0
  %2696 = vmatprep.subr.mxu0 0.0
  %2697 = vmatpush1.msra.mxu0 0.0
  %2698 = vmatprep.subr.mxu0 0.0
  %2699 = vmatpush1.msra.mxu0 0.0
  %2700 = vmatprep.subr.mxu0 0.0
  %2701 = vmatpush1.msra.mxu0 0.0
  %2702 = vmatprep.subr.mxu0 0.0
  %2703 = vmatpush1.msra.mxu0 0.0
  %2704 = vmatprep.subr.mxu0 0.0
  %2705 = vmatpush1.msra.mxu0 0.0
  %2706 = vmatprep.subr.mxu0 0.0
  %2707 = vmatpush1.msra.mxu0 0.0
  %2708 = vmatprep.subr.mxu0 0.0
  %2709 = vmatpush1.msra.mxu0 0.0
  %2710 = vmatprep.subr.mxu0 0.0
  %2711 = vmatpush1.msra.mxu0 0.0
  %2712 = vmatprep.subr.mxu0 0.0
  %2713 = vmatpush1.msra.mxu0 0.0
  %2714 = vmatprep.subr.mxu0 0.0
  %2715 = vmatpush1.msra.mxu0 0.0
  %2716 = vmatprep.mubr.f32.mxu0 0.0
  %2717 = vmatmul.mubr.f32.gmra.mrb[0].mxu0 %v2559
  %v2718 = vpop.f32.mrb[0].mxu0
  %v2719 = vadd.f32 %v2650, %v2718
  %v2720 = vpop.f32.mrb[0].mxu0
  %2721 = vmatprep.mubr.f32.mxu0 0.0
  %2722 = vmatmul.mubr.f32.gmra.mrb[0].mxu0 %v2562
  %v2723 = vpop.f32.mrb[0].mxu0
  %v2724 = vadd.f32 %v2650, %v2723
  %v2725 = vpop.f32.mrb[0].mxu0
  %2726 = vdwg.mxu0
  %s2727 = scalar_lea.vmem %s2, 448
  %v2728 = vld [vmem:[%s2727] sm:$0xff]
  %v2729 = vld [vmem:[%s2727 + $0x8] sm:$0xff]
  %v2730 = vld [vmem:[%s2727 + $0x10] sm:$0xff]
  %v2731 = vld [vmem:[%s2727 + $0x18] sm:$0xff]
  %s2732 = scalar_lea.vmem %s3, 14
  %v2733 = vld [vmem:[%s2732] sm:$0x1]
  %v2735 = vlaneseq
  %v2736 = vshrl.u32 %v2735, 7
  %v2737 = vsub.s32 0, %v2736
  %v2738 = vrot.slane %v2733, %v2737
  %2740 = vmatprep.subr.mxu0 0.0
  %2741 = vmatpush1.msra.mxu0 %v2728
  %2742 = vmatprep.subr.mxu0 0.0
  %2743 = vmatpush1.msra.mxu0 %v2729
  %2744 = vmatprep.subr.mxu0 0.0
  %2745 = vmatpush1.msra.mxu0 %v2730
  %2746 = vmatprep.subr.mxu0 0.0
  %2747 = vmatpush1.msra.mxu0 %v2731
  %2748 = vmatprep.subr.mxu0 0.0
  %2749 = vmatpush1.msra.mxu0 0.0
  %2750 = vmatprep.subr.mxu0 0.0
  %2751 = vmatpush1.msra.mxu0 0.0
  %2752 = vmatprep.subr.mxu0 0.0
  %2753 = vmatpush1.msra.mxu0 0.0
  %2754 = vmatprep.subr.mxu0 0.0
  %2755 = vmatpush1.msra.mxu0 0.0
  %2756 = vmatprep.subr.mxu0 0.0
  %2757 = vmatpush1.msra.mxu0 0.0
  %2758 = vmatprep.subr.mxu0 0.0
  %2759 = vmatpush1.msra.mxu0 0.0
  %2760 = vmatprep.subr.mxu0 0.0
  %2761 = vmatpush1.msra.mxu0 0.0
  %2762 = vmatprep.subr.mxu0 0.0
  %2763 = vmatpush1.msra.mxu0 0.0
  %2764 = vmatprep.subr.mxu0 0.0
  %2765 = vmatpush1.msra.mxu0 0.0
  %2766 = vmatprep.subr.mxu0 0.0
  %2767 = vmatpush1.msra.mxu0 0.0
  %2768 = vmatprep.subr.mxu0 0.0
  %2769 = vmatpush1.msra.mxu0 0.0
  %2770 = vmatprep.subr.mxu0 0.0
  %2771 = vmatpush1.msra.mxu0 0.0
  %2772 = vmatprep.subr.mxu0 0.0
  %2773 = vmatpush1.msra.mxu0 0.0
  %2774 = vmatprep.subr.mxu0 0.0
  %2775 = vmatpush1.msra.mxu0 0.0
  %2776 = vmatprep.subr.mxu0 0.0
  %2777 = vmatpush1.msra.mxu0 0.0
  %2778 = vmatprep.subr.mxu0 0.0
  %2779 = vmatpush1.msra.mxu0 0.0
  %2780 = vmatprep.subr.mxu0 0.0
  %2781 = vmatpush1.msra.mxu0 0.0
  %2782 = vmatprep.subr.mxu0 0.0
  %2783 = vmatpush1.msra.mxu0 0.0
  %2784 = vmatprep.subr.mxu0 0.0
  %2785 = vmatpush1.msra.mxu0 0.0
  %2786 = vmatprep.subr.mxu0 0.0
  %2787 = vmatpush1.msra.mxu0 0.0
  %2788 = vmatprep.subr.mxu0 0.0
  %2789 = vmatpush1.msra.mxu0 0.0
  %2790 = vmatprep.subr.mxu0 0.0
  %2791 = vmatpush1.msra.mxu0 0.0
  %2792 = vmatprep.subr.mxu0 0.0
  %2793 = vmatpush1.msra.mxu0 0.0
  %2794 = vmatprep.subr.mxu0 0.0
  %2795 = vmatpush1.msra.mxu0 0.0
  %2796 = vmatprep.subr.mxu0 0.0
  %2797 = vmatpush1.msra.mxu0 0.0
  %2798 = vmatprep.subr.mxu0 0.0
  %2799 = vmatpush1.msra.mxu0 0.0
  %2800 = vmatprep.subr.mxu0 0.0
  %2801 = vmatpush1.msra.mxu0 0.0
  %2802 = vmatprep.subr.mxu0 0.0
  %2803 = vmatpush1.msra.mxu0 0.0
  %2804 = vmatprep.mubr.f32.mxu0 0.0
  %2805 = vmatmul.mubr.f32.gmra.mrb[0].mxu0 %v2559
  %v2806 = vpop.f32.mrb[0].mxu0
  %v2807 = vadd.f32 %v2738, %v2806
  %v2808 = vpop.f32.mrb[0].mxu0
  %2809 = vmatprep.mubr.f32.mxu0 0.0
  %2810 = vmatmul.mubr.f32.gmra.mrb[0].mxu0 %v2562
  %v2811 = vpop.f32.mrb[0].mxu0
  %v2812 = vadd.f32 %v2738, %v2811
  %v2813 = vpop.f32.mrb[0].mxu0
  %2814 = vdwg.mxu0
  %v2816 = vsel %vm350, %v2631, 0
  %v2819 = vsel %vm350, %v2636, 0
  %v2822 = vsel %vm350, %v2719, 0
  %v2825 = vsel %vm350, %v2724, 0
  %2827 = vmatprep.subr.mxu0 0.0
  %2828 = vmatpush1.xpose.msra.mxu0 %v2822
  %2829 = vmatprep.subr.mxu0 0.0
  %2830 = vmatpush1.xpose.msra.mxu0 %v2825
  %2831 = vmatprep.subr.mxu0 0.0
  %2832 = vmatpush1.xpose.msra.mxu0 0.0
  %2833 = vmatprep.subr.mxu0 0.0
  %2834 = vmatpush1.xpose.msra.mxu0 0.0
  %2835 = vmatprep.subr.mxu0 0.0
  %2836 = vmatpush1.xpose.msra.mxu0 0.0
  %2837 = vmatprep.subr.mxu0 0.0
  %2838 = vmatpush1.xpose.msra.mxu0 0.0
  %2839 = vmatprep.subr.mxu0 0.0
  %2840 = vmatpush1.xpose.msra.mxu0 0.0
  %2841 = vmatprep.subr.mxu0 0.0
  %2842 = vmatpush1.xpose.msra.mxu0 0.0
  %2843 = vmatprep.subr.mxu0 0.0
  %2844 = vmatpush1.xpose.msra.mxu0 0.0
  %2845 = vmatprep.subr.mxu0 0.0
  %2846 = vmatpush1.xpose.msra.mxu0 0.0
  %2847 = vmatprep.subr.mxu0 0.0
  %2848 = vmatpush1.xpose.msra.mxu0 0.0
  %2849 = vmatprep.subr.mxu0 0.0
  %2850 = vmatpush1.xpose.msra.mxu0 0.0
  %2851 = vmatprep.subr.mxu0 0.0
  %2852 = vmatpush1.xpose.msra.mxu0 0.0
  %2853 = vmatprep.subr.mxu0 0.0
  %2854 = vmatpush1.xpose.msra.mxu0 0.0
  %2855 = vmatprep.subr.mxu0 0.0
  %2856 = vmatpush1.xpose.msra.mxu0 0.0
  %2857 = vmatprep.subr.mxu0 0.0
  %2858 = vmatpush1.xpose.msra.mxu0 0.0
  %2859 = vmatprep.subr.mxu0 0.0
  %2860 = vmatpush1.xpose.msra.mxu0 0.0
  %2861 = vmatprep.subr.mxu0 0.0
  %2862 = vmatpush1.xpose.msra.mxu0 0.0
  %2863 = vmatprep.subr.mxu0 0.0
  %2864 = vmatpush1.xpose.msra.mxu0 0.0
  %2865 = vmatprep.subr.mxu0 0.0
  %2866 = vmatpush1.xpose.msra.mxu0 0.0
  %2867 = vmatprep.subr.mxu0 0.0
  %2868 = vmatpush1.xpose.msra.mxu0 0.0
  %2869 = vmatprep.subr.mxu0 0.0
  %2870 = vmatpush1.xpose.msra.mxu0 0.0
  %2871 = vmatprep.subr.mxu0 0.0
  %2872 = vmatpush1.xpose.msra.mxu0 0.0
  %2873 = vmatprep.subr.mxu0 0.0
  %2874 = vmatpush1.xpose.msra.mxu0 0.0
  %2875 = vmatprep.subr.mxu0 0.0
  %2876 = vmatpush1.xpose.msra.mxu0 0.0
  %2877 = vmatprep.subr.mxu0 0.0
  %2878 = vmatpush1.xpose.msra.mxu0 0.0
  %2879 = vmatprep.subr.mxu0 0.0
  %2880 = vmatpush1.xpose.msra.mxu0 0.0
  %2881 = vmatprep.subr.mxu0 0.0
  %2882 = vmatpush1.xpose.msra.mxu0 0.0
  %2883 = vmatprep.subr.mxu0 0.0
  %2884 = vmatpush1.xpose.msra.mxu0 0.0
  %2885 = vmatprep.subr.mxu0 0.0
  %2886 = vmatpush1.xpose.msra.mxu0 0.0
  %2887 = vmatprep.subr.mxu0 0.0
  %2888 = vmatpush1.xpose.msra.mxu0 0.0
  %2889 = vmatprep.subr.mxu0 0.0
  %2890 = vmatpush1.xpose.msra.mxu0 0.0
  %2891 = vmatprep.mubr.f32.mxu0 0.0
  %2892 = vmatmul.mubr.f32.gmra.mrb[0].mxu0 %v2816
  %v2893 = vpop.f32.mrb[0].mxu0
  %v2894 = vadd.f32 0.0, %v2893
  %v2895 = vpop.f32.mrb[0].mxu0
  %2896 = vmatprep.mubr.f32.mxu0 0.0
  %2897 = vmatmul.mubr.f32.gmra.mrb[0].mxu0 %v2819
  %v2898 = vpop.f32.mrb[0].mxu0
  %v2899 = vadd.f32 0.0, %v2898
  %v2900 = vpop.f32.mrb[0].mxu0
  %2901 = vdwg.mxu0
  %v2902 = vmul.f32 %v2894, 0.35355338
  %v2903 = vmul.f32 %v2899, 0.35355338
  %v2904 = vadd.f32 %v2902, %v35
  %v2905 = vadd.f32 %v2903, %v36
  %v2906 = vsel %vm442, %v2904, -inf
  %2907 = vmax.xlane.f32.xlu0 %v2906
  %v2908 = vpop.xlane.xlu0 %2907
  %v2909 = vsel %vm442, %v2905, -inf
  %2910 = vmax.xlane.f32.xlu0 %v2909
  %v2911 = vpop.xlane.xlu0 %2910
  %v2912 = vsub.f32 %v2904, %v2908
  %v2913 = vsub.f32 %v2905, %v2911
  %v2914 = vmul.f32 %v2912, 1.442695
  %v2915 = vpow.pop %v2914
  %v2916 = vmul.f32 %v2913, 1.442695
  %v2917 = vpow.pop %v2916
  %v2918 = vsel %vm442, %v2915, 0.0
  %2919 = vadd.xlane.f32.xlu0 %v2918
  %v2920 = vpop.xlane.xlu0 %2919
  %v2921 = vsel %vm442, %v2917, 0.0
  %2922 = vadd.xlane.f32.xlu0 %v2921
  %v2923 = vpop.xlane.xlu0 %2922
  %v2924 = vrcp.pop %v2920
  %v2925 = vrcp.pop %v2923
  %v2926 = vmul.f32 %v2915, %v2924
  %v2927 = vmul.f32 %v2917, %v2925
  %v2929 = vsel %vm442, %v2926, 0
  %v2932 = vsel %vm442, %v2927, 0
  %2934 = vmatprep.subr.mxu0 0.0
  %2935 = vmatpush1.msra.mxu0 %v2807
  %2936 = vmatprep.subr.mxu0 0.0
  %2937 = vmatpush1.msra.mxu0 %v2812
  %2938 = vmatprep.subr.mxu0 0.0
  %2939 = vmatpush1.msra.mxu0 0.0
  %2940 = vmatprep.subr.mxu0 0.0
  %2941 = vmatpush1.msra.mxu0 0.0
  %2942 = vmatprep.subr.mxu0 0.0
  %2943 = vmatpush1.msra.mxu0 0.0
  %2944 = vmatprep.subr.mxu0 0.0
  %2945 = vmatpush1.msra.mxu0 0.0
  %2946 = vmatprep.subr.mxu0 0.0
  %2947 = vmatpush1.msra.mxu0 0.0
  %2948 = vmatprep.subr.mxu0 0.0
  %2949 = vmatpush1.msra.mxu0 0.0
  %2950 = vmatprep.subr.mxu0 0.0
  %2951 = vmatpush1.msra.mxu0 0.0
  %2952 = vmatprep.subr.mxu0 0.0
  %2953 = vmatpush1.msra.mxu0 0.0
  %2954 = vmatprep.subr.mxu0 0.0
  %2955 = vmatpush1.msra.mxu0 0.0
  %2956 = vmatprep.subr.mxu0 0.0
  %2957 = vmatpush1.msra.mxu0 0.0
  %2958 = vmatprep.subr.mxu0 0.0
  %2959 = vmatpush1.msra.mxu0 0.0
  %2960 = vmatprep.subr.mxu0 0.0
  %2961 = vmatpush1.msra.mxu0 0.0
  %2962 = vmatprep.subr.mxu0 0.0
  %2963 = vmatpush1.msra.mxu0 0.0
  %2964 = vmatprep.subr.mxu0 0.0
  %2965 = vmatpush1.msra.mxu0 0.0
  %2966 = vmatprep.subr.mxu0 0.0
  %2967 = vmatpush1.msra.mxu0 0.0
  %2968 = vmatprep.subr.mxu0 0.0
  %2969 = vmatpush1.msra.mxu0 0.0
  %2970 = vmatprep.subr.mxu0 0.0
  %2971 = vmatpush1.msra.mxu0 0.0
  %2972 = vmatprep.subr.mxu0 0.0
  %2973 = vmatpush1.msra.mxu0 0.0
  %2974 = vmatprep.subr.mxu0 0.0
  %2975 = vmatpush1.msra.mxu0 0.0
  %2976 = vmatprep.subr.mxu0 0.0
  %2977 = vmatpush1.msra.mxu0 0.0
  %2978 = vmatprep.subr.mxu0 0.0
  %2979 = vmatpush1.msra.mxu0 0.0
  %2980 = vmatprep.subr.mxu0 0.0
  %2981 = vmatpush1.msra.mxu0 0.0
  %2982 = vmatprep.subr.mxu0 0.0
  %2983 = vmatpush1.msra.mxu0 0.0
  %2984 = vmatprep.subr.mxu0 0.0
  %2985 = vmatpush1.msra.mxu0 0.0
  %2986 = vmatprep.subr.mxu0 0.0
  %2987 = vmatpush1.msra.mxu0 0.0
  %2988 = vmatprep.subr.mxu0 0.0
  %2989 = vmatpush1.msra.mxu0 0.0
  %2990 = vmatprep.subr.mxu0 0.0
  %2991 = vmatpush1.msra.mxu0 0.0
  %2992 = vmatprep.subr.mxu0 0.0
  %2993 = vmatpush1.msra.mxu0 0.0
  %2994 = vmatprep.subr.mxu0 0.0
  %2995 = vmatpush1.msra.mxu0 0.0
  %2996 = vmatprep.subr.mxu0 0.0
  %2997 = vmatpush1.msra.mxu0 0.0
  %2998 = vmatprep.mubr.f32.mxu0 0.0
  %2999 = vmatmul.mubr.f32.gmra.mrb[0].mxu0 %v2929
  %v3000 = vpop.f32.mrb[0].mxu0
  %v3001 = vadd.f32 0.0, %v3000
  %v3002 = vpop.f32.mrb[0].mxu0
  %3003 = vmatprep.mubr.f32.mxu0 0.0
  %3004 = vmatmul.mubr.f32.gmra.mrb[0].mxu0 %v2932
  %v3005 = vpop.f32.mrb[0].mxu0
  %v3006 = vadd.f32 0.0, %v3005
  %v3007 = vpop.f32.mrb[0].mxu0
  %3008 = vdwg.mxu0
  %s3009 = scalar_lea.vmem %s4, 32
  %v3010 = vld [vmem:[%s3009] sm:$0xff]
  %s3011 = scalar_lea.vmem %s2, 480
  %v3012 = vld [vmem:[%s3011] sm:$0xff]
  %v3013 = vld [vmem:[%s3011 + $0x8] sm:$0xff]
  %v3014 = vld [vmem:[%s3011 + $0x10] sm:$0xff]
  %v3015 = vld [vmem:[%s3011 + $0x18] sm:$0xff]
  %s3016 = scalar_lea.vmem %s3, 15
  %v3017 = vld [vmem:[%s3016] sm:$0x1]
  %v3019 = vlaneseq
  %v3020 = vshrl.u32 %v3019, 7
  %v3021 = vsub.s32 0, %v3020
  %v3022 = vrot.slane %v3017, %v3021
  %3024 = vmatprep.subr.mxu0 0.0
  %3025 = vmatpush1.msra.mxu0 %v3012
  %3026 = vmatprep.subr.mxu0 0.0
  %3027 = vmatpush1.msra.mxu0 %v3013
  %3028 = vmatprep.subr.mxu0 0.0
  %3029 = vmatpush1.msra.mxu0 %v3014
  %3030 = vmatprep.subr.mxu0 0.0
  %3031 = vmatpush1.msra.mxu0 %v3015
  %3032 = vmatprep.subr.mxu0 0.0
  %3033 = vmatpush1.msra.mxu0 0.0
  %3034 = vmatprep.subr.mxu0 0.0
  %3035 = vmatpush1.msra.mxu0 0.0
  %3036 = vmatprep.subr.mxu0 0.0
  %3037 = vmatpush1.msra.mxu0 0.0
  %3038 = vmatprep.subr.mxu0 0.0
  %3039 = vmatpush1.msra.mxu0 0.0
  %3040 = vmatprep.subr.mxu0 0.0
  %3041 = vmatpush1.msra.mxu0 0.0
  %3042 = vmatprep.subr.mxu0 0.0
  %3043 = vmatpush1.msra.mxu0 0.0
  %3044 = vmatprep.subr.mxu0 0.0
  %3045 = vmatpush1.msra.mxu0 0.0
  %3046 = vmatprep.subr.mxu0 0.0
  %3047 = vmatpush1.msra.mxu0 0.0
  %3048 = vmatprep.subr.mxu0 0.0
  %3049 = vmatpush1.msra.mxu0 0.0
  %3050 = vmatprep.subr.mxu0 0.0
  %3051 = vmatpush1.msra.mxu0 0.0
  %3052 = vmatprep.subr.mxu0 0.0
  %3053 = vmatpush1.msra.mxu0 0.0
  %3054 = vmatprep.subr.mxu0 0.0
  %3055 = vmatpush1.msra.mxu0 0.0
  %3056 = vmatprep.subr.mxu0 0.0
  %3057 = vmatpush1.msra.mxu0 0.0
  %3058 = vmatprep.subr.mxu0 0.0
  %3059 = vmatpush1.msra.mxu0 0.0
  %3060 = vmatprep.subr.mxu0 0.0
  %3061 = vmatpush1.msra.mxu0 0.0
  %3062 = vmatprep.subr.mxu0 0.0
  %3063 = vmatpush1.msra.mxu0 0.0
  %3064 = vmatprep.subr.mxu0 0.0
  %3065 = vmatpush1.msra.mxu0 0.0
  %3066 = vmatprep.subr.mxu0 0.0
  %3067 = vmatpush1.msra.mxu0 0.0
  %3068 = vmatprep.subr.mxu0 0.0
  %3069 = vmatpush1.msra.mxu0 0.0
  %3070 = vmatprep.subr.mxu0 0.0
  %3071 = vmatpush1.msra.mxu0 0.0
  %3072 = vmatprep.subr.mxu0 0.0
  %3073 = vmatpush1.msra.mxu0 0.0
  %3074 = vmatprep.subr.mxu0 0.0
  %3075 = vmatpush1.msra.mxu0 0.0
  %3076 = vmatprep.subr.mxu0 0.0
  %3077 = vmatpush1.msra.mxu0 0.0
  %3078 = vmatprep.subr.mxu0 0.0
  %3079 = vmatpush1.msra.mxu0 0.0
  %3080 = vmatprep.subr.mxu0 0.0
  %3081 = vmatpush1.msra.mxu0 0.0
  %3082 = vmatprep.subr.mxu0 0.0
  %3083 = vmatpush1.msra.mxu0 0.0
  %3084 = vmatprep.subr.mxu0 0.0
  %3085 = vmatpush1.msra.mxu0 0.0
  %3086 = vmatprep.subr.mxu0 0.0
  %3087 = vmatpush1.msra.mxu0 0.0
  %3088 = vmatprep.mubr.f32.mxu0 0.0
  %3089 = vmatmul.mubr.f32.gmra.mrb[0].mxu0 %v2559
  %v3090 = vpop.f32.mrb[0].mxu0
  %v3091 = vadd.f32 %v3022, %v3090
  %v3092 = vpop.f32.mrb[0].mxu0
  %3093 = vmatprep.mubr.f32.mxu0 0.0
  %3094 = vmatmul.mubr.f32.gmra.mrb[0].mxu0 %v2562
  %v3095 = vpop.f32.mrb[0].mxu0
  %v3096 = vadd.f32 %v3022, %v3095
  %v3097 = vpop.f32.mrb[0].mxu0
  %3098 = vdwg.mxu0
  %s3099 = scalar_lea.vmem %s2, 512
  %v3100 = vld [vmem:[%s3099] sm:$0xff]
  %v3101 = vld [vmem:[%s3099 + $0x8] sm:$0xff]
  %v3102 = vld [vmem:[%s3099 + $0x10] sm:$0xff]
  %v3103 = vld [vmem:[%s3099 + $0x18] sm:$0xff]
  %s3104 = scalar_lea.vmem %s3, 16
  %v3105 = vld [vmem:[%s3104] sm:$0x1]
  %v3107 = vlaneseq
  %v3108 = vshrl.u32 %v3107, 7
  %v3109 = vsub.s32 0, %v3108
  %v3110 = vrot.slane %v3105, %v3109
  %3112 = vmatprep.subr.mxu0 0.0
  %3113 = vmatpush1.msra.mxu0 %v3100
  %3114 = vmatprep.subr.mxu0 0.0
  %3115 = vmatpush1.msra.mxu0 %v3101
  %3116 = vmatprep.subr.mxu0 0.0
  %3117 = vmatpush1.msra.mxu0 %v3102
  %3118 = vmatprep.subr.mxu0 0.0
  %3119 = vmatpush1.msra.mxu0 %v3103
  %3120 = vmatprep.subr.mxu0 0.0
  %3121 = vmatpush1.msra.mxu0 0.0
  %3122 = vmatprep.subr.mxu0 0.0
  %3123 = vmatpush1.msra.mxu0 0.0
  %3124 = vmatprep.subr.mxu0 0.0
  %3125 = vmatpush1.msra.mxu0 0.0
  %3126 = vmatprep.subr.mxu0 0.0
  %3127 = vmatpush1.msra.mxu0 0.0
  %3128 = vmatprep.subr.mxu0 0.0
  %3129 = vmatpush1.msra.mxu0 0.0
  %3130 = vmatprep.subr.mxu0 0.0
  %3131 = vmatpush1.msra.mxu0 0.0
  %3132 = vmatprep.subr.mxu0 0.0
  %3133 = vmatpush1.msra.mxu0 0.0
  %3134 = vmatprep.subr.mxu0 0.0
  %3135 = vmatpush1.msra.mxu0 0.0
  %3136 = vmatprep.subr.mxu0 0.0
  %3137 = vmatpush1.msra.mxu0 0.0
  %3138 = vmatprep.subr.mxu0 0.0
  %3139 = vmatpush1.msra.mxu0 0.0
  %3140 = vmatprep.subr.mxu0 0.0
  %3141 = vmatpush1.msra.mxu0 0.0
  %3142 = vmatprep.subr.mxu0 0.0
  %3143 = vmatpush1.msra.mxu0 0.0
  %3144 = vmatprep.subr.mxu0 0.0
  %3145 = vmatpush1.msra.mxu0 0.0
  %3146 = vmatprep.subr.mxu0 0.0
  %3147 = vmatpush1.msra.mxu0 0.0
  %3148 = vmatprep.subr.mxu0 0.0
  %3149 = vmatpush1.msra.mxu0 0.0
  %3150 = vmatprep.subr.mxu0 0.0
  %3151 = vmatpush1.msra.mxu0 0.0
  %3152 = vmatprep.subr.mxu0 0.0
  %3153 = vmatpush1.msra.mxu0 0.0
  %3154 = vmatprep.subr.mxu0 0.0
  %3155 = vmatpush1.msra.mxu0 0.0
  %3156 = vmatprep.subr.mxu0 0.0
  %3157 = vmatpush1.msra.mxu0 0.0
  %3158 = vmatprep.subr.mxu0 0.0
  %3159 = vmatpush1.msra.mxu0 0.0
  %3160 = vmatprep.subr.mxu0 0.0
  %3161 = vmatpush1.msra.mxu0 0.0
  %3162 = vmatprep.subr.mxu0 0.0
  %3163 = vmatpush1.msra.mxu0 0.0
  %3164 = vmatprep.subr.mxu0 0.0
  %3165 = vmatpush1.msra.mxu0 0.0
  %3166 = vmatprep.subr.mxu0 0.0
  %3167 = vmatpush1.msra.mxu0 0.0
  %3168 = vmatprep.subr.mxu0 0.0
  %3169 = vmatpush1.msra.mxu0 0.0
  %3170 = vmatprep.subr.mxu0 0.0
  %3171 = vmatpush1.msra.mxu0 0.0
  %3172 = vmatprep.subr.mxu0 0.0
  %3173 = vmatpush1.msra.mxu0 0.0
  %3174 = vmatprep.subr.mxu0 0.0
  %3175 = vmatpush1.msra.mxu0 0.0
  %3176 = vmatprep.mubr.f32.mxu0 0.0
  %3177 = vmatmul.mubr.f32.gmra.mrb[0].mxu0 %v2559
  %v3178 = vpop.f32.mrb[0].mxu0
  %v3179 = vadd.f32 %v3110, %v3178
  %v3180 = vpop.f32.mrb[0].mxu0
  %3181 = vmatprep.mubr.f32.mxu0 0.0
  %3182 = vmatmul.mubr.f32.gmra.mrb[0].mxu0 %v2562
  %v3183 = vpop.f32.mrb[0].mxu0
  %v3184 = vadd.f32 %v3110, %v3183
  %v3185 = vpop.f32.mrb[0].mxu0
  %3186 = vdwg.mxu0
  %s3187 = scalar_lea.vmem %s2, 544
  %v3188 = vld [vmem:[%s3187] sm:$0xff]
  %v3189 = vld [vmem:[%s3187 + $0x8] sm:$0xff]
  %v3190 = vld [vmem:[%s3187 + $0x10] sm:$0xff]
  %v3191 = vld [vmem:[%s3187 + $0x18] sm:$0xff]
  %s3192 = scalar_lea.vmem %s3, 17
  %v3193 = vld [vmem:[%s3192] sm:$0x1]
  %v3195 = vlaneseq
  %v3196 = vshrl.u32 %v3195, 7
  %v3197 = vsub.s32 0, %v3196
  %v3198 = vrot.slane %v3193, %v3197
  %3200 = vmatprep.subr.mxu0 0.0
  %3201 = vmatpush1.msra.mxu0 %v3188
  %3202 = vmatprep.subr.mxu0 0.0
  %3203 = vmatpush1.msra.mxu0 %v3189
  %3204 = vmatprep.subr.mxu0 0.0
  %3205 = vmatpush1.msra.mxu0 %v3190
  %3206 = vmatprep.subr.mxu0 0.0
  %3207 = vmatpush1.msra.mxu0 %v3191
  %3208 = vmatprep.subr.mxu0 0.0
  %3209 = vmatpush1.msra.mxu0 0.0
  %3210 = vmatprep.subr.mxu0 0.0
  %3211 = vmatpush1.msra.mxu0 0.0
  %3212 = vmatprep.subr.mxu0 0.0
  %3213 = vmatpush1.msra.mxu0 0.0
  %3214 = vmatprep.subr.mxu0 0.0
  %3215 = vmatpush1.msra.mxu0 0.0
  %3216 = vmatprep.subr.mxu0 0.0
  %3217 = vmatpush1.msra.mxu0 0.0
  %3218 = vmatprep.subr.mxu0 0.0
  %3219 = vmatpush1.msra.mxu0 0.0
  %3220 = vmatprep.subr.mxu0 0.0
  %3221 = vmatpush1.msra.mxu0 0.0
  %3222 = vmatprep.subr.mxu0 0.0
  %3223 = vmatpush1.msra.mxu0 0.0
  %3224 = vmatprep.subr.mxu0 0.0
  %3225 = vmatpush1.msra.mxu0 0.0
  %3226 = vmatprep.subr.mxu0 0.0
  %3227 = vmatpush1.msra.mxu0 0.0
  %3228 = vmatprep.subr.mxu0 0.0
  %3229 = vmatpush1.msra.mxu0 0.0
  %3230 = vmatprep.subr.mxu0 0.0
  %3231 = vmatpush1.msra.mxu0 0.0
  %3232 = vmatprep.subr.mxu0 0.0
  %3233 = vmatpush1.msra.mxu0 0.0
  %3234 = vmatprep.subr.mxu0 0.0
  %3235 = vmatpush1.msra.mxu0 0.0
  %3236 = vmatprep.subr.mxu0 0.0
  %3237 = vmatpush1.msra.mxu0 0.0
  %3238 = vmatprep.subr.mxu0 0.0
  %3239 = vmatpush1.msra.mxu0 0.0
  %3240 = vmatprep.subr.mxu0 0.0
  %3241 = vmatpush1.msra.mxu0 0.0
  %3242 = vmatprep.subr.mxu0 0.0
  %3243 = vmatpush1.msra.mxu0 0.0
  %3244 = vmatprep.subr.mxu0 0.0
  %3245 = vmatpush1.msra.mxu0 0.0
  %3246 = vmatprep.subr.mxu0 0.0
  %3247 = vmatpush1.msra.mxu0 0.0
  %3248 = vmatprep.subr.mxu0 0.0
  %3249 = vmatpush1.msra.mxu0 0.0
  %3250 = vmatprep.subr.mxu0 0.0
  %3251 = vmatpush1.msra.mxu0 0.0
  %3252 = vmatprep.subr.mxu0 0.0
  %3253 = vmatpush1.msra.mxu0 0.0
  %3254 = vmatprep.subr.mxu0 0.0
  %3255 = vmatpush1.msra.mxu0 0.0
  %3256 = vmatprep.subr.mxu0 0.0
  %3257 = vmatpush1.msra.mxu0 0.0
  %3258 = vmatprep.subr.mxu0 0.0
  %3259 = vmatpush1.msra.mxu0 0.0
  %3260 = vmatprep.subr.mxu0 0.0
  %3261 = vmatpush1.msra.mxu0 0.0
  %3262 = vmatprep.subr.mxu0 0.0
  %3263 = vmatpush1.msra.mxu0 0.0
  %3264 = vmatprep.mubr.f32.mxu0 0.0
  %3265 = vmatmul.mubr.f32.gmra.mrb[0].mxu0 %v2559
  %v3266 = vpop.f32.mrb[0].mxu0
  %v3267 = vadd.f32 %v3198, %v3266
  %v3268 = vpop.f32.mrb[0].mxu0
  %3269 = vmatprep.mubr.f32.mxu0 0.0
  %3270 = vmatmul.mubr.f32.gmra.mrb[0].mxu0 %v2562
  %v3271 = vpop.f32.mrb[0].mxu0
  %v3272 = vadd.f32 %v3198, %v3271
  %v3273 = vpop.f32.mrb[0].mxu0
  %3274 = vdwg.mxu0
  %v3276 = vsel %vm350, %v3091, 0
  %v3279 = vsel %vm350, %v3096, 0
  %v3282 = vsel %vm350, %v3179, 0
  %v3285 = vsel %vm350, %v3184, 0
  %3287 = vmatprep.subr.mxu0 0.0
  %3288 = vmatpush1.xpose.msra.mxu0 %v3282
  %3289 = vmatprep.subr.mxu0 0.0
  %3290 = vmatpush1.xpose.msra.mxu0 %v3285
  %3291 = vmatprep.subr.mxu0 0.0
  %3292 = vmatpush1.xpose.msra.mxu0 0.0
  %3293 = vmatprep.subr.mxu0 0.0
  %3294 = vmatpush1.xpose.msra.mxu0 0.0
  %3295 = vmatprep.subr.mxu0 0.0
  %3296 = vmatpush1.xpose.msra.mxu0 0.0
  %3297 = vmatprep.subr.mxu0 0.0
  %3298 = vmatpush1.xpose.msra.mxu0 0.0
  %3299 = vmatprep.subr.mxu0 0.0
  %3300 = vmatpush1.xpose.msra.mxu0 0.0
  %3301 = vmatprep.subr.mxu0 0.0
  %3302 = vmatpush1.xpose.msra.mxu0 0.0
  %3303 = vmatprep.subr.mxu0 0.0
  %3304 = vmatpush1.xpose.msra.mxu0 0.0
  %3305 = vmatprep.subr.mxu0 0.0
  %3306 = vmatpush1.xpose.msra.mxu0 0.0
  %3307 = vmatprep.subr.mxu0 0.0
  %3308 = vmatpush1.xpose.msra.mxu0 0.0
  %3309 = vmatprep.subr.mxu0 0.0
  %3310 = vmatpush1.xpose.msra.mxu0 0.0
  %3311 = vmatprep.subr.mxu0 0.0
  %3312 = vmatpush1.xpose.msra.mxu0 0.0
  %3313 = vmatprep.subr.mxu0 0.0
  %3314 = vmatpush1.xpose.msra.mxu0 0.0
  %3315 = vmatprep.subr.mxu0 0.0
  %3316 = vmatpush1.xpose.msra.mxu0 0.0
  %3317 = vmatprep.subr.mxu0 0.0
  %3318 = vmatpush1.xpose.msra.mxu0 0.0
  %3319 = vmatprep.subr.mxu0 0.0
  %3320 = vmatpush1.xpose.msra.mxu0 0.0
  %3321 = vmatprep.subr.mxu0 0.0
  %3322 = vmatpush1.xpose.msra.mxu0 0.0
  %3323 = vmatprep.subr.mxu0 0.0
  %3324 = vmatpush1.xpose.msra.mxu0 0.0
  %3325 = vmatprep.subr.mxu0 0.0
  %3326 = vmatpush1.xpose.msra.mxu0 0.0
  %3327 = vmatprep.subr.mxu0 0.0
  %3328 = vmatpush1.xpose.msra.mxu0 0.0
  %3329 = vmatprep.subr.mxu0 0.0
  %3330 = vmatpush1.xpose.msra.mxu0 0.0
  %3331 = vmatprep.subr.mxu0 0.0
  %3332 = vmatpush1.xpose.msra.mxu0 0.0
  %3333 = vmatprep.subr.mxu0 0.0
  %3334 = vmatpush1.xpose.msra.mxu0 0.0
  %3335 = vmatprep.subr.mxu0 0.0
  %3336 = vmatpush1.xpose.msra.mxu0 0.0
  %3337 = vmatprep.subr.mxu0 0.0
  %3338 = vmatpush1.xpose.msra.mxu0 0.0
  %3339 = vmatprep.subr.mxu0 0.0
  %3340 = vmatpush1.xpose.msra.mxu0 0.0
  %3341 = vmatprep.subr.mxu0 0.0
  %3342 = vmatpush1.xpose.msra.mxu0 0.0
  %3343 = vmatprep.subr.mxu0 0.0
  %3344 = vmatpush1.xpose.msra.mxu0 0.0
  %3345 = vmatprep.subr.mxu0 0.0
  %3346 = vmatpush1.xpose.msra.mxu0 0.0
  %3347 = vmatprep.subr.mxu0 0.0
  %3348 = vmatpush1.xpose.msra.mxu0 0.0
  %3349 = vmatprep.subr.mxu0 0.0
  %3350 = vmatpush1.xpose.msra.mxu0 0.0
  %3351 = vmatprep.mubr.f32.mxu0 0.0
  %3352 = vmatmul.mubr.f32.gmra.mrb[0].mxu0 %v3276
  %v3353 = vpop.f32.mrb[0].mxu0
  %v3354 = vadd.f32 0.0, %v3353
  %v3355 = vpop.f32.mrb[0].mxu0
  %3356 = vmatprep.mubr.f32.mxu0 0.0
  %3357 = vmatmul.mubr.f32.gmra.mrb[0].mxu0 %v3279
  %v3358 = vpop.f32.mrb[0].mxu0
  %v3359 = vadd.f32 0.0, %v3358
  %v3360 = vpop.f32.mrb[0].mxu0
  %3361 = vdwg.mxu0
  %v3362 = vmul.f32 %v3354, 0.35355338
  %v3363 = vmul.f32 %v3359, 0.35355338
  %v3364 = vadd.f32 %v3362, %v35
  %v3365 = vadd.f32 %v3363, %v36
  %v3366 = vsel %vm442, %v3364, -inf
  %3367 = vmax.xlane.f32.xlu0 %v3366
  %v3368 = vpop.xlane.xlu0 %3367
  %v3369 = vsel %vm442, %v3365, -inf
  %3370 = vmax.xlane.f32.xlu0 %v3369
  %v3371 = vpop.xlane.xlu0 %3370
  %v3372 = vsub.f32 %v3364, %v3368
  %v3373 = vsub.f32 %v3365, %v3371
  %v3374 = vmul.f32 %v3372, 1.442695
  %v3375 = vpow.pop %v3374
  %v3376 = vmul.f32 %v3373, 1.442695
  %v3377 = vpow.pop %v3376
  %v3378 = vsel %vm442, %v3375, 0.0
  %3379 = vadd.xlane.f32.xlu0 %v3378
  %v3380 = vpop.xlane.xlu0 %3379
  %v3381 = vsel %vm442, %v3377, 0.0
  %3382 = vadd.xlane.f32.xlu0 %v3381
  %v3383 = vpop.xlane.xlu0 %3382
  %v3384 = vrcp.pop %v3380
  %v3385 = vrcp.pop %v3383
  %v3386 = vmul.f32 %v3375, %v3384
  %v3387 = vmul.f32 %v3377, %v3385
  %v3389 = vsel %vm442, %v3386, 0
  %v3392 = vsel %vm442, %v3387, 0
  %3394 = vmatprep.subr.mxu0 0.0
  %3395 = vmatpush1.msra.mxu0 %v3267
  %3396 = vmatprep.subr.mxu0 0.0
  %3397 = vmatpush1.msra.mxu0 %v3272
  %3398 = vmatprep.subr.mxu0 0.0
  %3399 = vmatpush1.msra.mxu0 0.0
  %3400 = vmatprep.subr.mxu0 0.0
  %3401 = vmatpush1.msra.mxu0 0.0
  %3402 = vmatprep.subr.mxu0 0.0
  %3403 = vmatpush1.msra.mxu0 0.0
  %3404 = vmatprep.subr.mxu0 0.0
  %3405 = vmatpush1.msra.mxu0 0.0
  %3406 = vmatprep.subr.mxu0 0.0
  %3407 = vmatpush1.msra.mxu0 0.0
  %3408 = vmatprep.subr.mxu0 0.0
  %3409 = vmatpush1.msra.mxu0 0.0
  %3410 = vmatprep.subr.mxu0 0.0
  %3411 = vmatpush1.msra.mxu0 0.0
  %3412 = vmatprep.subr.mxu0 0.0
  %3413 = vmatpush1.msra.mxu0 0.0
  %3414 = vmatprep.subr.mxu0 0.0
  %3415 = vmatpush1.msra.mxu0 0.0
  %3416 = vmatprep.subr.mxu0 0.0
  %3417 = vmatpush1.msra.mxu0 0.0
  %3418 = vmatprep.subr.mxu0 0.0
  %3419 = vmatpush1.msra.mxu0 0.0
  %3420 = vmatprep.subr.mxu0 0.0
  %3421 = vmatpush1.msra.mxu0 0.0
  %3422 = vmatprep.subr.mxu0 0.0
  %3423 = vmatpush1.msra.mxu0 0.0
  %3424 = vmatprep.subr.mxu0 0.0
  %3425 = vmatpush1.msra.mxu0 0.0
  %3426 = vmatprep.subr.mxu0 0.0
  %3427 = vmatpush1.msra.mxu0 0.0
  %3428 = vmatprep.subr.mxu0 0.0
  %3429 = vmatpush1.msra.mxu0 0.0
  %3430 = vmatprep.subr.mxu0 0.0
  %3431 = vmatpush1.msra.mxu0 0.0
  %3432 = vmatprep.subr.mxu0 0.0
  %3433 = vmatpush1.msra.mxu0 0.0
  %3434 = vmatprep.subr.mxu0 0.0
  %3435 = vmatpush1.msra.mxu0 0.0
  %3436 = vmatprep.subr.mxu0 0.0
  %3437 = vmatpush1.msra.mxu0 0.0
  %3438 = vmatprep.subr.mxu0 0.0
  %3439 = vmatpush1.msra.mxu0 0.0
  %3440 = vmatprep.subr.mxu0 0.0
  %3441 = vmatpush1.msra.mxu0 0.0
  %3442 = vmatprep.subr.mxu0 0.0
  %3443 = vmatpush1.msra.mxu0 0.0
  %3444 = vmatprep.subr.mxu0 0.0
  %3445 = vmatpush1.msra.mxu0 0.0
  %3446 = vmatprep.subr.mxu0 0.0
  %3447 = vmatpush1.msra.mxu0 0.0
  %3448 = vmatprep.subr.mxu0 0.0
  %3449 = vmatpush1.msra.mxu0 0.0
  %3450 = vmatprep.subr.mxu0 0.0
  %3451 = vmatpush1.msra.mxu0 0.0
  %3452 = vmatprep.subr.mxu0 0.0
  %3453 = vmatpush1.msra.mxu0 0.0
  %3454 = vmatprep.subr.mxu0 0.0
  %3455 = vmatpush1.msra.mxu0 0.0
  %3456 = vmatprep.subr.mxu0 0.0
  %3457 = vmatpush1.msra.mxu0 0.0
  %3458 = vmatprep.mubr.f32.mxu0 0.0
  %3459 = vmatmul.mubr.f32.gmra.mrb[0].mxu0 %v3389
  %v3460 = vpop.f32.mrb[0].mxu0
  %v3461 = vadd.f32 0.0, %v3460
  %v3462 = vpop.f32.mrb[0].mxu0
  %3463 = vmatprep.mubr.f32.mxu0 0.0
  %3464 = vmatmul.mubr.f32.gmra.mrb[0].mxu0 %v3392
  %v3465 = vpop.f32.mrb[0].mxu0
  %v3466 = vadd.f32 0.0, %v3465
  %v3467 = vpop.f32.mrb[0].mxu0
  %3468 = vdwg.mxu0
  %s3469 = scalar_lea.vmem %s4, 40
  %v3470 = vld [vmem:[%s3469] sm:$0xff]
  %v3472 = vsel %vm350, %v3461, 0
  %v3475 = vsel %vm350, %v3466, 0
  %3477 = vmatprep.subr.mxu0 0.0
  %3478 = vmatpush1.msra.mxu0 %v3470
  %3479 = vmatprep.subr.mxu0 0.0
  %3480 = vmatpush1.msra.mxu0 0.0
  %3481 = vmatprep.subr.mxu0 0.0
  %3482 = vmatpush1.msra.mxu0 0.0
  %3483 = vmatprep.subr.mxu0 0.0
  %3484 = vmatpush1.msra.mxu0 0.0
  %3485 = vmatprep.subr.mxu0 0.0
  %3486 = vmatpush1.msra.mxu0 0.0
  %3487 = vmatprep.subr.mxu0 0.0
  %3488 = vmatpush1.msra.mxu0 0.0
  %3489 = vmatprep.subr.mxu0 0.0
  %3490 = vmatpush1.msra.mxu0 0.0
  %3491 = vmatprep.subr.mxu0 0.0
  %3492 = vmatpush1.msra.mxu0 0.0
  %3493 = vmatprep.subr.mxu0 0.0
  %3494 = vmatpush1.msra.mxu0 0.0
  %3495 = vmatprep.subr.mxu0 0.0
  %3496 = vmatpush1.msra.mxu0 0.0
  %3497 = vmatprep.subr.mxu0 0.0
  %3498 = vmatpush1.msra.mxu0 0.0
  %3499 = vmatprep.subr.mxu0 0.0
  %3500 = vmatpush1.msra.mxu0 0.0
  %3501 = vmatprep.subr.mxu0 0.0
  %3502 = vmatpush1.msra.mxu0 0.0
  %3503 = vmatprep.subr.mxu0 0.0
  %3504 = vmatpush1.msra.mxu0 0.0
  %3505 = vmatprep.subr.mxu0 0.0
  %3506 = vmatpush1.msra.mxu0 0.0
  %3507 = vmatprep.subr.mxu0 0.0
  %3508 = vmatpush1.msra.mxu0 0.0
  %3509 = vmatprep.subr.mxu0 0.0
  %3510 = vmatpush1.msra.mxu0 0.0
  %3511 = vmatprep.subr.mxu0 0.0
  %3512 = vmatpush1.msra.mxu0 0.0
  %3513 = vmatprep.subr.mxu0 0.0
  %3514 = vmatpush1.msra.mxu0 0.0
  %3515 = vmatprep.subr.mxu0 0.0
  %3516 = vmatpush1.msra.mxu0 0.0
  %3517 = vmatprep.subr.mxu0 0.0
  %3518 = vmatpush1.msra.mxu0 0.0
  %3519 = vmatprep.subr.mxu0 0.0
  %3520 = vmatpush1.msra.mxu0 0.0
  %3521 = vmatprep.subr.mxu0 0.0
  %3522 = vmatpush1.msra.mxu0 0.0
  %3523 = vmatprep.subr.mxu0 0.0
  %3524 = vmatpush1.msra.mxu0 0.0
  %3525 = vmatprep.subr.mxu0 0.0
  %3526 = vmatpush1.msra.mxu0 0.0
  %3527 = vmatprep.subr.mxu0 0.0
  %3528 = vmatpush1.msra.mxu0 0.0
  %3529 = vmatprep.subr.mxu0 0.0
  %3530 = vmatpush1.msra.mxu0 0.0
  %3531 = vmatprep.subr.mxu0 0.0
  %3532 = vmatpush1.msra.mxu0 0.0
  %3533 = vmatprep.subr.mxu0 0.0
  %3534 = vmatpush1.msra.mxu0 0.0
  %3535 = vmatprep.subr.mxu0 0.0
  %3536 = vmatpush1.msra.mxu0 0.0
  %3537 = vmatprep.subr.mxu0 0.0
  %3538 = vmatpush1.msra.mxu0 0.0
  %3539 = vmatprep.subr.mxu0 0.0
  %3540 = vmatpush1.msra.mxu0 0.0
  %3541 = vmatprep.mubr.f32.mxu0 0.0
  %3542 = vmatmul.mubr.f32.gmra.mrb[0].mxu0 %v3472
  %v3543 = vpop.f32.mrb[0].mxu0
  %v3544 = vadd.f32 0.0, %v3543
  %v3545 = vpop.f32.mrb[0].mxu0
  %3546 = vmatprep.mubr.f32.mxu0 0.0
  %3547 = vmatmul.mubr.f32.gmra.mrb[0].mxu0 %v3475
  %v3548 = vpop.f32.mrb[0].mxu0
  %v3549 = vadd.f32 0.0, %v3548
  %v3550 = vpop.f32.mrb[0].mxu0
  %3551 = vdwg.mxu0
  %v3553 = vsel %vm350, %v3001, 0
  %v3556 = vsel %vm350, %v3006, 0
  %3558 = vmatprep.subr.mxu0 0.0
  %3559 = vmatpush1.msra.mxu0 %v3010
  %3560 = vmatprep.subr.mxu0 0.0
  %3561 = vmatpush1.msra.mxu0 0.0
  %3562 = vmatprep.subr.mxu0 0.0
  %3563 = vmatpush1.msra.mxu0 0.0
  %3564 = vmatprep.subr.mxu0 0.0
  %3565 = vmatpush1.msra.mxu0 0.0
  %3566 = vmatprep.subr.mxu0 0.0
  %3567 = vmatpush1.msra.mxu0 0.0
  %3568 = vmatprep.subr.mxu0 0.0
  %3569 = vmatpush1.msra.mxu0 0.0
  %3570 = vmatprep.subr.mxu0 0.0
  %3571 = vmatpush1.msra.mxu0 0.0
  %3572 = vmatprep.subr.mxu0 0.0
  %3573 = vmatpush1.msra.mxu0 0.0
  %3574 = vmatprep.subr.mxu0 0.0
  %3575 = vmatpush1.msra.mxu0 0.0
  %3576 = vmatprep.subr.mxu0 0.0
  %3577 = vmatpush1.msra.mxu0 0.0
  %3578 = vmatprep.subr.mxu0 0.0
  %3579 = vmatpush1.msra.mxu0 0.0
  %3580 = vmatprep.subr.mxu0 0.0
  %3581 = vmatpush1.msra.mxu0 0.0
  %3582 = vmatprep.subr.mxu0 0.0
  %3583 = vmatpush1.msra.mxu0 0.0
  %3584 = vmatprep.subr.mxu0 0.0
  %3585 = vmatpush1.msra.mxu0 0.0
  %3586 = vmatprep.subr.mxu0 0.0
  %3587 = vmatpush1.msra.mxu0 0.0
  %3588 = vmatprep.subr.mxu0 0.0
  %3589 = vmatpush1.msra.mxu0 0.0
  %3590 = vmatprep.subr.mxu0 0.0
  %3591 = vmatpush1.msra.mxu0 0.0
  %3592 = vmatprep.subr.mxu0 0.0
  %3593 = vmatpush1.msra.mxu0 0.0
  %3594 = vmatprep.subr.mxu0 0.0
  %3595 = vmatpush1.msra.mxu0 0.0
  %3596 = vmatprep.subr.mxu0 0.0
  %3597 = vmatpush1.msra.mxu0 0.0
  %3598 = vmatprep.subr.mxu0 0.0
  %3599 = vmatpush1.msra.mxu0 0.0
  %3600 = vmatprep.subr.mxu0 0.0
  %3601 = vmatpush1.msra.mxu0 0.0
  %3602 = vmatprep.subr.mxu0 0.0
  %3603 = vmatpush1.msra.mxu0 0.0
  %3604 = vmatprep.subr.mxu0 0.0
  %3605 = vmatpush1.msra.mxu0 0.0
  %3606 = vmatprep.subr.mxu0 0.0
  %3607 = vmatpush1.msra.mxu0 0.0
  %3608 = vmatprep.subr.mxu0 0.0
  %3609 = vmatpush1.msra.mxu0 0.0
  %3610 = vmatprep.subr.mxu0 0.0
  %3611 = vmatpush1.msra.mxu0 0.0
  %3612 = vmatprep.subr.mxu0 0.0
  %3613 = vmatpush1.msra.mxu0 0.0
  %3614 = vmatprep.subr.mxu0 0.0
  %3615 = vmatpush1.msra.mxu0 0.0
  %3616 = vmatprep.subr.mxu0 0.0
  %3617 = vmatpush1.msra.mxu0 0.0
  %3618 = vmatprep.subr.mxu0 0.0
  %3619 = vmatpush1.msra.mxu0 0.0
  %3620 = vmatprep.subr.mxu0 0.0
  %3621 = vmatpush1.msra.mxu0 0.0
  %3622 = vmatprep.mubr.f32.mxu0 0.0
  %3623 = vmatmul.mubr.f32.gmra.mrb[0].mxu0 %v3553
  %v3624 = vpop.f32.mrb[0].mxu0
  %v3625 = vadd.f32 %v3544, %v3624
  %v3626 = vpop.f32.mrb[0].mxu0
  %3627 = vmatprep.mubr.f32.mxu0 0.0
  %3628 = vmatmul.mubr.f32.gmra.mrb[0].mxu0 %v3556
  %v3629 = vpop.f32.mrb[0].mxu0
  %v3630 = vadd.f32 %v3549, %v3629
  %v3631 = vpop.f32.mrb[0].mxu0
  %3632 = vdwg.mxu0
  %s3633 = scalar_lea.vmem %s2, 576
  %v3634 = vld [vmem:[%s3633] sm:$0xff]
  %v3635 = vld [vmem:[%s3633 + $0x8] sm:$0xff]
  %v3636 = vld [vmem:[%s3633 + $0x10] sm:$0xff]
  %v3637 = vld [vmem:[%s3633 + $0x18] sm:$0xff]
  %s3638 = scalar_lea.vmem %s3, 18
  %v3639 = vld [vmem:[%s3638] sm:$0x1]
  %v3641 = vlaneseq
  %v3642 = vshrl.u32 %v3641, 7
  %v3643 = vsub.s32 0, %v3642
  %v3644 = vrot.slane %v3639, %v3643
  %3646 = vmatprep.subr.mxu0 0.0
  %3647 = vmatpush1.msra.mxu0 %v3634
  %3648 = vmatprep.subr.mxu0 0.0
  %3649 = vmatpush1.msra.mxu0 %v3635
  %3650 = vmatprep.subr.mxu0 0.0
  %3651 = vmatpush1.msra.mxu0 %v3636
  %3652 = vmatprep.subr.mxu0 0.0
  %3653 = vmatpush1.msra.mxu0 %v3637
  %3654 = vmatprep.subr.mxu0 0.0
  %3655 = vmatpush1.msra.mxu0 0.0
  %3656 = vmatprep.subr.mxu0 0.0
  %3657 = vmatpush1.msra.mxu0 0.0
  %3658 = vmatprep.subr.mxu0 0.0
  %3659 = vmatpush1.msra.mxu0 0.0
  %3660 = vmatprep.subr.mxu0 0.0
  %3661 = vmatpush1.msra.mxu0 0.0
  %3662 = vmatprep.subr.mxu0 0.0
  %3663 = vmatpush1.msra.mxu0 0.0
  %3664 = vmatprep.subr.mxu0 0.0
  %3665 = vmatpush1.msra.mxu0 0.0
  %3666 = vmatprep.subr.mxu0 0.0
  %3667 = vmatpush1.msra.mxu0 0.0
  %3668 = vmatprep.subr.mxu0 0.0
  %3669 = vmatpush1.msra.mxu0 0.0
  %3670 = vmatprep.subr.mxu0 0.0
  %3671 = vmatpush1.msra.mxu0 0.0
  %3672 = vmatprep.subr.mxu0 0.0
  %3673 = vmatpush1.msra.mxu0 0.0
  %3674 = vmatprep.subr.mxu0 0.0
  %3675 = vmatpush1.msra.mxu0 0.0
  %3676 = vmatprep.subr.mxu0 0.0
  %3677 = vmatpush1.msra.mxu0 0.0
  %3678 = vmatprep.subr.mxu0 0.0
  %3679 = vmatpush1.msra.mxu0 0.0
  %3680 = vmatprep.subr.mxu0 0.0
  %3681 = vmatpush1.msra.mxu0 0.0
  %3682 = vmatprep.subr.mxu0 0.0
  %3683 = vmatpush1.msra.mxu0 0.0
  %3684 = vmatprep.subr.mxu0 0.0
  %3685 = vmatpush1.msra.mxu0 0.0
  %3686 = vmatprep.subr.mxu0 0.0
  %3687 = vmatpush1.msra.mxu0 0.0
  %3688 = vmatprep.subr.mxu0 0.0
  %3689 = vmatpush1.msra.mxu0 0.0
  %3690 = vmatprep.subr.mxu0 0.0
  %3691 = vmatpush1.msra.mxu0 0.0
  %3692 = vmatprep.subr.mxu0 0.0
  %3693 = vmatpush1.msra.mxu0 0.0
  %3694 = vmatprep.subr.mxu0 0.0
  %3695 = vmatpush1.msra.mxu0 0.0
  %3696 = vmatprep.subr.mxu0 0.0
  %3697 = vmatpush1.msra.mxu0 0.0
  %3698 = vmatprep.subr.mxu0 0.0
  %3699 = vmatpush1.msra.mxu0 0.0
  %3700 = vmatprep.subr.mxu0 0.0
  %3701 = vmatpush1.msra.mxu0 0.0
  %3702 = vmatprep.subr.mxu0 0.0
  %3703 = vmatpush1.msra.mxu0 0.0
  %3704 = vmatprep.subr.mxu0 0.0
  %3705 = vmatpush1.msra.mxu0 0.0
  %3706 = vmatprep.subr.mxu0 0.0
  %3707 = vmatpush1.msra.mxu0 0.0
  %3708 = vmatprep.subr.mxu0 0.0
  %3709 = vmatpush1.msra.mxu0 0.0
  %3710 = vmatprep.mubr.f32.mxu0 0.0
  %3711 = vmatmul.mubr.f32.gmra.mrb[0].mxu0 %v2559
  %v3712 = vpop.f32.mrb[0].mxu0
  %v3713 = vadd.f32 %v3644, %v3712
  %v3714 = vpop.f32.mrb[0].mxu0
  %3715 = vmatprep.mubr.f32.mxu0 0.0
  %3716 = vmatmul.mubr.f32.gmra.mrb[0].mxu0 %v2562
  %v3717 = vpop.f32.mrb[0].mxu0
  %v3718 = vadd.f32 %v3644, %v3717
  %v3719 = vpop.f32.mrb[0].mxu0
  %3720 = vdwg.mxu0
  %s3721 = scalar_lea.vmem %s2, 608
  %v3722 = vld [vmem:[%s3721] sm:$0xff]
  %v3723 = vld [vmem:[%s3721 + $0x8] sm:$0xff]
  %v3724 = vld [vmem:[%s3721 + $0x10] sm:$0xff]
  %v3725 = vld [vmem:[%s3721 + $0x18] sm:$0xff]
  %s3726 = scalar_lea.vmem %s3, 19
  %v3727 = vld [vmem:[%s3726] sm:$0x1]
  %v3729 = vlaneseq
  %v3730 = vshrl.u32 %v3729, 7
  %v3731 = vsub.s32 0, %v3730
  %v3732 = vrot.slane %v3727, %v3731
  %3734 = vmatprep.subr.mxu0 0.0
  %3735 = vmatpush1.msra.mxu0 %v3722
  %3736 = vmatprep.subr.mxu0 0.0
  %3737 = vmatpush1.msra.mxu0 %v3723
  %3738 = vmatprep.subr.mxu0 0.0
  %3739 = vmatpush1.msra.mxu0 %v3724
  %3740 = vmatprep.subr.mxu0 0.0
  %3741 = vmatpush1.msra.mxu0 %v3725
  %3742 = vmatprep.subr.mxu0 0.0
  %3743 = vmatpush1.msra.mxu0 0.0
  %3744 = vmatprep.subr.mxu0 0.0
  %3745 = vmatpush1.msra.mxu0 0.0
  %3746 = vmatprep.subr.mxu0 0.0
  %3747 = vmatpush1.msra.mxu0 0.0
  %3748 = vmatprep.subr.mxu0 0.0
  %3749 = vmatpush1.msra.mxu0 0.0
  %3750 = vmatprep.subr.mxu0 0.0
  %3751 = vmatpush1.msra.mxu0 0.0
  %3752 = vmatprep.subr.mxu0 0.0
  %3753 = vmatpush1.msra.mxu0 0.0
  %3754 = vmatprep.subr.mxu0 0.0
  %3755 = vmatpush1.msra.mxu0 0.0
  %3756 = vmatprep.subr.mxu0 0.0
  %3757 = vmatpush1.msra.mxu0 0.0
  %3758 = vmatprep.subr.mxu0 0.0
  %3759 = vmatpush1.msra.mxu0 0.0
  %3760 = vmatprep.subr.mxu0 0.0
  %3761 = vmatpush1.msra.mxu0 0.0
  %3762 = vmatprep.subr.mxu0 0.0
  %3763 = vmatpush1.msra.mxu0 0.0
  %3764 = vmatprep.subr.mxu0 0.0
  %3765 = vmatpush1.msra.mxu0 0.0
  %3766 = vmatprep.subr.mxu0 0.0
  %3767 = vmatpush1.msra.mxu0 0.0
  %3768 = vmatprep.subr.mxu0 0.0
  %3769 = vmatpush1.msra.mxu0 0.0
  %3770 = vmatprep.subr.mxu0 0.0
  %3771 = vmatpush1.msra.mxu0 0.0
  %3772 = vmatprep.subr.mxu0 0.0
  %3773 = vmatpush1.msra.mxu0 0.0
  %3774 = vmatprep.subr.mxu0 0.0
  %3775 = vmatpush1.msra.mxu0 0.0
  %3776 = vmatprep.subr.mxu0 0.0
  %3777 = vmatpush1.msra.mxu0 0.0
  %3778 = vmatprep.subr.mxu0 0.0
  %3779 = vmatpush1.msra.mxu0 0.0
  %3780 = vmatprep.subr.mxu0 0.0
  %3781 = vmatpush1.msra.mxu0 0.0
  %3782 = vmatprep.subr.mxu0 0.0
  %3783 = vmatpush1.msra.mxu0 0.0
  %3784 = vmatprep.subr.mxu0 0.0
  %3785 = vmatpush1.msra.mxu0 0.0
  %3786 = vmatprep.subr.mxu0 0.0
  %3787 = vmatpush1.msra.mxu0 0.0
  %3788 = vmatprep.subr.mxu0 0.0
  %3789 = vmatpush1.msra.mxu0 0.0
  %3790 = vmatprep.subr.mxu0 0.0
  %3791 = vmatpush1.msra.mxu0 0.0
  %3792 = vmatprep.subr.mxu0 0.0
  %3793 = vmatpush1.msra.mxu0 0.0
  %3794 = vmatprep.subr.mxu0 0.0
  %3795 = vmatpush1.msra.mxu0 0.0
  %3796 = vmatprep.subr.mxu0 0.0
  %3797 = vmatpush1.msra.mxu0 0.0
  %3798 = vmatprep.mubr.f32.mxu0 0.0
  %3799 = vmatmul.mubr.f32.gmra.mrb[0].mxu0 %v2559
  %v3800 = vpop.f32.mrb[0].mxu0
  %v3801 = vadd.f32 %v3732, %v3800
  %v3802 = vpop.f32.mrb[0].mxu0
  %3803 = vmatprep.mubr.f32.mxu0 0.0
  %3804 = vmatmul.mubr.f32.gmra.mrb[0].mxu0 %v2562
  %v3805 = vpop.f32.mrb[0].mxu0
  %v3806 = vadd.f32 %v3732, %v3805
  %v3807 = vpop.f32.mrb[0].mxu0
  %3808 = vdwg.mxu0
  %s3809 = scalar_lea.vmem %s2, 640
  %v3810 = vld [vmem:[%s3809] sm:$0xff]
  %v3811 = vld [vmem:[%s3809 + $0x8] sm:$0xff]
  %v3812 = vld [vmem:[%s3809 + $0x10] sm:$0xff]
  %v3813 = vld [vmem:[%s3809 + $0x18] sm:$0xff]
  %s3814 = scalar_lea.vmem %s3, 20
  %v3815 = vld [vmem:[%s3814] sm:$0x1]
  %v3817 = vlaneseq
  %v3818 = vshrl.u32 %v3817, 7
  %v3819 = vsub.s32 0, %v3818
  %v3820 = vrot.slane %v3815, %v3819
  %3822 = vmatprep.subr.mxu0 0.0
  %3823 = vmatpush1.msra.mxu0 %v3810
  %3824 = vmatprep.subr.mxu0 0.0
  %3825 = vmatpush1.msra.mxu0 %v3811
  %3826 = vmatprep.subr.mxu0 0.0
  %3827 = vmatpush1.msra.mxu0 %v3812
  %3828 = vmatprep.subr.mxu0 0.0
  %3829 = vmatpush1.msra.mxu0 %v3813
  %3830 = vmatprep.subr.mxu0 0.0
  %3831 = vmatpush1.msra.mxu0 0.0
  %3832 = vmatprep.subr.mxu0 0.0
  %3833 = vmatpush1.msra.mxu0 0.0
  %3834 = vmatprep.subr.mxu0 0.0
  %3835 = vmatpush1.msra.mxu0 0.0
  %3836 = vmatprep.subr.mxu0 0.0
  %3837 = vmatpush1.msra.mxu0 0.0
  %3838 = vmatprep.subr.mxu0 0.0
  %3839 = vmatpush1.msra.mxu0 0.0
  %3840 = vmatprep.subr.mxu0 0.0
  %3841 = vmatpush1.msra.mxu0 0.0
  %3842 = vmatprep.subr.mxu0 0.0
  %3843 = vmatpush1.msra.mxu0 0.0
  %3844 = vmatprep.subr.mxu0 0.0
  %3845 = vmatpush1.msra.mxu0 0.0
  %3846 = vmatprep.subr.mxu0 0.0
  %3847 = vmatpush1.msra.mxu0 0.0
  %3848 = vmatprep.subr.mxu0 0.0
  %3849 = vmatpush1.msra.mxu0 0.0
  %3850 = vmatprep.subr.mxu0 0.0
  %3851 = vmatpush1.msra.mxu0 0.0
  %3852 = vmatprep.subr.mxu0 0.0
  %3853 = vmatpush1.msra.mxu0 0.0
  %3854 = vmatprep.subr.mxu0 0.0
  %3855 = vmatpush1.msra.mxu0 0.0
  %3856 = vmatprep.subr.mxu0 0.0
  %3857 = vmatpush1.msra.mxu0 0.0
  %3858 = vmatprep.subr.mxu0 0.0
  %3859 = vmatpush1.msra.mxu0 0.0
  %3860 = vmatprep.subr.mxu0 0.0
  %3861 = vmatpush1.msra.mxu0 0.0
  %3862 = vmatprep.subr.mxu0 0.0
  %3863 = vmatpush1.msra.mxu0 0.0
  %3864 = vmatprep.subr.mxu0 0.0
  %3865 = vmatpush1.msra.mxu0 0.0
  %3866 = vmatprep.subr.mxu0 0.0
  %3867 = vmatpush1.msra.mxu0 0.0
  %3868 = vmatprep.subr.mxu0 0.0
  %3869 = vmatpush1.msra.mxu0 0.0
  %3870 = vmatprep.subr.mxu0 0.0
  %3871 = vmatpush1.msra.mxu0 0.0
  %3872 = vmatprep.subr.mxu0 0.0
  %3873 = vmatpush1.msra.mxu0 0.0
  %3874 = vmatprep.subr.mxu0 0.0
  %3875 = vmatpush1.msra.mxu0 0.0
  %3876 = vmatprep.subr.mxu0 0.0
  %3877 = vmatpush1.msra.mxu0 0.0
  %3878 = vmatprep.subr.mxu0 0.0
  %3879 = vmatpush1.msra.mxu0 0.0
  %3880 = vmatprep.subr.mxu0 0.0
  %3881 = vmatpush1.msra.mxu0 0.0
  %3882 = vmatprep.subr.mxu0 0.0
  %3883 = vmatpush1.msra.mxu0 0.0
  %3884 = vmatprep.subr.mxu0 0.0
  %3885 = vmatpush1.msra.mxu0 0.0
  %3886 = vmatprep.mubr.f32.mxu0 0.0
  %3887 = vmatmul.mubr.f32.gmra.mrb[0].mxu0 %v2559
  %v3888 = vpop.f32.mrb[0].mxu0
  %v3889 = vadd.f32 %v3820, %v3888
  %v3890 = vpop.f32.mrb[0].mxu0
  %3891 = vmatprep.mubr.f32.mxu0 0.0
  %3892 = vmatmul.mubr.f32.gmra.mrb[0].mxu0 %v2562
  %v3893 = vpop.f32.mrb[0].mxu0
  %v3894 = vadd.f32 %v3820, %v3893
  %v3895 = vpop.f32.mrb[0].mxu0
  %3896 = vdwg.mxu0
  %v3898 = vsel %vm350, %v3713, 0
  %v3901 = vsel %vm350, %v3718, 0
  %v3904 = vsel %vm350, %v3801, 0
  %v3907 = vsel %vm350, %v3806, 0
  %3909 = vmatprep.subr.mxu0 0.0
  %3910 = vmatpush1.xpose.msra.mxu0 %v3904
  %3911 = vmatprep.subr.mxu0 0.0
  %3912 = vmatpush1.xpose.msra.mxu0 %v3907
  %3913 = vmatprep.subr.mxu0 0.0
  %3914 = vmatpush1.xpose.msra.mxu0 0.0
  %3915 = vmatprep.subr.mxu0 0.0
  %3916 = vmatpush1.xpose.msra.mxu0 0.0
  %3917 = vmatprep.subr.mxu0 0.0
  %3918 = vmatpush1.xpose.msra.mxu0 0.0
  %3919 = vmatprep.subr.mxu0 0.0
  %3920 = vmatpush1.xpose.msra.mxu0 0.0
  %3921 = vmatprep.subr.mxu0 0.0
  %3922 = vmatpush1.xpose.msra.mxu0 0.0
  %3923 = vmatprep.subr.mxu0 0.0
  %3924 = vmatpush1.xpose.msra.mxu0 0.0
  %3925 = vmatprep.subr.mxu0 0.0
  %3926 = vmatpush1.xpose.msra.mxu0 0.0
  %3927 = vmatprep.subr.mxu0 0.0
  %3928 = vmatpush1.xpose.msra.mxu0 0.0
  %3929 = vmatprep.subr.mxu0 0.0
  %3930 = vmatpush1.xpose.msra.mxu0 0.0
  %3931 = vmatprep.subr.mxu0 0.0
  %3932 = vmatpush1.xpose.msra.mxu0 0.0
  %3933 = vmatprep.subr.mxu0 0.0
  %3934 = vmatpush1.xpose.msra.mxu0 0.0
  %3935 = vmatprep.subr.mxu0 0.0
  %3936 = vmatpush1.xpose.msra.mxu0 0.0
  %3937 = vmatprep.subr.mxu0 0.0
  %3938 = vmatpush1.xpose.msra.mxu0 0.0
  %3939 = vmatprep.subr.mxu0 0.0
  %3940 = vmatpush1.xpose.msra.mxu0 0.0
  %3941 = vmatprep.subr.mxu0 0.0
  %3942 = vmatpush1.xpose.msra.mxu0 0.0
  %3943 = vmatprep.subr.mxu0 0.0
  %3944 = vmatpush1.xpose.msra.mxu0 0.0
  %3945 = vmatprep.subr.mxu0 0.0
  %3946 = vmatpush1.xpose.msra.mxu0 0.0
  %3947 = vmatprep.subr.mxu0 0.0
  %3948 = vmatpush1.xpose.msra.mxu0 0.0
  %3949 = vmatprep.subr.mxu0 0.0
  %3950 = vmatpush1.xpose.msra.mxu0 0.0
  %3951 = vmatprep.subr.mxu0 0.0
  %3952 = vmatpush1.xpose.msra.mxu0 0.0
  %3953 = vmatprep.subr.mxu0 0.0
  %3954 = vmatpush1.xpose.msra.mxu0 0.0
  %3955 = vmatprep.subr.mxu0 0.0
  %3956 = vmatpush1.xpose.msra.mxu0 0.0
  %3957 = vmatprep.subr.mxu0 0.0
  %3958 = vmatpush1.xpose.msra.mxu0 0.0
  %3959 = vmatprep.subr.mxu0 0.0
  %3960 = vmatpush1.xpose.msra.mxu0 0.0
  %3961 = vmatprep.subr.mxu0 0.0
  %3962 = vmatpush1.xpose.msra.mxu0 0.0
  %3963 = vmatprep.subr.mxu0 0.0
  %3964 = vmatpush1.xpose.msra.mxu0 0.0
  %3965 = vmatprep.subr.mxu0 0.0
  %3966 = vmatpush1.xpose.msra.mxu0 0.0
  %3967 = vmatprep.subr.mxu0 0.0
  %3968 = vmatpush1.xpose.msra.mxu0 0.0
  %3969 = vmatprep.subr.mxu0 0.0
  %3970 = vmatpush1.xpose.msra.mxu0 0.0
  %3971 = vmatprep.subr.mxu0 0.0
  %3972 = vmatpush1.xpose.msra.mxu0 0.0
  %3973 = vmatprep.mubr.f32.mxu0 0.0
  %3974 = vmatmul.mubr.f32.gmra.mrb[0].mxu0 %v3898
  %v3975 = vpop.f32.mrb[0].mxu0
  %v3976 = vadd.f32 0.0, %v3975
  %v3977 = vpop.f32.mrb[0].mxu0
  %3978 = vmatprep.mubr.f32.mxu0 0.0
  %3979 = vmatmul.mubr.f32.gmra.mrb[0].mxu0 %v3901
  %v3980 = vpop.f32.mrb[0].mxu0
  %v3981 = vadd.f32 0.0, %v3980
  %v3982 = vpop.f32.mrb[0].mxu0
  %3983 = vdwg.mxu0
  %v3984 = vmul.f32 %v3976, 0.35355338
  %v3985 = vmul.f32 %v3981, 0.35355338
  %v3986 = vadd.f32 %v3984, %v35
  %v3987 = vadd.f32 %v3985, %v36
  %v3988 = vsel %vm442, %v3986, -inf
  %3989 = vmax.xlane.f32.xlu0 %v3988
  %v3990 = vpop.xlane.xlu0 %3989
  %v3991 = vsel %vm442, %v3987, -inf
  %3992 = vmax.xlane.f32.xlu0 %v3991
  %v3993 = vpop.xlane.xlu0 %3992
  %v3994 = vsub.f32 %v3986, %v3990
  %v3995 = vsub.f32 %v3987, %v3993
  %v3996 = vmul.f32 %v3994, 1.442695
  %v3997 = vpow.pop %v3996
  %v3998 = vmul.f32 %v3995, 1.442695
  %v3999 = vpow.pop %v3998
  %v4000 = vsel %vm442, %v3997, 0.0
  %4001 = vadd.xlane.f32.xlu0 %v4000
  %v4002 = vpop.xlane.xlu0 %4001
  %v4003 = vsel %vm442, %v3999, 0.0
  %4004 = vadd.xlane.f32.xlu0 %v4003
  %v4005 = vpop.xlane.xlu0 %4004
  %v4006 = vrcp.pop %v4002
  %v4007 = vrcp.pop %v4005
  %v4008 = vmul.f32 %v3997, %v4006
  %v4009 = vmul.f32 %v3999, %v4007
  %v4011 = vsel %vm442, %v4008, 0
  %v4014 = vsel %vm442, %v4009, 0
  %4016 = vmatprep.subr.mxu0 0.0
  %4017 = vmatpush1.msra.mxu0 %v3889
  %4018 = vmatprep.subr.mxu0 0.0
  %4019 = vmatpush1.msra.mxu0 %v3894
  %4020 = vmatprep.subr.mxu0 0.0
  %4021 = vmatpush1.msra.mxu0 0.0
  %4022 = vmatprep.subr.mxu0 0.0
  %4023 = vmatpush1.msra.mxu0 0.0
  %4024 = vmatprep.subr.mxu0 0.0
  %4025 = vmatpush1.msra.mxu0 0.0
  %4026 = vmatprep.subr.mxu0 0.0
  %4027 = vmatpush1.msra.mxu0 0.0
  %4028 = vmatprep.subr.mxu0 0.0
  %4029 = vmatpush1.msra.mxu0 0.0
  %4030 = vmatprep.subr.mxu0 0.0
  %4031 = vmatpush1.msra.mxu0 0.0
  %4032 = vmatprep.subr.mxu0 0.0
  %4033 = vmatpush1.msra.mxu0 0.0
  %4034 = vmatprep.subr.mxu0 0.0
  %4035 = vmatpush1.msra.mxu0 0.0
  %4036 = vmatprep.subr.mxu0 0.0
  %4037 = vmatpush1.msra.mxu0 0.0
  %4038 = vmatprep.subr.mxu0 0.0
  %4039 = vmatpush1.msra.mxu0 0.0
  %4040 = vmatprep.subr.mxu0 0.0
  %4041 = vmatpush1.msra.mxu0 0.0
  %4042 = vmatprep.subr.mxu0 0.0
  %4043 = vmatpush1.msra.mxu0 0.0
  %4044 = vmatprep.subr.mxu0 0.0
  %4045 = vmatpush1.msra.mxu0 0.0
  %4046 = vmatprep.subr.mxu0 0.0
  %4047 = vmatpush1.msra.mxu0 0.0
  %4048 = vmatprep.subr.mxu0 0.0
  %4049 = vmatpush1.msra.mxu0 0.0
  %4050 = vmatprep.subr.mxu0 0.0
  %4051 = vmatpush1.msra.mxu0 0.0
  %4052 = vmatprep.subr.mxu0 0.0
  %4053 = vmatpush1.msra.mxu0 0.0
  %4054 = vmatprep.subr.mxu0 0.0
  %4055 = vmatpush1.msra.mxu0 0.0
  %4056 = vmatprep.subr.mxu0 0.0
  %4057 = vmatpush1.msra.mxu0 0.0
  %4058 = vmatprep.subr.mxu0 0.0
  %4059 = vmatpush1.msra.mxu0 0.0
  %4060 = vmatprep.subr.mxu0 0.0
  %4061 = vmatpush1.msra.mxu0 0.0
  %4062 = vmatprep.subr.mxu0 0.0
  %4063 = vmatpush1.msra.mxu0 0.0
  %4064 = vmatprep.subr.mxu0 0.0
  %4065 = vmatpush1.msra.mxu0 0.0
  %4066 = vmatprep.subr.mxu0 0.0
  %4067 = vmatpush1.msra.mxu0 0.0
  %4068 = vmatprep.subr.mxu0 0.0
  %4069 = vmatpush1.msra.mxu0 0.0
  %4070 = vmatprep.subr.mxu0 0.0
  %4071 = vmatpush1.msra.mxu0 0.0
  %4072 = vmatprep.subr.mxu0 0.0
  %4073 = vmatpush1.msra.mxu0 0.0
  %4074 = vmatprep.subr.mxu0 0.0
  %4075 = vmatpush1.msra.mxu0 0.0
  %4076 = vmatprep.subr.mxu0 0.0
  %4077 = vmatpush1.msra.mxu0 0.0
  %4078 = vmatprep.subr.mxu0 0.0
  %4079 = vmatpush1.msra.mxu0 0.0
  %4080 = vmatprep.mubr.f32.mxu0 0.0
  %4081 = vmatmul.mubr.f32.gmra.mrb[0].mxu0 %v4011
  %v4082 = vpop.f32.mrb[0].mxu0
  %v4083 = vadd.f32 0.0, %v4082
  %v4084 = vpop.f32.mrb[0].mxu0
  %4085 = vmatprep.mubr.f32.mxu0 0.0
  %4086 = vmatmul.mubr.f32.gmra.mrb[0].mxu0 %v4014
  %v4087 = vpop.f32.mrb[0].mxu0
  %v4088 = vadd.f32 0.0, %v4087
  %v4089 = vpop.f32.mrb[0].mxu0
  %4090 = vdwg.mxu0
  %s4091 = scalar_lea.vmem %s4, 48
  %v4092 = vld [vmem:[%s4091] sm:$0xff]
  %v4094 = vsel %vm350, %v4083, 0
  %v4097 = vsel %vm350, %v4088, 0
  %4099 = vmatprep.subr.mxu0 0.0
  %4100 = vmatpush1.msra.mxu0 %v4092
  %4101 = vmatprep.subr.mxu0 0.0
  %4102 = vmatpush1.msra.mxu0 0.0
  %4103 = vmatprep.subr.mxu0 0.0
  %4104 = vmatpush1.msra.mxu0 0.0
  %4105 = vmatprep.subr.mxu0 0.0
  %4106 = vmatpush1.msra.mxu0 0.0
  %4107 = vmatprep.subr.mxu0 0.0
  %4108 = vmatpush1.msra.mxu0 0.0
  %4109 = vmatprep.subr.mxu0 0.0
  %4110 = vmatpush1.msra.mxu0 0.0
  %4111 = vmatprep.subr.mxu0 0.0
  %4112 = vmatpush1.msra.mxu0 0.0
  %4113 = vmatprep.subr.mxu0 0.0
  %4114 = vmatpush1.msra.mxu0 0.0
  %4115 = vmatprep.subr.mxu0 0.0
  %4116 = vmatpush1.msra.mxu0 0.0
  %4117 = vmatprep.subr.mxu0 0.0
  %4118 = vmatpush1.msra.mxu0 0.0
  %4119 = vmatprep.subr.mxu0 0.0
  %4120 = vmatpush1.msra.mxu0 0.0
  %4121 = vmatprep.subr.mxu0 0.0
  %4122 = vmatpush1.msra.mxu0 0.0
  %4123 = vmatprep.subr.mxu0 0.0
  %4124 = vmatpush1.msra.mxu0 0.0
  %4125 = vmatprep.subr.mxu0 0.0
  %4126 = vmatpush1.msra.mxu0 0.0
  %4127 = vmatprep.subr.mxu0 0.0
  %4128 = vmatpush1.msra.mxu0 0.0
  %4129 = vmatprep.subr.mxu0 0.0
  %4130 = vmatpush1.msra.mxu0 0.0
  %4131 = vmatprep.subr.mxu0 0.0
  %4132 = vmatpush1.msra.mxu0 0.0
  %4133 = vmatprep.subr.mxu0 0.0
  %4134 = vmatpush1.msra.mxu0 0.0
  %4135 = vmatprep.subr.mxu0 0.0
  %4136 = vmatpush1.msra.mxu0 0.0
  %4137 = vmatprep.subr.mxu0 0.0
  %4138 = vmatpush1.msra.mxu0 0.0
  %4139 = vmatprep.subr.mxu0 0.0
  %4140 = vmatpush1.msra.mxu0 0.0
  %4141 = vmatprep.subr.mxu0 0.0
  %4142 = vmatpush1.msra.mxu0 0.0
  %4143 = vmatprep.subr.mxu0 0.0
  %4144 = vmatpush1.msra.mxu0 0.0
  %4145 = vmatprep.subr.mxu0 0.0
  %4146 = vmatpush1.msra.mxu0 0.0
  %4147 = vmatprep.subr.mxu0 0.0
  %4148 = vmatpush1.msra.mxu0 0.0
  %4149 = vmatprep.subr.mxu0 0.0
  %4150 = vmatpush1.msra.mxu0 0.0
  %4151 = vmatprep.subr.mxu0 0.0
  %4152 = vmatpush1.msra.mxu0 0.0
  %4153 = vmatprep.subr.mxu0 0.0
  %4154 = vmatpush1.msra.mxu0 0.0
  %4155 = vmatprep.subr.mxu0 0.0
  %4156 = vmatpush1.msra.mxu0 0.0
  %4157 = vmatprep.subr.mxu0 0.0
  %4158 = vmatpush1.msra.mxu0 0.0
  %4159 = vmatprep.subr.mxu0 0.0
  %4160 = vmatpush1.msra.mxu0 0.0
  %4161 = vmatprep.subr.mxu0 0.0
  %4162 = vmatpush1.msra.mxu0 0.0
  %4163 = vmatprep.mubr.f32.mxu0 0.0
  %4164 = vmatmul.mubr.f32.gmra.mrb[0].mxu0 %v4094
  %v4165 = vpop.f32.mrb[0].mxu0
  %v4166 = vadd.f32 0.0, %v4165
  %v4167 = vpop.f32.mrb[0].mxu0
  %4168 = vmatprep.mubr.f32.mxu0 0.0
  %4169 = vmatmul.mubr.f32.gmra.mrb[0].mxu0 %v4097
  %v4170 = vpop.f32.mrb[0].mxu0
  %v4171 = vadd.f32 0.0, %v4170
  %v4172 = vpop.f32.mrb[0].mxu0
  %4173 = vdwg.mxu0
  %v4174 = vadd.f32 %v3625, %v4166
  %v4175 = vadd.f32 %v3630, %v4171
  %s4176 = scalar_lea.vmem %s2, 672
  %v4177 = vld [vmem:[%s4176] sm:$0xff]
  %v4178 = vld [vmem:[%s4176 + $0x8] sm:$0xff]
  %v4179 = vld [vmem:[%s4176 + $0x10] sm:$0xff]
  %v4180 = vld [vmem:[%s4176 + $0x18] sm:$0xff]
  %s4181 = scalar_lea.vmem %s3, 21
  %v4182 = vld [vmem:[%s4181] sm:$0x1]
  %v4184 = vlaneseq
  %v4185 = vshrl.u32 %v4184, 7
  %v4186 = vsub.s32 0, %v4185
  %v4187 = vrot.slane %v4182, %v4186
  %4189 = vmatprep.subr.mxu0 0.0
  %4190 = vmatpush1.msra.mxu0 %v4177
  %4191 = vmatprep.subr.mxu0 0.0
  %4192 = vmatpush1.msra.mxu0 %v4178
  %4193 = vmatprep.subr.mxu0 0.0
  %4194 = vmatpush1.msra.mxu0 %v4179
  %4195 = vmatprep.subr.mxu0 0.0
  %4196 = vmatpush1.msra.mxu0 %v4180
  %4197 = vmatprep.subr.mxu0 0.0
  %4198 = vmatpush1.msra.mxu0 0.0
  %4199 = vmatprep.subr.mxu0 0.0
  %4200 = vmatpush1.msra.mxu0 0.0
  %4201 = vmatprep.subr.mxu0 0.0
  %4202 = vmatpush1.msra.mxu0 0.0
  %4203 = vmatprep.subr.mxu0 0.0
  %4204 = vmatpush1.msra.mxu0 0.0
  %4205 = vmatprep.subr.mxu0 0.0
  %4206 = vmatpush1.msra.mxu0 0.0
  %4207 = vmatprep.subr.mxu0 0.0
  %4208 = vmatpush1.msra.mxu0 0.0
  %4209 = vmatprep.subr.mxu0 0.0
  %4210 = vmatpush1.msra.mxu0 0.0
  %4211 = vmatprep.subr.mxu0 0.0
  %4212 = vmatpush1.msra.mxu0 0.0
  %4213 = vmatprep.subr.mxu0 0.0
  %4214 = vmatpush1.msra.mxu0 0.0
  %4215 = vmatprep.subr.mxu0 0.0
  %4216 = vmatpush1.msra.mxu0 0.0
  %4217 = vmatprep.subr.mxu0 0.0
  %4218 = vmatpush1.msra.mxu0 0.0
  %4219 = vmatprep.subr.mxu0 0.0
  %4220 = vmatpush1.msra.mxu0 0.0
  %4221 = vmatprep.subr.mxu0 0.0
  %4222 = vmatpush1.msra.mxu0 0.0
  %4223 = vmatprep.subr.mxu0 0.0
  %4224 = vmatpush1.msra.mxu0 0.0
  %4225 = vmatprep.subr.mxu0 0.0
  %4226 = vmatpush1.msra.mxu0 0.0
  %4227 = vmatprep.subr.mxu0 0.0
  %4228 = vmatpush1.msra.mxu0 0.0
  %4229 = vmatprep.subr.mxu0 0.0
  %4230 = vmatpush1.msra.mxu0 0.0
  %4231 = vmatprep.subr.mxu0 0.0
  %4232 = vmatpush1.msra.mxu0 0.0
  %4233 = vmatprep.subr.mxu0 0.0
  %4234 = vmatpush1.msra.mxu0 0.0
  %4235 = vmatprep.subr.mxu0 0.0
  %4236 = vmatpush1.msra.mxu0 0.0
  %4237 = vmatprep.subr.mxu0 0.0
  %4238 = vmatpush1.msra.mxu0 0.0
  %4239 = vmatprep.subr.mxu0 0.0
  %4240 = vmatpush1.msra.mxu0 0.0
  %4241 = vmatprep.subr.mxu0 0.0
  %4242 = vmatpush1.msra.mxu0 0.0
  %4243 = vmatprep.subr.mxu0 0.0
  %4244 = vmatpush1.msra.mxu0 0.0
  %4245 = vmatprep.subr.mxu0 0.0
  %4246 = vmatpush1.msra.mxu0 0.0
  %4247 = vmatprep.subr.mxu0 0.0
  %4248 = vmatpush1.msra.mxu0 0.0
  %4249 = vmatprep.subr.mxu0 0.0
  %4250 = vmatpush1.msra.mxu0 0.0
  %4251 = vmatprep.subr.mxu0 0.0
  %4252 = vmatpush1.msra.mxu0 0.0
  %4253 = vmatprep.mubr.f32.mxu0 0.0
  %4254 = vmatmul.mubr.f32.gmra.mrb[0].mxu0 %v2559
  %v4255 = vpop.f32.mrb[0].mxu0
  %v4256 = vadd.f32 %v4187, %v4255
  %v4257 = vpop.f32.mrb[0].mxu0
  %4258 = vmatprep.mubr.f32.mxu0 0.0
  %4259 = vmatmul.mubr.f32.gmra.mrb[0].mxu0 %v2562
  %v4260 = vpop.f32.mrb[0].mxu0
  %v4261 = vadd.f32 %v4187, %v4260
  %v4262 = vpop.f32.mrb[0].mxu0
  %4263 = vdwg.mxu0
  %s4264 = scalar_lea.vmem %s2, 704
  %v4265 = vld [vmem:[%s4264] sm:$0xff]
  %v4266 = vld [vmem:[%s4264 + $0x8] sm:$0xff]
  %v4267 = vld [vmem:[%s4264 + $0x10] sm:$0xff]
  %v4268 = vld [vmem:[%s4264 + $0x18] sm:$0xff]
  %s4269 = scalar_lea.vmem %s3, 22
  %v4270 = vld [vmem:[%s4269] sm:$0x1]
  %v4272 = vlaneseq
  %v4273 = vshrl.u32 %v4272, 7
  %v4274 = vsub.s32 0, %v4273
  %v4275 = vrot.slane %v4270, %v4274
  %4277 = vmatprep.subr.mxu0 0.0
  %4278 = vmatpush1.msra.mxu0 %v4265
  %4279 = vmatprep.subr.mxu0 0.0
  %4280 = vmatpush1.msra.mxu0 %v4266
  %4281 = vmatprep.subr.mxu0 0.0
  %4282 = vmatpush1.msra.mxu0 %v4267
  %4283 = vmatprep.subr.mxu0 0.0
  %4284 = vmatpush1.msra.mxu0 %v4268
  %4285 = vmatprep.subr.mxu0 0.0
  %4286 = vmatpush1.msra.mxu0 0.0
  %4287 = vmatprep.subr.mxu0 0.0
  %4288 = vmatpush1.msra.mxu0 0.0
  %4289 = vmatprep.subr.mxu0 0.0
  %4290 = vmatpush1.msra.mxu0 0.0
  %4291 = vmatprep.subr.mxu0 0.0
  %4292 = vmatpush1.msra.mxu0 0.0
  %4293 = vmatprep.subr.mxu0 0.0
  %4294 = vmatpush1.msra.mxu0 0.0
  %4295 = vmatprep.subr.mxu0 0.0
  %4296 = vmatpush1.msra.mxu0 0.0
  %4297 = vmatprep.subr.mxu0 0.0
  %4298 = vmatpush1.msra.mxu0 0.0
  %4299 = vmatprep.subr.mxu0 0.0
  %4300 = vmatpush1.msra.mxu0 0.0
  %4301 = vmatprep.subr.mxu0 0.0
  %4302 = vmatpush1.msra.mxu0 0.0
  %4303 = vmatprep.subr.mxu0 0.0
  %4304 = vmatpush1.msra.mxu0 0.0
  %4305 = vmatprep.subr.mxu0 0.0
  %4306 = vmatpush1.msra.mxu0 0.0
  %4307 = vmatprep.subr.mxu0 0.0
  %4308 = vmatpush1.msra.mxu0 0.0
  %4309 = vmatprep.subr.mxu0 0.0
  %4310 = vmatpush1.msra.mxu0 0.0
  %4311 = vmatprep.subr.mxu0 0.0
  %4312 = vmatpush1.msra.mxu0 0.0
  %4313 = vmatprep.subr.mxu0 0.0
  %4314 = vmatpush1.msra.mxu0 0.0
  %4315 = vmatprep.subr.mxu0 0.0
  %4316 = vmatpush1.msra.mxu0 0.0
  %4317 = vmatprep.subr.mxu0 0.0
  %4318 = vmatpush1.msra.mxu0 0.0
  %4319 = vmatprep.subr.mxu0 0.0
  %4320 = vmatpush1.msra.mxu0 0.0
  %4321 = vmatprep.subr.mxu0 0.0
  %4322 = vmatpush1.msra.mxu0 0.0
  %4323 = vmatprep.subr.mxu0 0.0
  %4324 = vmatpush1.msra.mxu0 0.0
  %4325 = vmatprep.subr.mxu0 0.0
  %4326 = vmatpush1.msra.mxu0 0.0
  %4327 = vmatprep.subr.mxu0 0.0
  %4328 = vmatpush1.msra.mxu0 0.0
  %4329 = vmatprep.subr.mxu0 0.0
  %4330 = vmatpush1.msra.mxu0 0.0
  %4331 = vmatprep.subr.mxu0 0.0
  %4332 = vmatpush1.msra.mxu0 0.0
  %4333 = vmatprep.subr.mxu0 0.0
  %4334 = vmatpush1.msra.mxu0 0.0
  %4335 = vmatprep.subr.mxu0 0.0
  %4336 = vmatpush1.msra.mxu0 0.0
  %4337 = vmatprep.subr.mxu0 0.0
  %4338 = vmatpush1.msra.mxu0 0.0
  %4339 = vmatprep.subr.mxu0 0.0
  %4340 = vmatpush1.msra.mxu0 0.0
  %4341 = vmatprep.mubr.f32.mxu0 0.0
  %4342 = vmatmul.mubr.f32.gmra.mrb[0].mxu0 %v2559
  %v4343 = vpop.f32.mrb[0].mxu0
  %v4344 = vadd.f32 %v4275, %v4343
  %v4345 = vpop.f32.mrb[0].mxu0
  %4346 = vmatprep.mubr.f32.mxu0 0.0
  %4347 = vmatmul.mubr.f32.gmra.mrb[0].mxu0 %v2562
  %v4348 = vpop.f32.mrb[0].mxu0
  %v4349 = vadd.f32 %v4275, %v4348
  %v4350 = vpop.f32.mrb[0].mxu0
  %4351 = vdwg.mxu0
  %s4352 = scalar_lea.vmem %s2, 736
  %v4353 = vld [vmem:[%s4352] sm:$0xff]
  %v4354 = vld [vmem:[%s4352 + $0x8] sm:$0xff]
  %v4355 = vld [vmem:[%s4352 + $0x10] sm:$0xff]
  %v4356 = vld [vmem:[%s4352 + $0x18] sm:$0xff]
  %s4357 = scalar_lea.vmem %s3, 23
  %v4358 = vld [vmem:[%s4357] sm:$0x1]
  %v4360 = vlaneseq
  %v4361 = vshrl.u32 %v4360, 7
  %v4362 = vsub.s32 0, %v4361
  %v4363 = vrot.slane %v4358, %v4362
  %4365 = vmatprep.subr.mxu0 0.0
  %4366 = vmatpush1.msra.mxu0 %v4353
  %4367 = vmatprep.subr.mxu0 0.0
  %4368 = vmatpush1.msra.mxu0 %v4354
  %4369 = vmatprep.subr.mxu0 0.0
  %4370 = vmatpush1.msra.mxu0 %v4355
  %4371 = vmatprep.subr.mxu0 0.0
  %4372 = vmatpush1.msra.mxu0 %v4356
  %4373 = vmatprep.subr.mxu0 0.0
  %4374 = vmatpush1.msra.mxu0 0.0
  %4375 = vmatprep.subr.mxu0 0.0
  %4376 = vmatpush1.msra.mxu0 0.0
  %4377 = vmatprep.subr.mxu0 0.0
  %4378 = vmatpush1.msra.mxu0 0.0
  %4379 = vmatprep.subr.mxu0 0.0
  %4380 = vmatpush1.msra.mxu0 0.0
  %4381 = vmatprep.subr.mxu0 0.0
  %4382 = vmatpush1.msra.mxu0 0.0
  %4383 = vmatprep.subr.mxu0 0.0
  %4384 = vmatpush1.msra.mxu0 0.0
  %4385 = vmatprep.subr.mxu0 0.0
  %4386 = vmatpush1.msra.mxu0 0.0
  %4387 = vmatprep.subr.mxu0 0.0
  %4388 = vmatpush1.msra.mxu0 0.0
  %4389 = vmatprep.subr.mxu0 0.0
  %4390 = vmatpush1.msra.mxu0 0.0
  %4391 = vmatprep.subr.mxu0 0.0
  %4392 = vmatpush1.msra.mxu0 0.0
  %4393 = vmatprep.subr.mxu0 0.0
  %4394 = vmatpush1.msra.mxu0 0.0
  %4395 = vmatprep.subr.mxu0 0.0
  %4396 = vmatpush1.msra.mxu0 0.0
  %4397 = vmatprep.subr.mxu0 0.0
  %4398 = vmatpush1.msra.mxu0 0.0
  %4399 = vmatprep.subr.mxu0 0.0
  %4400 = vmatpush1.msra.mxu0 0.0
  %4401 = vmatprep.subr.mxu0 0.0
  %4402 = vmatpush1.msra.mxu0 0.0
  %4403 = vmatprep.subr.mxu0 0.0
  %4404 = vmatpush1.msra.mxu0 0.0
  %4405 = vmatprep.subr.mxu0 0.0
  %4406 = vmatpush1.msra.mxu0 0.0
  %4407 = vmatprep.subr.mxu0 0.0
  %4408 = vmatpush1.msra.mxu0 0.0
  %4409 = vmatprep.subr.mxu0 0.0
  %4410 = vmatpush1.msra.mxu0 0.0
  %4411 = vmatprep.subr.mxu0 0.0
  %4412 = vmatpush1.msra.mxu0 0.0
  %4413 = vmatprep.subr.mxu0 0.0
  %4414 = vmatpush1.msra.mxu0 0.0
  %4415 = vmatprep.subr.mxu0 0.0
  %4416 = vmatpush1.msra.mxu0 0.0
  %4417 = vmatprep.subr.mxu0 0.0
  %4418 = vmatpush1.msra.mxu0 0.0
  %4419 = vmatprep.subr.mxu0 0.0
  %4420 = vmatpush1.msra.mxu0 0.0
  %4421 = vmatprep.subr.mxu0 0.0
  %4422 = vmatpush1.msra.mxu0 0.0
  %4423 = vmatprep.subr.mxu0 0.0
  %4424 = vmatpush1.msra.mxu0 0.0
  %4425 = vmatprep.subr.mxu0 0.0
  %4426 = vmatpush1.msra.mxu0 0.0
  %4427 = vmatprep.subr.mxu0 0.0
  %4428 = vmatpush1.msra.mxu0 0.0
  %4429 = vmatprep.mubr.f32.mxu0 0.0
  %4430 = vmatmul.mubr.f32.gmra.mrb[0].mxu0 %v2559
  %v4431 = vpop.f32.mrb[0].mxu0
  %v4432 = vadd.f32 %v4363, %v4431
  %v4433 = vpop.f32.mrb[0].mxu0
  %4434 = vmatprep.mubr.f32.mxu0 0.0
  %4435 = vmatmul.mubr.f32.gmra.mrb[0].mxu0 %v2562
  %v4436 = vpop.f32.mrb[0].mxu0
  %v4437 = vadd.f32 %v4363, %v4436
  %v4438 = vpop.f32.mrb[0].mxu0
  %4439 = vdwg.mxu0
  %v4441 = vsel %vm350, %v4256, 0
  %v4444 = vsel %vm350, %v4261, 0
  %v4447 = vsel %vm350, %v4344, 0
  %v4450 = vsel %vm350, %v4349, 0
  %4452 = vmatprep.subr.mxu0 0.0
  %4453 = vmatpush1.xpose.msra.mxu0 %v4447
  %4454 = vmatprep.subr.mxu0 0.0
  %4455 = vmatpush1.xpose.msra.mxu0 %v4450
  %4456 = vmatprep.subr.mxu0 0.0
  %4457 = vmatpush1.xpose.msra.mxu0 0.0
  %4458 = vmatprep.subr.mxu0 0.0
  %4459 = vmatpush1.xpose.msra.mxu0 0.0
  %4460 = vmatprep.subr.mxu0 0.0
  %4461 = vmatpush1.xpose.msra.mxu0 0.0
  %4462 = vmatprep.subr.mxu0 0.0
  %4463 = vmatpush1.xpose.msra.mxu0 0.0
  %4464 = vmatprep.subr.mxu0 0.0
  %4465 = vmatpush1.xpose.msra.mxu0 0.0
  %4466 = vmatprep.subr.mxu0 0.0
  %4467 = vmatpush1.xpose.msra.mxu0 0.0
  %4468 = vmatprep.subr.mxu0 0.0
  %4469 = vmatpush1.xpose.msra.mxu0 0.0
  %4470 = vmatprep.subr.mxu0 0.0
  %4471 = vmatpush1.xpose.msra.mxu0 0.0
  %4472 = vmatprep.subr.mxu0 0.0
  %4473 = vmatpush1.xpose.msra.mxu0 0.0
  %4474 = vmatprep.subr.mxu0 0.0
  %4475 = vmatpush1.xpose.msra.mxu0 0.0
  %4476 = vmatprep.subr.mxu0 0.0
  %4477 = vmatpush1.xpose.msra.mxu0 0.0
  %4478 = vmatprep.subr.mxu0 0.0
  %4479 = vmatpush1.xpose.msra.mxu0 0.0
  %4480 = vmatprep.subr.mxu0 0.0
  %4481 = vmatpush1.xpose.msra.mxu0 0.0
  %4482 = vmatprep.subr.mxu0 0.0
  %4483 = vmatpush1.xpose.msra.mxu0 0.0
  %4484 = vmatprep.subr.mxu0 0.0
  %4485 = vmatpush1.xpose.msra.mxu0 0.0
  %4486 = vmatprep.subr.mxu0 0.0
  %4487 = vmatpush1.xpose.msra.mxu0 0.0
  %4488 = vmatprep.subr.mxu0 0.0
  %4489 = vmatpush1.xpose.msra.mxu0 0.0
  %4490 = vmatprep.subr.mxu0 0.0
  %4491 = vmatpush1.xpose.msra.mxu0 0.0
  %4492 = vmatprep.subr.mxu0 0.0
  %4493 = vmatpush1.xpose.msra.mxu0 0.0
  %4494 = vmatprep.subr.mxu0 0.0
  %4495 = vmatpush1.xpose.msra.mxu0 0.0
  %4496 = vmatprep.subr.mxu0 0.0
  %4497 = vmatpush1.xpose.msra.mxu0 0.0
  %4498 = vmatprep.subr.mxu0 0.0
  %4499 = vmatpush1.xpose.msra.mxu0 0.0
  %4500 = vmatprep.subr.mxu0 0.0
  %4501 = vmatpush1.xpose.msra.mxu0 0.0
  %4502 = vmatprep.subr.mxu0 0.0
  %4503 = vmatpush1.xpose.msra.mxu0 0.0
  %4504 = vmatprep.subr.mxu0 0.0
  %4505 = vmatpush1.xpose.msra.mxu0 0.0
  %4506 = vmatprep.subr.mxu0 0.0
  %4507 = vmatpush1.xpose.msra.mxu0 0.0
  %4508 = vmatprep.subr.mxu0 0.0
  %4509 = vmatpush1.xpose.msra.mxu0 0.0
  %4510 = vmatprep.subr.mxu0 0.0
  %4511 = vmatpush1.xpose.msra.mxu0 0.0
  %4512 = vmatprep.subr.mxu0 0.0
  %4513 = vmatpush1.xpose.msra.mxu0 0.0
  %4514 = vmatprep.subr.mxu0 0.0
  %4515 = vmatpush1.xpose.msra.mxu0 0.0
  %4516 = vmatprep.mubr.f32.mxu0 0.0
  %4517 = vmatmul.mubr.f32.gmra.mrb[0].mxu0 %v4441
  %v4518 = vpop.f32.mrb[0].mxu0
  %v4519 = vadd.f32 0.0, %v4518
  %v4520 = vpop.f32.mrb[0].mxu0
  %4521 = vmatprep.mubr.f32.mxu0 0.0
  %4522 = vmatmul.mubr.f32.gmra.mrb[0].mxu0 %v4444
  %v4523 = vpop.f32.mrb[0].mxu0
  %v4524 = vadd.f32 0.0, %v4523
  %v4525 = vpop.f32.mrb[0].mxu0
  %4526 = vdwg.mxu0
  %v4527 = vmul.f32 %v4519, 0.35355338
  %v4528 = vmul.f32 %v4524, 0.35355338
  %v4529 = vadd.f32 %v4527, %v35
  %v4530 = vadd.f32 %v4528, %v36
  %v4531 = vsel %vm442, %v4529, -inf
  %4532 = vmax.xlane.f32.xlu0 %v4531
  %v4533 = vpop.xlane.xlu0 %4532
  %v4534 = vsel %vm442, %v4530, -inf
  %4535 = vmax.xlane.f32.xlu0 %v4534
  %v4536 = vpop.xlane.xlu0 %4535
  %v4537 = vsub.f32 %v4529, %v4533
  %v4538 = vsub.f32 %v4530, %v4536
  %v4539 = vmul.f32 %v4537, 1.442695
  %v4540 = vpow.pop %v4539
  %v4541 = vmul.f32 %v4538, 1.442695
  %v4542 = vpow.pop %v4541
  %v4543 = vsel %vm442, %v4540, 0.0
  %4544 = vadd.xlane.f32.xlu0 %v4543
  %v4545 = vpop.xlane.xlu0 %4544
  %v4546 = vsel %vm442, %v4542, 0.0
  %4547 = vadd.xlane.f32.xlu0 %v4546
  %v4548 = vpop.xlane.xlu0 %4547
  %v4549 = vrcp.pop %v4545
  %v4550 = vrcp.pop %v4548
  %v4551 = vmul.f32 %v4540, %v4549
  %v4552 = vmul.f32 %v4542, %v4550
  %v4554 = vsel %vm442, %v4551, 0
  %v4557 = vsel %vm442, %v4552, 0
  %4559 = vmatprep.subr.mxu0 0.0
  %4560 = vmatpush1.msra.mxu0 %v4432
  %4561 = vmatprep.subr.mxu0 0.0
  %4562 = vmatpush1.msra.mxu0 %v4437
  %4563 = vmatprep.subr.mxu0 0.0
  %4564 = vmatpush1.msra.mxu0 0.0
  %4565 = vmatprep.subr.mxu0 0.0
  %4566 = vmatpush1.msra.mxu0 0.0
  %4567 = vmatprep.subr.mxu0 0.0
  %4568 = vmatpush1.msra.mxu0 0.0
  %4569 = vmatprep.subr.mxu0 0.0
  %4570 = vmatpush1.msra.mxu0 0.0
  %4571 = vmatprep.subr.mxu0 0.0
  %4572 = vmatpush1.msra.mxu0 0.0
  %4573 = vmatprep.subr.mxu0 0.0
  %4574 = vmatpush1.msra.mxu0 0.0
  %4575 = vmatprep.subr.mxu0 0.0
  %4576 = vmatpush1.msra.mxu0 0.0
  %4577 = vmatprep.subr.mxu0 0.0
  %4578 = vmatpush1.msra.mxu0 0.0
  %4579 = vmatprep.subr.mxu0 0.0
  %4580 = vmatpush1.msra.mxu0 0.0
  %4581 = vmatprep.subr.mxu0 0.0
  %4582 = vmatpush1.msra.mxu0 0.0
  %4583 = vmatprep.subr.mxu0 0.0
  %4584 = vmatpush1.msra.mxu0 0.0
  %4585 = vmatprep.subr.mxu0 0.0
  %4586 = vmatpush1.msra.mxu0 0.0
  %4587 = vmatprep.subr.mxu0 0.0
  %4588 = vmatpush1.msra.mxu0 0.0
  %4589 = vmatprep.subr.mxu0 0.0
  %4590 = vmatpush1.msra.mxu0 0.0
  %4591 = vmatprep.subr.mxu0 0.0
  %4592 = vmatpush1.msra.mxu0 0.0
  %4593 = vmatprep.subr.mxu0 0.0
  %4594 = vmatpush1.msra.mxu0 0.0
  %4595 = vmatprep.subr.mxu0 0.0
  %4596 = vmatpush1.msra.mxu0 0.0
  %4597 = vmatprep.subr.mxu0 0.0
  %4598 = vmatpush1.msra.mxu0 0.0
  %4599 = vmatprep.subr.mxu0 0.0
  %4600 = vmatpush1.msra.mxu0 0.0
  %4601 = vmatprep.subr.mxu0 0.0
  %4602 = vmatpush1.msra.mxu0 0.0
  %4603 = vmatprep.subr.mxu0 0.0
  %4604 = vmatpush1.msra.mxu0 0.0
  %4605 = vmatprep.subr.mxu0 0.0
  %4606 = vmatpush1.msra.mxu0 0.0
  %4607 = vmatprep.subr.mxu0 0.0
  %4608 = vmatpush1.msra.mxu0 0.0
  %4609 = vmatprep.subr.mxu0 0.0
  %4610 = vmatpush1.msra.mxu0 0.0
  %4611 = vmatprep.subr.mxu0 0.0
  %4612 = vmatpush1.msra.mxu0 0.0
  %4613 = vmatprep.subr.mxu0 0.0
  %4614 = vmatpush1.msra.mxu0 0.0
  %4615 = vmatprep.subr.mxu0 0.0
  %4616 = vmatpush1.msra.mxu0 0.0
  %4617 = vmatprep.subr.mxu0 0.0
  %4618 = vmatpush1.msra.mxu0 0.0
  %4619 = vmatprep.subr.mxu0 0.0
  %4620 = vmatpush1.msra.mxu0 0.0
  %4621 = vmatprep.subr.mxu0 0.0
  %4622 = vmatpush1.msra.mxu0 0.0
  %4623 = vmatprep.mubr.f32.mxu0 0.0
  %4624 = vmatmul.mubr.f32.gmra.mrb[0].mxu0 %v4554
  %v4625 = vpop.f32.mrb[0].mxu0
  %v4626 = vadd.f32 0.0, %v4625
  %v4627 = vpop.f32.mrb[0].mxu0
  %4628 = vmatprep.mubr.f32.mxu0 0.0
  %4629 = vmatmul.mubr.f32.gmra.mrb[0].mxu0 %v4557
  %v4630 = vpop.f32.mrb[0].mxu0
  %v4631 = vadd.f32 0.0, %v4630
  %v4632 = vpop.f32.mrb[0].mxu0
  %4633 = vdwg.mxu0
  %s4634 = scalar_lea.vmem %s4, 56
  %v4635 = vld [vmem:[%s4634] sm:$0xff]
  %v4637 = vsel %vm350, %v4626, 0
  %v4640 = vsel %vm350, %v4631, 0
  %4642 = vmatprep.subr.mxu0 0.0
  %4643 = vmatpush1.msra.mxu0 %v4635
  %4644 = vmatprep.subr.mxu0 0.0
  %4645 = vmatpush1.msra.mxu0 0.0
  %4646 = vmatprep.subr.mxu0 0.0
  %4647 = vmatpush1.msra.mxu0 0.0
  %4648 = vmatprep.subr.mxu0 0.0
  %4649 = vmatpush1.msra.mxu0 0.0
  %4650 = vmatprep.subr.mxu0 0.0
  %4651 = vmatpush1.msra.mxu0 0.0
  %4652 = vmatprep.subr.mxu0 0.0
  %4653 = vmatpush1.msra.mxu0 0.0
  %4654 = vmatprep.subr.mxu0 0.0
  %4655 = vmatpush1.msra.mxu0 0.0
  %4656 = vmatprep.subr.mxu0 0.0
  %4657 = vmatpush1.msra.mxu0 0.0
  %4658 = vmatprep.subr.mxu0 0.0
  %4659 = vmatpush1.msra.mxu0 0.0
  %4660 = vmatprep.subr.mxu0 0.0
  %4661 = vmatpush1.msra.mxu0 0.0
  %4662 = vmatprep.subr.mxu0 0.0
  %4663 = vmatpush1.msra.mxu0 0.0
  %4664 = vmatprep.subr.mxu0 0.0
  %4665 = vmatpush1.msra.mxu0 0.0
  %4666 = vmatprep.subr.mxu0 0.0
  %4667 = vmatpush1.msra.mxu0 0.0
  %4668 = vmatprep.subr.mxu0 0.0
  %4669 = vmatpush1.msra.mxu0 0.0
  %4670 = vmatprep.subr.mxu0 0.0
  %4671 = vmatpush1.msra.mxu0 0.0
  %4672 = vmatprep.subr.mxu0 0.0
  %4673 = vmatpush1.msra.mxu0 0.0
  %4674 = vmatprep.subr.mxu0 0.0
  %4675 = vmatpush1.msra.mxu0 0.0
  %4676 = vmatprep.subr.mxu0 0.0
  %4677 = vmatpush1.msra.mxu0 0.0
  %4678 = vmatprep.subr.mxu0 0.0
  %4679 = vmatpush1.msra.mxu0 0.0
  %4680 = vmatprep.subr.mxu0 0.0
  %4681 = vmatpush1.msra.mxu0 0.0
  %4682 = vmatprep.subr.mxu0 0.0
  %4683 = vmatpush1.msra.mxu0 0.0
  %4684 = vmatprep.subr.mxu0 0.0
  %4685 = vmatpush1.msra.mxu0 0.0
  %4686 = vmatprep.subr.mxu0 0.0
  %4687 = vmatpush1.msra.mxu0 0.0
  %4688 = vmatprep.subr.mxu0 0.0
  %4689 = vmatpush1.msra.mxu0 0.0
  %4690 = vmatprep.subr.mxu0 0.0
  %4691 = vmatpush1.msra.mxu0 0.0
  %4692 = vmatprep.subr.mxu0 0.0
  %4693 = vmatpush1.msra.mxu0 0.0
  %4694 = vmatprep.subr.mxu0 0.0
  %4695 = vmatpush1.msra.mxu0 0.0
  %4696 = vmatprep.subr.mxu0 0.0
  %4697 = vmatpush1.msra.mxu0 0.0
  %4698 = vmatprep.subr.mxu0 0.0
  %4699 = vmatpush1.msra.mxu0 0.0
  %4700 = vmatprep.subr.mxu0 0.0
  %4701 = vmatpush1.msra.mxu0 0.0
  %4702 = vmatprep.subr.mxu0 0.0
  %4703 = vmatpush1.msra.mxu0 0.0
  %4704 = vmatprep.subr.mxu0 0.0
  %4705 = vmatpush1.msra.mxu0 0.0
  %4706 = vmatprep.mubr.f32.mxu0 0.0
  %4707 = vmatmul.mubr.f32.gmra.mrb[0].mxu0 %v4637
  %v4708 = vpop.f32.mrb[0].mxu0
  %v4709 = vadd.f32 0.0, %v4708
  %v4710 = vpop.f32.mrb[0].mxu0
  %4711 = vmatprep.mubr.f32.mxu0 0.0
  %4712 = vmatmul.mubr.f32.gmra.mrb[0].mxu0 %v4640
  %v4713 = vpop.f32.mrb[0].mxu0
  %v4714 = vadd.f32 0.0, %v4713
  %v4715 = vpop.f32.mrb[0].mxu0
  %4716 = vdwg.mxu0
  %v4717 = vadd.f32 %v4174, %v4709
  %v4718 = vadd.f32 %v4175, %v4714
  %v4719 = vlaneseq
  %v4720 = vshrl.u32 %v4719, 7
  %v4721 = vsub.s32 0, %v4720
  %v4722 = vrot.slane %v2544, %v4721
  %v4723 = vadd.f32 %v4717, %v4722
  %v4724 = vadd.f32 %v4718, %v4722
  %v4725 = vadd.f32 %v4723, %v2541
  %v4726 = vadd.f32 %v4724, %v2542
  %v4727 = vsel %vm37, %v4725, 0.0
  %4728 = vadd.xlane.f32.xlu0 %v4727
  %v4729 = vpop.xlane.xlu0 %4728
  %v4730 = vsel %vm37, %v4726, 0.0
  %4731 = vadd.xlane.f32.xlu0 %v4730
  %v4732 = vpop.xlane.xlu0 %4731
  %v4733 = vmul.f32 %v4729, %v44
  %v4734 = vmul.f32 %v4732, %v44
  %v4735 = vmul.f32 %v4725, %v4725
  %v4736 = vmul.f32 %v4726, %v4726
  %v4737 = vsel %vm37, %v4735, 0.0
  %4738 = vadd.xlane.f32.xlu0 %v4737
  %v4739 = vpop.xlane.xlu0 %4738
  %v4740 = vsel %vm37, %v4736, 0.0
  %4741 = vadd.xlane.f32.xlu0 %v4740
  %v4742 = vpop.xlane.xlu0 %4741
  %v4743 = vmul.f32 %v4739, %v44
  %v4744 = vmul.f32 %v4742, %v44
  %v4745 = vmul.f32 %v4733, %v4733
  %v4746 = vmul.f32 %v4734, %v4734
  %v4747 = vsub.f32 %v4743, %v4745
  %v4748 = vsub.f32 %v4744, %v4746
  %v4749 = vsub.f32 %v4725, %v4733
  %v4750 = vsub.f32 %v4726, %v4734
  %v4751 = vadd.f32 %v4747, 1e-05
  %v4752 = vadd.f32 %v4748, 1e-05
  %v4753 = vrsqrt.pop %v4751
  %v4754 = vrsqrt.pop %v4752
  %v4755 = vmul.f32 %v4749, %v4753
  %v4756 = vmul.f32 %v4750, %v4754
  %v4757 = vlaneseq
  %v4758 = vshrl.u32 %v4757, 7
  %v4759 = vsub.s32 1, %v4758
  %v4760 = vrot.slane %v2544, %v4759
  %v4761 = vmul.f32 %v4755, %v4760
  %v4762 = vmul.f32 %v4756, %v4760
  %v4763 = vlaneseq
  %v4764 = vshrl.u32 %v4763, 7
  %v4765 = vsub.s32 2, %v4764
  %v4766 = vrot.slane %v2544, %v4765
  %v4767 = vadd.f32 %v4761, %v4766
  %v4768 = vadd.f32 %v4762, %v4766
  %s4769 = scalar_lea.vmem %s5, 32
  %v4770 = vld [vmem:[%s4769] sm:$0xff]
  %v4771 = vld [vmem:[%s4769 + $0x8] sm:$0xff]
  %v4772 = vld [vmem:[%s4769 + $0x10] sm:$0xff]
  %v4773 = vld [vmem:[%s4769 + $0x18] sm:$0xff]
  %v4774 = vlaneseq
  %v4775 = vshrl.u32 %v4774, 7
  %v4776 = vsub.s32 3, %v4775
  %v4777 = vrot.slane %v2544, %v4776
  %v4779 = vsel %vm37, %v4767, 0
  %v4782 = vsel %vm37, %v4768, 0
  %4784 = vmatprep.subr.mxu0 0.0
  %4785 = vmatpush1.msra.mxu0 %v4770
  %4786 = vmatprep.subr.mxu0 0.0
  %4787 = vmatpush1.msra.mxu0 %v4771
  %4788 = vmatprep.subr.mxu0 0.0
  %4789 = vmatpush1.msra.mxu0 %v4772
  %4790 = vmatprep.subr.mxu0 0.0
  %4791 = vmatpush1.msra.mxu0 %v4773
  %4792 = vmatprep.subr.mxu0 0.0
  %4793 = vmatpush1.msra.mxu0 0.0
  %4794 = vmatprep.subr.mxu0 0.0
  %4795 = vmatpush1.msra.mxu0 0.0
  %4796 = vmatprep.subr.mxu0 0.0
  %4797 = vmatpush1.msra.mxu0 0.0
  %4798 = vmatprep.subr.mxu0 0.0
  %4799 = vmatpush1.msra.mxu0 0.0
  %4800 = vmatprep.subr.mxu0 0.0
  %4801 = vmatpush1.msra.mxu0 0.0
  %4802 = vmatprep.subr.mxu0 0.0
  %4803 = vmatpush1.msra.mxu0 0.0
  %4804 = vmatprep.subr.mxu0 0.0
  %4805 = vmatpush1.msra.mxu0 0.0
  %4806 = vmatprep.subr.mxu0 0.0
  %4807 = vmatpush1.msra.mxu0 0.0
  %4808 = vmatprep.subr.mxu0 0.0
  %4809 = vmatpush1.msra.mxu0 0.0
  %4810 = vmatprep.subr.mxu0 0.0
  %4811 = vmatpush1.msra.mxu0 0.0
  %4812 = vmatprep.subr.mxu0 0.0
  %4813 = vmatpush1.msra.mxu0 0.0
  %4814 = vmatprep.subr.mxu0 0.0
  %4815 = vmatpush1.msra.mxu0 0.0
  %4816 = vmatprep.subr.mxu0 0.0
  %4817 = vmatpush1.msra.mxu0 0.0
  %4818 = vmatprep.subr.mxu0 0.0
  %4819 = vmatpush1.msra.mxu0 0.0
  %4820 = vmatprep.subr.mxu0 0.0
  %4821 = vmatpush1.msra.mxu0 0.0
  %4822 = vmatprep.subr.mxu0 0.0
  %4823 = vmatpush1.msra.mxu0 0.0
  %4824 = vmatprep.subr.mxu0 0.0
  %4825 = vmatpush1.msra.mxu0 0.0
  %4826 = vmatprep.subr.mxu0 0.0
  %4827 = vmatpush1.msra.mxu0 0.0
  %4828 = vmatprep.subr.mxu0 0.0
  %4829 = vmatpush1.msra.mxu0 0.0
  %4830 = vmatprep.subr.mxu0 0.0
  %4831 = vmatpush1.msra.mxu0 0.0
  %4832 = vmatprep.subr.mxu0 0.0
  %4833 = vmatpush1.msra.mxu0 0.0
  %4834 = vmatprep.subr.mxu0 0.0
  %4835 = vmatpush1.msra.mxu0 0.0
  %4836 = vmatprep.subr.mxu0 0.0
  %4837 = vmatpush1.msra.mxu0 0.0
  %4838 = vmatprep.subr.mxu0 0.0
  %4839 = vmatpush1.msra.mxu0 0.0
  %4840 = vmatprep.subr.mxu0 0.0
  %4841 = vmatpush1.msra.mxu0 0.0
  %4842 = vmatprep.subr.mxu0 0.0
  %4843 = vmatpush1.msra.mxu0 0.0
  %4844 = vmatprep.subr.mxu0 0.0
  %4845 = vmatpush1.msra.mxu0 0.0
  %4846 = vmatprep.subr.mxu0 0.0
  %4847 = vmatpush1.msra.mxu0 0.0
  %4848 = vmatprep.mubr.f32.mxu0 0.0
  %4849 = vmatmul.mubr.f32.gmra.mrb[0].mxu0 %v4779
  %v4850 = vpop.f32.mrb[0].mxu0
  %v4851 = vadd.f32 %v4777, %v4850
  %v4852 = vpop.f32.mrb[0].mxu0
  %4853 = vmatprep.mubr.f32.mxu0 0.0
  %4854 = vmatmul.mubr.f32.gmra.mrb[0].mxu0 %v4782
  %v4855 = vpop.f32.mrb[0].mxu0
  %v4856 = vadd.f32 %v4777, %v4855
  %v4857 = vpop.f32.mrb[0].mxu0
  %4858 = vdwg.mxu0
  %v4859 = vmul.f32 %v4851, 0.5
  %v4860 = vmul.f32 %v4856, 0.5
  %v4861 = vmul.f32 %v4851, 0.70710677
  %v4862 = vmul.f32 %v4856, 0.70710677
  %v4863 = verf.f32.pop %v4861
  %v4864 = verf.f32.pop %v4862
  %v4865 = vadd.f32 %v4863, 1.0
  %v4866 = vadd.f32 %v4864, 1.0
  %v4867 = vmul.f32 %v4859, %v4865
  %v4868 = vmul.f32 %v4860, %v4866
  %s4869 = scalar_lea.vmem %s6, 128
  %v4870 = vld [vmem:[%s4869] sm:$0xff]
  %v4871 = vld [vmem:[%s4869 + $0x8] sm:$0xff]
  %v4872 = vld [vmem:[%s4869 + $0x10] sm:$0xff]
  %v4873 = vld [vmem:[%s4869 + $0x18] sm:$0xff]
  %v4874 = vld [vmem:[%s4869 + $0x20] sm:$0xff]
  %v4875 = vld [vmem:[%s4869 + $0x28] sm:$0xff]
  %v4876 = vld [vmem:[%s4869 + $0x30] sm:$0xff]
  %v4877 = vld [vmem:[%s4869 + $0x38] sm:$0xff]
  %v4878 = vld [vmem:[%s4869 + $0x40] sm:$0xff]
  %v4879 = vld [vmem:[%s4869 + $0x48] sm:$0xff]
  %v4880 = vld [vmem:[%s4869 + $0x50] sm:$0xff]
  %v4881 = vld [vmem:[%s4869 + $0x58] sm:$0xff]
  %v4882 = vld [vmem:[%s4869 + $0x60] sm:$0xff]
  %v4883 = vld [vmem:[%s4869 + $0x68] sm:$0xff]
  %v4884 = vld [vmem:[%s4869 + $0x70] sm:$0xff]
  %v4885 = vld [vmem:[%s4869 + $0x78] sm:$0xff]
  %v4886 = vlaneseq
  %v4887 = vshrl.u32 %v4886, 7
  %v4888 = vsub.s32 4, %v4887
  %v4889 = vrot.slane %v2544, %v4888
  %4890 = vmatprep.subr.mxu0 0.0
  %4891 = vmatpush1.msra.mxu0 %v4870
  %4892 = vmatprep.subr.mxu0 0.0
  %4893 = vmatpush1.msra.mxu0 %v4871
  %4894 = vmatprep.subr.mxu0 0.0
  %4895 = vmatpush1.msra.mxu0 %v4872
  %4896 = vmatprep.subr.mxu0 0.0
  %4897 = vmatpush1.msra.mxu0 %v4873
  %4898 = vmatprep.subr.mxu0 0.0
  %4899 = vmatpush1.msra.mxu0 %v4874
  %4900 = vmatprep.subr.mxu0 0.0
  %4901 = vmatpush1.msra.mxu0 %v4875
  %4902 = vmatprep.subr.mxu0 0.0
  %4903 = vmatpush1.msra.mxu0 %v4876
  %4904 = vmatprep.subr.mxu0 0.0
  %4905 = vmatpush1.msra.mxu0 %v4877
  %4906 = vmatprep.subr.mxu0 0.0
  %4907 = vmatpush1.msra.mxu0 %v4878
  %4908 = vmatprep.subr.mxu0 0.0
  %4909 = vmatpush1.msra.mxu0 %v4879
  %4910 = vmatprep.subr.mxu0 0.0
  %4911 = vmatpush1.msra.mxu0 %v4880
  %4912 = vmatprep.subr.mxu0 0.0
  %4913 = vmatpush1.msra.mxu0 %v4881
  %4914 = vmatprep.subr.mxu0 0.0
  %4915 = vmatpush1.msra.mxu0 %v4882
  %4916 = vmatprep.subr.mxu0 0.0
  %4917 = vmatpush1.msra.mxu0 %v4883
  %4918 = vmatprep.subr.mxu0 0.0
  %4919 = vmatpush1.msra.mxu0 %v4884
  %4920 = vmatprep.subr.mxu0 0.0
  %4921 = vmatpush1.msra.mxu0 %v4885
  %4922 = vmatprep.subr.mxu0 0.0
  %4923 = vmatpush1.msra.mxu0 0.0
  %4924 = vmatprep.subr.mxu0 0.0
  %4925 = vmatpush1.msra.mxu0 0.0
  %4926 = vmatprep.subr.mxu0 0.0
  %4927 = vmatpush1.msra.mxu0 0.0
  %4928 = vmatprep.subr.mxu0 0.0
  %4929 = vmatpush1.msra.mxu0 0.0
  %4930 = vmatprep.subr.mxu0 0.0
  %4931 = vmatpush1.msra.mxu0 0.0
  %4932 = vmatprep.subr.mxu0 0.0
  %4933 = vmatpush1.msra.mxu0 0.0
  %4934 = vmatprep.subr.mxu0 0.0
  %4935 = vmatpush1.msra.mxu0 0.0
  %4936 = vmatprep.subr.mxu0 0.0
  %4937 = vmatpush1.msra.mxu0 0.0
  %4938 = vmatprep.subr.mxu0 0.0
  %4939 = vmatpush1.msra.mxu0 0.0
  %4940 = vmatprep.subr.mxu0 0.0
  %4941 = vmatpush1.msra.mxu0 0.0
  %4942 = vmatprep.subr.mxu0 0.0
  %4943 = vmatpush1.msra.mxu0 0.0
  %4944 = vmatprep.subr.mxu0 0.0
  %4945 = vmatpush1.msra.mxu0 0.0
  %4946 = vmatprep.subr.mxu0 0.0
  %4947 = vmatpush1.msra.mxu0 0.0
  %4948 = vmatprep.subr.mxu0 0.0
  %4949 = vmatpush1.msra.mxu0 0.0
  %4950 = vmatprep.subr.mxu0 0.0
  %4951 = vmatpush1.msra.mxu0 0.0
  %4952 = vmatprep.subr.mxu0 0.0
  %4953 = vmatpush1.msra.mxu0 0.0
  %4954 = vmatprep.mubr.f32.mxu0 0.0
  %4955 = vmatmul.mubr.f32.gmra.mrb[0].mxu0 %v4867
  %v4956 = vpop.f32.mrb[0].mxu0
  %v4957 = vadd.f32 %v4889, %v4956
  %v4958 = vpop.f32.mrb[0].mxu0
  %4959 = vmatprep.mubr.f32.mxu0 0.0
  %4960 = vmatmul.mubr.f32.gmra.mrb[0].mxu0 %v4868
  %v4961 = vpop.f32.mrb[0].mxu0
  %v4962 = vadd.f32 %v4889, %v4961
  %v4963 = vpop.f32.mrb[0].mxu0
  %4964 = vdwg.mxu0
  %v4965 = vadd.f32 %v4957, %v4767
  %v4966 = vadd.f32 %v4962, %v4768
  %v4967 = vsel %vm37, %v4965, 0.0
  %4968 = vadd.xlane.f32.xlu0 %v4967
  %v4969 = vpop.xlane.xlu0 %4968
  %v4970 = vsel %vm37, %v4966, 0.0
  %4971 = vadd.xlane.f32.xlu0 %v4970
  %v4972 = vpop.xlane.xlu0 %4971
  %v4973 = vmul.f32 %v4969, %v44
  %v4974 = vmul.f32 %v4972, %v44
  %v4975 = vmul.f32 %v4965, %v4965
  %v4976 = vmul.f32 %v4966, %v4966
  %v4977 = vsel %vm37, %v4975, 0.0
  %4978 = vadd.xlane.f32.xlu0 %v4977
  %v4979 = vpop.xlane.xlu0 %4978
  %v4980 = vsel %vm37, %v4976, 0.0
  %4981 = vadd.xlane.f32.xlu0 %v4980
  %v4982 = vpop.xlane.xlu0 %4981
  %v4983 = vmul.f32 %v4979, %v44
  %v4984 = vmul.f32 %v4982, %v44
  %v4985 = vmul.f32 %v4973, %v4973
  %v4986 = vmul.f32 %v4974, %v4974
  %v4987 = vsub.f32 %v4983, %v4985
  %v4988 = vsub.f32 %v4984, %v4986
  %v4989 = vsub.f32 %v4965, %v4973
  %v4990 = vsub.f32 %v4966, %v4974
  %v4991 = vadd.f32 %v4987, 1e-05
  %v4992 = vadd.f32 %v4988, 1e-05
  %v4993 = vrsqrt.pop %v4991
  %v4994 = vrsqrt.pop %v4992
  %v4995 = vmul.f32 %v4989, %v4993
  %v4996 = vmul.f32 %v4990, %v4994
  %v4997 = vlaneseq
  %v4998 = vshrl.u32 %v4997, 7
  %v4999 = vsub.s32 5, %v4998
  %v5000 = vrot.slane %v2544, %v4999
  %v5001 = vmul.f32 %v4995, %v5000
  %v5002 = vmul.f32 %v4996, %v5000
  %v5003 = vlaneseq
  %v5004 = vshrl.u32 %v5003, 7
  %v5005 = vsub.s32 6, %v5004
  %v5006 = vrot.slane %v2544, %v5005
  %v5007 = vadd.f32 %v5001, %v5006
  %v5008 = vadd.f32 %v5002, %v5006
  %v5009 = vlaneseq
  %v5010 = vshrl.u32 %v5009, 7
  %v5011 = vsub.s32 2, %v5010
  %v5012 = vrot.slane %v32, %v5011
  %v5013 = vmul.f32 %v5007, %v5012
  %v5014 = vmul.f32 %v5008, %v5012
  %v5015 = vsel %vm37, %v5013, 0.0
  %5016 = vadd.xlane.f32.xlu0 %v5015
  %v5017 = vpop.xlane.xlu0 %5016
  %v5018 = vsel %vm37, %v5014, 0.0
  %5019 = vadd.xlane.f32.xlu0 %v5018
  %v5020 = vpop.xlane.xlu0 %5019
  %v5021 = vlaneseq
  %v5022 = vshrl.u32 %v5021, 7
  %v5023 = vsub.s32 3, %v5022
  %v5024 = vrot.slane %v32, %v5023
  %v5025 = vadd.f32 %v5017, %v5024
  %v5026 = vadd.f32 %v5020, %v5024
  %vm5027 = vcmask 7168
  %5028 = vst.msk [vmem:[%s9] sm:$0xff] %vm5027, %v5025
  %5029 = vst.msk [vmem:[%s9 + $0x8] sm:$0xff] %vm5027, %v5026
  // Predicated region
  $region38: #{roberta_regression_forward.1} parent=0 // pred_check
    _
  $region39: #{roberta_regression_forward.1} parent=0 // pred_check_branch
    %5031 = sbr.rel (0) target = $region41
  $region40: #{roberta_regression_forward.1} parent=0 // pred_region
    _
  $region41: #{roberta_regression_forward.1} parent=0 // pred_fallthru
    _
  // Predicated region
  $region42: #{roberta_regression_forward.1} parent=0 // pred_check
    _
  $region43: #{roberta_regression_forward.1} parent=0 // pred_check_branch
    %5033 = sbr.rel (0) target = $region45
  $region44: #{roberta_regression_forward.1} parent=0 // pred_region
    _
  $region45: #{roberta_regression_forward.1} parent=0 // pred_fallthru
    _

</llo_original>
